<compile_context>
chip_gen: v6e
topology: v6e:2x2x1
jax: 0.10.0
libtpu: 0.0.40
codegen_flags: <defaults>
</compile_context>

<pallas_src>
import functools

import jax
import jax.numpy as jnp
import numpy as np
from jax.experimental import pallas as pl
from jax.experimental.pallas import tpu as pltpu


def _round_up(x, m):
    return ((x + m - 1) // m) * m


def _pick_chunk(T, cap):
    """Largest chunk <= cap that evenly divides T (timesteps per grid step)."""
    for c in range(min(cap, T), 0, -1):
        if T % c == 0:
            return c
    return 1


def _pick_tile_m(m, cap):
    """Row tile: full M when it fits, else largest 128- (then 8-) multiple divisor."""
    if m <= cap:
        return m
    for step in (128, 8):
        c = cap - (cap % step)
        while c >= step:
            if m % c == 0:
                return c
            c -= step
    return m


def _pick_tile_n(n, cap):
    """Column tile: n is a multiple of 128; largest multiple-of-128 divisor <= cap."""
    c = min(cap, n)
    c -= c % 128
    while c >= 128:
        if n % c == 0:
            return c
        c -= 128
    return n


def _sigmoid_tanh(x):
    # sigmoid(x) == 0.5 * (1 + tanh(0.5*x)): one EUP transcendental per gate.
    return 0.5 * (jnp.tanh(0.5 * x) + 1.0)


# ----------------------------------------------------------------------------
# Fused LSTM stack kernel: grid = (layer, time-chunk), both sequential.
#   * layer-0 input = embeddings (resident VMEM block)
#   * layer-l>0 input = previous layer's output, read from the resident out block
#   * input projection for a whole chunk = one MXU matmul (fused, no HBM round trip)
#   * recurrence: h/c carried in vregs over the statically-unrolled chunk loop
# ----------------------------------------------------------------------------
def _lstm_stack_kernel(chunk, nhid, in_max,
                       emb_ref, wih_ref, whh_ref, h0_ref, c0_ref,
                       out_ref, hn_ref, cn_ref,
                       h_sc, c_sc, xg_sc):
    l = pl.program_id(0)          # layer (outer, sequential)
    t = pl.program_id(1)          # time chunk (inner, sequential)
    nchunks = pl.num_programs(1)
    B = h_sc.shape[0]
    rows = chunk * B
    row0 = t * rows
    if rows % 8 == 0:
        row0 = pl.multiple_of(row0, 8)

    w_ih = wih_ref[0]             # (in_max, 4*nhid), VMEM-resident for this layer

    # Fused input projection for the whole chunk (one big MXU matmul; overlaps the
    # VPU/EUP-heavy gate math below in the pipeline).
    @pl.when(l == 0)
    def _():
        xg_sc[...] = jnp.dot(emb_ref[pl.ds(row0, rows), :], w_ih,
                             preferred_element_type=jnp.float32)

    @pl.when(l > 0)
    def _():
        w = w_ih if in_max == nhid else w_ih[:nhid, :]
        xg_sc[...] = jnp.dot(out_ref[pl.ds(row0, rows), :], w,
                             preferred_element_type=jnp.float32)

    @pl.when(t == 0)
    def _():
        h_sc[...] = h0_ref[0]
        c_sc[...] = c0_ref[0]

    # Sequential recurrence over the chunk; state stays in vregs (scratch touched once
    # per chunk, not per timestep).
    w_hh = whh_ref[0]             # (nhid, 4*nhid)
    h = h_sc[...]
    c = c_sc[...]
    for tt in range(chunk):       # statically unrolled
        gates = xg_sc[pl.ds(tt * B, B), :] + jnp.dot(
            h, w_hh, preferred_element_type=jnp.float32)
        i_g = _sigmoid_tanh(gates[:, 0 * nhid:1 * nhid])
        f_g = _sigmoid_tanh(gates[:, 1 * nhid:2 * nhid])
        g_g = jnp.tanh(gates[:, 2 * nhid:3 * nhid])
        o_g = _sigmoid_tanh(gates[:, 3 * nhid:4 * nhid])
        c = f_g * c + i_g * g_g
        h = o_g * jnp.tanh(c)
        out_ref[pl.ds(row0 + tt * B, B), :] = h.astype(out_ref.dtype)
    h_sc[...] = h
    c_sc[...] = c

    @pl.when(t == nchunks - 1)
    def _():
        hn_ref[0] = h
        cn_ref[0] = c


def lstm_stack(emb2d, w_ih_t, w_hh_t, h0, c0, *, chunk_cap=64):
    """Run the full multi-layer LSTM in one pallas_call.

    emb2d:  (T*B, in_max) layer-0 input (feature axis zero-padded to max(ninp, nhid)).
    w_ih_t: (nlayers, in_max, 4*nhid) transposed, zero-padded input weights.
    w_hh_t: (nlayers, nhid, 4*nhid) transposed recurrent weights.
    h0, c0: (nlayers, B, nhid).
    Returns (out2d (T*B, nhid), h_n (nlayers,B,nhid), c_n (nlayers,B,nhid)).
    """
    nlayers, in_max, G = w_ih_t.shape
    nhid = G // 4
    B = h0.shape[1]
    TB = emb2d.shape[0]
    T = TB // B
    assert T >= 1
    chunk = _pick_chunk(T, chunk_cap)
    nchunks = T // chunk
    kernel = functools.partial(_lstm_stack_kernel, chunk, nhid, in_max)
    grid_spec = pltpu.PrefetchScalarGridSpec(
        num_scalar_prefetch=0,
        grid=(nlayers, nchunks),
        in_specs=[
            pl.BlockSpec((TB, in_max), lambda l, t: (0, 0)),       # emb: resident
            pl.BlockSpec((1, in_max, G), lambda l, t: (l, 0, 0)),  # W_ih^T per layer
            pl.BlockSpec((1, nhid, G), lambda l, t: (l, 0, 0)),    # W_hh^T per layer
            pl.BlockSpec((1, B, nhid), lambda l, t: (l, 0, 0)),    # h0 per layer
            pl.BlockSpec((1, B, nhid), lambda l, t: (l, 0, 0)),    # c0 per layer
        ],
        out_specs=[
            pl.BlockSpec((TB, nhid), lambda l, t: (0, 0)),         # out: resident block
            pl.BlockSpec((1, B, nhid), lambda l, t: (l, 0, 0)),    # h_n
            pl.BlockSpec((1, B, nhid), lambda l, t: (l, 0, 0)),    # c_n
        ],
        scratch_shapes=[
            pltpu.VMEM((B, nhid), jnp.float32),        # h state across chunks
            pltpu.VMEM((B, nhid), jnp.float32),        # c state across chunks
            pltpu.VMEM((chunk * B, G), jnp.float32),   # fused-projection gate preacts
        ],
    )
    out_shapes = (
        jax.ShapeDtypeStruct((TB, nhid), jnp.float32),
        jax.ShapeDtypeStruct((nlayers, B, nhid), jnp.float32),
        jax.ShapeDtypeStruct((nlayers, B, nhid), jnp.float32),
    )
    return pl.pallas_call(
        kernel,
        out_shape=out_shapes,
        grid_spec=grid_spec,
        compiler_params=pltpu.CompilerParams(
            # Both axes carry true sequential dependencies (layer feeds layer, time is
            # recurrent).  For B >= 16 on v7x, a leading batch-parallel grid axis would
            # let the second TensorCore share the recurrence; not applicable at B=8.
            dimension_semantics=("arbitrary", "arbitrary")),
    )(emb2d, w_ih_t, w_hh_t, h0, c0)


# ----------------------------------------------------------------------------
# Tiled matmul + bias kernel (decoder).  Grid over (M tiles, N tiles), both "parallel".
# ----------------------------------------------------------------------------
def _matmul_bias_kernel(x_ref, w_ref, b_ref, o_ref):
    o_ref[...] = (jnp.dot(x_ref[...], w_ref[...], preferred_element_type=jnp.float32)
                  + b_ref[...]).astype(o_ref.dtype)


def tiled_matmul_bias(x, w, b, *, tm_cap=256, tn_cap=512):
    """y = x @ w + b.  w is (K, N) with N a multiple of 128; b is (N,)."""
    M, K = x.shape
    N = w.shape[1]
    tm = _pick_tile_m(M, tm_cap)
    tn = _pick_tile_n(N, tn_cap)
    # v7x megacore: keep >=2 blocks along a parallel axis for non-trivial matmuls so both
    # TensorCores get work; trivially small matmuls collapse to a single block instead.
    if M // tm == 1 and N // tn == 1 and M * N >= 512 * 512 and N // 128 >= 2:
        tn = _pick_tile_n(N, max(128, N // 2))
    grid = (M // tm, N // tn)
    return pl.pallas_call(
        _matmul_bias_kernel,
        out_shape=jax.ShapeDtypeStruct((M, N), jnp.float32),
        grid_spec=pltpu.PrefetchScalarGridSpec(
            num_scalar_prefetch=0,
            grid=grid,
            in_specs=[
                pl.BlockSpec((tm, K), lambda i, j: (i, 0)),
                pl.BlockSpec((K, tn), lambda i, j: (0, j)),
                pl.BlockSpec((1, tn), lambda i, j: (0, j)),
            ],
            out_specs=pl.BlockSpec((tm, tn), lambda i, j: (i, j)),
        ),
        compiler_params=pltpu.CompilerParams(
            dimension_semantics=("parallel", "parallel")),
    )(x, w, b.reshape(1, N))


# ----------------------------------------------------------------------------
# Model wrapper (parameter setup + glue in plain JAX)
# ----------------------------------------------------------------------------
class RNNModelPallas:
    """JAX/Pallas port of RNNModel (rnn_type fixed to 'LSTM', bias=False)."""

    def __init__(self, ntoken, ninp, nhid, nlayers, key):
        self.ntoken, self.ninp, self.nhid, self.nlayers = ntoken, ninp, nhid, nlayers
        self.rnn_type = "LSTM"
        self.in_max = max(ninp, nhid)
        self.ntoken_pad = _round_up(ntoken, 128)
        initrange = 0.1
        stdv = 1.0 / np.sqrt(nhid)
        keys = jax.random.split(key, 2 + 2 * nlayers)
        # encoder embedding (ntoken, ninp), uniform(-0.1, 0.1)
        self.W_emb = jax.random.uniform(keys[0], (ntoken, ninp), jnp.float32,
                                        -initrange, initrange)
        # LSTM weights per layer (PyTorch layout: (4*nhid, in_size)); bias=False.
        self.w_ih, self.w_hh = [], []
        for l in range(nlayers):
            in_size = ninp if l == 0 else nhid
            self.w_ih.append(jax.random.uniform(keys[1 + 2 * l], (4 * nhid, in_size),
                                                jnp.float32, -stdv, stdv))
            self.w_hh.append(jax.random.uniform(keys[2 + 2 * l], (4 * nhid, nhid),
                                                jnp.float32, -stdv, stdv))
        # Stacked / transposed / zero-padded weights for the fused stack kernel.
        wih_t = []
        for l in range(nlayers):
            in_size = self.w_ih[l].shape[1]
            w = jnp.zeros((self.in_max, 4 * nhid), jnp.float32)
            wih_t.append(w.at[:in_size, :].set(self.w_ih[l].T))
        self.w_ih_t = jnp.stack(wih_t)                       # (L, in_max, 4H)
        self.w_hh_t = jnp.stack([w.T for w in self.w_hh])    # (L, H, 4H)
        # decoder Linear(nhid, ntoken): weight uniform(-0.1, 0.1), bias 0; vocab padded
        # to a multiple of 128 so decoder tiles stay lane-aligned at any vocab size.
        self.dec_w = jax.random.uniform(keys[-1], (ntoken, nhid), jnp.float32,
                                        -initrange, initrange)
        self.dec_b = jnp.zeros((ntoken,), jnp.float32)
        self.dec_w_t_pad = (jnp.zeros((nhid, self.ntoken_pad), jnp.float32)
                            .at[:, :ntoken].set(self.dec_w.T))
        self.dec_b_pad = (jnp.zeros((self.ntoken_pad,), jnp.float32)
                          .at[:ntoken].set(self.dec_b))

    def init_hidden(self, bsz):
        z = jnp.zeros((self.nlayers, bsz, self.nhid), jnp.float32)
        return (z, z)

    def forward(self, tokens, hidden):
        T, B = tokens.shape
        h0, c0 = hidden
        # TODO(synk): embedding lookup (torch.index_select) is plain-JAX jnp.take glue;
        # no dedicated Pallas gather kernel.
        emb2d = jnp.take(self.W_emb, tokens.reshape(-1), axis=0)     # (T*B, ninp)
        if self.in_max > self.ninp:
            emb2d = jnp.pad(emb2d, ((0, 0), (0, self.in_max - self.ninp)))
        out2d, h_n, c_n = lstm_stack(emb2d, self.w_ih_t, self.w_hh_t, h0, c0)
        decoded = tiled_matmul_bias(out2d, self.dec_w_t_pad, self.dec_b_pad)
        decoded = decoded[:, :self.ntoken].reshape(T, B, self.ntoken)
        return decoded, (h_n, c_n)


# ----------------------------------------------------------------------------
# Pure-JAX reference for correctness check
# ----------------------------------------------------------------------------
def reference_forward(model, tokens, hidden):
    T, B = tokens.shape
    h = [hidden[0][l] for l in range(model.nlayers)]
    c = [hidden[1][l] for l in range(model.nlayers)]
    emb = jnp.take(model.W_emb, tokens.reshape(-1), axis=0).reshape(T, B, model.ninp)
    outs = []
    for t in range(T):
        x = emb[t]
        for l in range(model.nlayers):
            gates = x @ model.w_ih[l].T + h[l] @ model.w_hh[l].T
            i_g = jax.nn.sigmoid(gates[:, 0 * model.nhid:1 * model.nhid])
            f_g = jax.nn.sigmoid(gates[:, 1 * model.nhid:2 * model.nhid])
            g_g = jnp.tanh(gates[:, 2 * model.nhid:3 * model.nhid])
            o_g = jax.nn.sigmoid(gates[:, 3 * model.nhid:4 * model.nhid])
            c[l] = f_g * c[l] + i_g * g_g
            h[l] = o_g * jnp.tanh(c[l])
            x = h[l]
        outs.append(x)
    out = jnp.stack(outs, axis=0)
    decoded = out.reshape(T * B, model.nhid) @ model.dec_w.T + model.dec_b
    return decoded.reshape(T, B, model.ntoken), (jnp.stack(h), jnp.stack(c))


if __name__ == "__main__":
    # Lane/sublane-aligned small shapes: B multiple of 8, ninp/nhid multiples of 128.
    T, B = 12, 8
    ntoken, ninp, nhid, nlayers = 384, 128, 128, 2

    key = jax.random.PRNGKey(0)
    k_model, k_tok, k_h, k_c = jax.random.split(key, 4)
    model = RNNModelPallas(ntoken, ninp, nhid, nlayers, k_model)

    tokens = jax.random.randint(k_tok, (T, B), 0, ntoken, dtype=jnp.int32)
    h0 = jax.random.uniform(k_h, (nlayers, B, nhid), jnp.float32, -0.1, 0.1)
    c0 = jax.random.uniform(k_c, (nlayers, B, nhid), jnp.float32, -0.1, 0.1)
    hidden = (h0, c0)

    decoded, (h_n, c_n) = model.forward(tokens, hidden)
    jax.block_until_ready((decoded, h_n, c_n))

    ref_dec, (ref_h, ref_c) = reference_forward(model, tokens, hidden)
    # Tolerance covers MXU pass-count / accumulation-order differences between the Pallas
    # f32 matmuls and XLA's default-precision f32 dots in the reference; a real bug
    # (gate wiring, state carry, padding) produces O(0.1) errors.
    np.testing.assert_allclose(np.asarray(decoded), np.asarray(ref_dec), rtol=1e-3, atol=1e-3)
    np.testing.assert_allclose(np.asarray(h_n), np.asarray(ref_h), rtol=1e-3, atol=1e-3)
    np.testing.assert_allclose(np.asarray(c_n), np.asarray(ref_c), rtol=1e-3, atol=1e-3)

    assert decoded.shape == (T, B, ntoken)
    assert h_n.shape == (nlayers, B, nhid) and c_n.shape == (nlayers, B, nhid)
    print("KERNEL_OK")
</pallas_src>

<mosaic_0001>
module attributes {stable_mosaic.version = 11 : i64} {
  func.func @_lstm_stack_kernel(%arg0: i32, %arg1: i32, %arg2: memref<96x128xf32, #tpu.memory_space<vmem>>, %arg3: memref<1x128x512xf32, #tpu.memory_space<vmem>>, %arg4: memref<1x128x512xf32, #tpu.memory_space<vmem>>, %arg5: memref<1x8x128xf32, #tpu.memory_space<vmem>>, %arg6: memref<1x8x128xf32, #tpu.memory_space<vmem>>, %arg7: memref<96x128xf32, #tpu.memory_space<vmem>>, %arg8: memref<1x8x128xf32, #tpu.memory_space<vmem>>, %arg9: memref<1x8x128xf32, #tpu.memory_space<vmem>>, %arg10: memref<8x128xf32, #tpu.memory_space<vmem>>, %arg11: memref<8x128xf32, #tpu.memory_space<vmem>>, %arg12: memref<96x512xf32, #tpu.memory_space<vmem>>) attributes {dimension_semantics = [#tpu.dimension_semantics<arbitrary>, #tpu.dimension_semantics<arbitrary>], iteration_bounds = array<i64: 2, 1>, scalar_prefetch = 0 : i64, scratch_operands = 3 : i64, tpu.core_type = #tpu.core_type<tc>, window_params = [{pipeline_mode = #tpu.pipeline_mode<synchronous>, transform_indices = @transform_0, window_bounds = array<i64: 96, 128>}, {transform_indices = @transform_1, window_bounds = array<i64: 1, 128, 512>}, {transform_indices = @transform_2, window_bounds = array<i64: 1, 128, 512>}, {transform_indices = @transform_3, window_bounds = array<i64: 1, 8, 128>}, {transform_indices = @transform_4, window_bounds = array<i64: 1, 8, 128>}, {pipeline_mode = #tpu.pipeline_mode<synchronous>, transform_indices = @transform_5, window_bounds = array<i64: 96, 128>}, {transform_indices = @transform_6, window_bounds = array<i64: 1, 8, 128>}, {transform_indices = @transform_7, window_bounds = array<i64: 1, 8, 128>}]} {
    %c96_i32 = arith.constant 96 : i32
    %0 = arith.muli %arg1, %c96_i32 : i32
    %1 = tpu.assume_multiple %0, 8 : i32
    %c0 = arith.constant 0 : index
    %c0_0 = arith.constant 0 : index
    %c0_1 = arith.constant 0 : index
    %2 = vector.load %arg3[%c0, %c0_0, %c0_1] : memref<1x128x512xf32, #tpu.memory_space<vmem>>, vector<1x128x512xf32>
    %3 = vector.shape_cast %2 : vector<1x128x512xf32> to vector<128x512xf32>
    %c0_i32 = arith.constant 0 : i32
    %4 = arith.cmpi eq, %arg0, %c0_i32 : i32
    %5 = arith.extui %4 : i1 to i32
    %c0_i32_2 = arith.constant 0 : i32
    %6 = arith.cmpi ne, %5, %c0_i32_2 : i32
    scf.if %6 {
      %466 = arith.index_cast %1 : i32 to index
      %c0_165 = arith.constant 0 : index
      %467 = vector.load %arg2[%466, %c0_165] : memref<96x128xf32, #tpu.memory_space<vmem>>, vector<96x128xf32>
      %cst_166 = arith.constant dense<0.000000e+00> : vector<96x512xf32>
      %468 = tpu.matmul %467, %3, %cst_166 {dimension_numbers = #tpu.dot_dimension_numbers<[1], [0], [0], [1], [0, 0, 1, 1], [], []>} : vector<96x128xf32>, vector<128x512xf32>, vector<96x512xf32> -> vector<96x512xf32>
      %c0_167 = arith.constant 0 : index
      %c0_168 = arith.constant 0 : index
      %469 = vector.load %arg12[%c0_167, %c0_168] : memref<96x512xf32, #tpu.memory_space<vmem>>, vector<96x512xf32>
      tpu.vector_store %arg12[%c0_167, %c0_168], %468 {strides = array<i32>} : memref<96x512xf32, #tpu.memory_space<vmem>>, vector<96x512xf32>,
    } else {
    }
    %c0_i32_3 = arith.constant 0 : i32
    %7 = arith.cmpi sgt, %arg0, %c0_i32_3 : i32
    %8 = arith.extui %7 : i1 to i32
    %c0_i32_4 = arith.constant 0 : i32
    %9 = arith.cmpi ne, %8, %c0_i32_4 : i32
    scf.if %9 {
      %466 = arith.index_cast %1 : i32 to index
      %c0_165 = arith.constant 0 : index
      %467 = vector.load %arg7[%466, %c0_165] : memref<96x128xf32, #tpu.memory_space<vmem>>, vector<96x128xf32>
      %cst_166 = arith.constant dense<0.000000e+00> : vector<96x512xf32>
      %468 = tpu.matmul %467, %3, %cst_166 {dimension_numbers = #tpu.dot_dimension_numbers<[1], [0], [0], [1], [0, 0, 1, 1], [], []>} : vector<96x128xf32>, vector<128x512xf32>, vector<96x512xf32> -> vector<96x512xf32>
      %c0_167 = arith.constant 0 : index
      %c0_168 = arith.constant 0 : index
      %469 = vector.load %arg12[%c0_167, %c0_168] : memref<96x512xf32, #tpu.memory_space<vmem>>, vector<96x512xf32>
      tpu.vector_store %arg12[%c0_167, %c0_168], %468 {strides = array<i32>} : memref<96x512xf32, #tpu.memory_space<vmem>>, vector<96x512xf32>,
    } else {
    }
    %c0_i32_5 = arith.constant 0 : i32
    %10 = arith.cmpi eq, %arg1, %c0_i32_5 : i32
    %11 = arith.extui %10 : i1 to i32
    %c0_i32_6 = arith.constant 0 : i32
    %12 = arith.cmpi ne, %11, %c0_i32_6 : i32
    scf.if %12 {
      %c0_165 = arith.constant 0 : index
      %c0_166 = arith.constant 0 : index
      %c0_167 = arith.constant 0 : index
      %466 = vector.load %arg5[%c0_165, %c0_166, %c0_167] : memref<1x8x128xf32, #tpu.memory_space<vmem>>, vector<1x8x128xf32>
      %467 = vector.shape_cast %466 : vector<1x8x128xf32> to vector<8x128xf32>
      %c0_168 = arith.constant 0 : index
      %c0_169 = arith.constant 0 : index
      %468 = vector.load %arg10[%c0_168, %c0_169] : memref<8x128xf32, #tpu.memory_space<vmem>>, vector<8x128xf32>
      tpu.vector_store %arg10[%c0_168, %c0_169], %467 {strides = array<i32>} : memref<8x128xf32, #tpu.memory_space<vmem>>, vector<8x128xf32>,
      %c0_170 = arith.constant 0 : index
      %c0_171 = arith.constant 0 : index
      %c0_172 = arith.constant 0 : index
      %469 = vector.load %arg6[%c0_170, %c0_171, %c0_172] : memref<1x8x128xf32, #tpu.memory_space<vmem>>, vector<1x8x128xf32>
      %470 = vector.shape_cast %469 : vector<1x8x128xf32> to vector<8x128xf32>
      %c0_173 = arith.constant 0 : index
      %c0_174 = arith.constant 0 : index
      %471 = vector.load %arg11[%c0_173, %c0_174] : memref<8x128xf32, #tpu.memory_space<vmem>>, vector<8x128xf32>
      tpu.vector_store %arg11[%c0_173, %c0_174], %470 {strides = array<i32>} : memref<8x128xf32, #tpu.memory_space<vmem>>, vector<8x128xf32>,
    } else {
    }
    %c0_7 = arith.constant 0 : index
    %c0_8 = arith.constant 0 : index
    %c0_9 = arith.constant 0 : index
    %13 = vector.load %arg4[%c0_7, %c0_8, %c0_9] : memref<1x128x512xf32, #tpu.memory_space<vmem>>, vector<1x128x512xf32>
    %14 = vector.shape_cast %13 : vector<1x128x512xf32> to vector<128x512xf32>
    %c0_10 = arith.constant 0 : index
    %c0_11 = arith.constant 0 : index
    %15 = vector.load %arg10[%c0_10, %c0_11] : memref<8x128xf32, #tpu.memory_space<vmem>>, vector<8x128xf32>
    %c0_12 = arith.constant 0 : index
    %c0_13 = arith.constant 0 : index
    %16 = vector.load %arg11[%c0_12, %c0_13] : memref<8x128xf32, #tpu.memory_space<vmem>>, vector<8x128xf32>
    %c0_14 = arith.constant 0 : index
    %c0_15 = arith.constant 0 : index
    %17 = vector.load %arg12[%c0_14, %c0_15] : memref<96x512xf32, #tpu.memory_space<vmem>>, vector<8x512xf32>
    %cst = arith.constant dense<0.000000e+00> : vector<8x512xf32>
    %18 = tpu.matmul %15, %14, %cst {dimension_numbers = #tpu.dot_dimension_numbers<[1], [0], [0], [1], [0, 0, 1, 1], [], []>} : vector<8x128xf32>, vector<128x512xf32>, vector<8x512xf32> -> vector<8x512xf32>
    %19 = arith.addf %17, %18 : vector<8x512xf32>
    %20 = vector.extract_strided_slice %19 {offsets = [0, 0], sizes = [8, 128], strides = [1, 1]} : vector<8x512xf32> to vector<8x128xf32>
    %cst_16 = arith.constant 5.000000e-01 : f32
    %21 = vector.broadcast %cst_16 : f32 to vector<8x128xf32>
    %22 = arith.mulf %21, %20 : vector<8x128xf32>
    %23 = math.tanh %22 : vector<8x128xf32>
    %cst_17 = arith.constant 1.000000e+00 : f32
    %24 = vector.broadcast %cst_17 : f32 to vector<8x128xf32>
    %25 = arith.addf %23, %24 : vector<8x128xf32>
    %cst_18 = arith.constant 5.000000e-01 : f32
    %26 = vector.broadcast %cst_18 : f32 to vector<8x128xf32>
    %27 = arith.mulf %26, %25 : vector<8x128xf32>
    %28 = vector.extract_strided_slice %19 {offsets = [0, 128], sizes = [8, 128], strides = [1, 1]} : vector<8x512xf32> to vector<8x128xf32>
    %cst_19 = arith.constant 5.000000e-01 : f32
    %29 = vector.broadcast %cst_19 : f32 to vector<8x128xf32>
    %30 = arith.mulf %29, %28 : vector<8x128xf32>
    %31 = math.tanh %30 : vector<8x128xf32>
    %cst_20 = arith.constant 1.000000e+00 : f32
    %32 = vector.broadcast %cst_20 : f32 to vector<8x128xf32>
    %33 = arith.addf %31, %32 : vector<8x128xf32>
    %cst_21 = arith.constant 5.000000e-01 : f32
    %34 = vector.broadcast %cst_21 : f32 to vector<8x128xf32>
    %35 = arith.mulf %34, %33 : vector<8x128xf32>
    %36 = vector.extract_strided_slice %19 {offsets = [0, 256], sizes = [8, 128], strides = [1, 1]} : vector<8x512xf32> to vector<8x128xf32>
    %37 = math.tanh %36 : vector<8x128xf32>
    %38 = vector.extract_strided_slice %19 {offsets = [0, 384], sizes = [8, 128], strides = [1, 1]} : vector<8x512xf32> to vector<8x128xf32>
    %cst_22 = arith.constant 5.000000e-01 : f32
    %39 = vector.broadcast %cst_22 : f32 to vector<8x128xf32>
    %40 = arith.mulf %39, %38 : vector<8x128xf32>
    %41 = math.tanh %40 : vector<8x128xf32>
    %cst_23 = arith.constant 1.000000e+00 : f32
    %42 = vector.broadcast %cst_23 : f32 to vector<8x128xf32>
    %43 = arith.addf %41, %42 : vector<8x128xf32>
    %cst_24 = arith.constant 5.000000e-01 : f32
    %44 = vector.broadcast %cst_24 : f32 to vector<8x128xf32>
    %45 = arith.mulf %44, %43 : vector<8x128xf32>
    %46 = arith.mulf %35, %16 : vector<8x128xf32>
    %47 = arith.mulf %27, %37 : vector<8x128xf32>
    %48 = arith.addf %46, %47 : vector<8x128xf32>
    %49 = math.tanh %48 : vector<8x128xf32>
    %50 = arith.mulf %45, %49 : vector<8x128xf32>
    %c0_i32_25 = arith.constant 0 : i32
    %51 = arith.addi %1, %c0_i32_25 : i32
    %52 = arith.index_cast %51 : i32 to index
    %c0_26 = arith.constant 0 : index
    %53 = vector.load %arg7[%52, %c0_26] : memref<96x128xf32, #tpu.memory_space<vmem>>, vector<8x128xf32>
    tpu.vector_store %arg7[%52, %c0_26], %50 {strides = array<i32>} : memref<96x128xf32, #tpu.memory_space<vmem>>, vector<8x128xf32>,
    %c8 = arith.constant 8 : index
    %c0_27 = arith.constant 0 : index
    %54 = vector.load %arg12[%c8, %c0_27] : memref<96x512xf32, #tpu.memory_space<vmem>>, vector<8x512xf32>
    %cst_28 = arith.constant dense<0.000000e+00> : vector<8x512xf32>
    %55 = tpu.matmul %50, %14, %cst_28 {dimension_numbers = #tpu.dot_dimension_numbers<[1], [0], [0], [1], [0, 0, 1, 1], [], []>} : vector<8x128xf32>, vector<128x512xf32>, vector<8x512xf32> -> vector<8x512xf32>
    %56 = arith.addf %54, %55 : vector<8x512xf32>
    %57 = vector.extract_strided_slice %56 {offsets = [0, 0], sizes = [8, 128], strides = [1, 1]} : vector<8x512xf32> to vector<8x128xf32>
    %cst_29 = arith.constant 5.000000e-01 : f32
    %58 = vector.broadcast %cst_29 : f32 to vector<8x128xf32>
    %59 = arith.mulf %58, %57 : vector<8x128xf32>
    %60 = math.tanh %59 : vector<8x128xf32>
    %cst_30 = arith.constant 1.000000e+00 : f32
    %61 = vector.broadcast %cst_30 : f32 to vector<8x128xf32>
    %62 = arith.addf %60, %61 : vector<8x128xf32>
    %cst_31 = arith.constant 5.000000e-01 : f32
    %63 = vector.broadcast %cst_31 : f32 to vector<8x128xf32>
    %64 = arith.mulf %63, %62 : vector<8x128xf32>
    %65 = vector.extract_strided_slice %56 {offsets = [0, 128], sizes = [8, 128], strides = [1, 1]} : vector<8x512xf32> to vector<8x128xf32>
    %cst_32 = arith.constant 5.000000e-01 : f32
    %66 = vector.broadcast %cst_32 : f32 to vector<8x128xf32>
    %67 = arith.mulf %66, %65 : vector<8x128xf32>
    %68 = math.tanh %67 : vector<8x128xf32>
    %cst_33 = arith.constant 1.000000e+00 : f32
    %69 = vector.broadcast %cst_33 : f32 to vector<8x128xf32>
    %70 = arith.addf %68, %69 : vector<8x128xf32>
    %cst_34 = arith.constant 5.000000e-01 : f32
    %71 = vector.broadcast %cst_34 : f32 to vector<8x128xf32>
    %72 = arith.mulf %71, %70 : vector<8x128xf32>
    %73 = vector.extract_strided_slice %56 {offsets = [0, 256], sizes = [8, 128], strides = [1, 1]} : vector<8x512xf32> to vector<8x128xf32>
    %74 = math.tanh %73 : vector<8x128xf32>
    %75 = vector.extract_strided_slice %56 {offsets = [0, 384], sizes = [8, 128], strides = [1, 1]} : vector<8x512xf32> to vector<8x128xf32>
    %cst_35 = arith.constant 5.000000e-01 : f32
    %76 = vector.broadcast %cst_35 : f32 to vector<8x128xf32>
    %77 = arith.mulf %76, %75 : vector<8x128xf32>
    %78 = math.tanh %77 : vector<8x128xf32>
    %cst_36 = arith.constant 1.000000e+00 : f32
    %79 = vector.broadcast %cst_36 : f32 to vector<8x128xf32>
    %80 = arith.addf %78, %79 : vector<8x128xf32>
    %cst_37 = arith.constant 5.000000e-01 : f32
    %81 = vector.broadcast %cst_37 : f32 to vector<8x128xf32>
    %82 = arith.mulf %81, %80 : vector<8x128xf32>
    %83 = arith.mulf %72, %48 : vector<8x128xf32>
    %84 = arith.mulf %64, %74 : vector<8x128xf32>
    %85 = arith.addf %83, %84 : vector<8x128xf32>
    %86 = math.tanh %85 : vector<8x128xf32>
    %87 = arith.mulf %82, %86 : vector<8x128xf32>
    %c8_i32 = arith.constant 8 : i32
    %88 = arith.addi %1, %c8_i32 : i32
    %89 = arith.index_cast %88 : i32 to index
    %c0_38 = arith.constant 0 : index
    %90 = vector.load %arg7[%89, %c0_38] : memref<96x128xf32, #tpu.memory_space<vmem>>, vector<8x128xf32>
    tpu.vector_store %arg7[%89, %c0_38], %87 {strides = array<i32>} : memref<96x128xf32, #tpu.memory_space<vmem>>, vector<8x128xf32>,
    %c16 = arith.constant 16 : index
    %c0_39 = arith.constant 0 : index
    %91 = vector.load %arg12[%c16, %c0_39] : memref<96x512xf32, #tpu.memory_space<vmem>>, vector<8x512xf32>
    %cst_40 = arith.constant dense<0.000000e+00> : vector<8x512xf32>
    %92 = tpu.matmul %87, %14, %cst_40 {dimension_numbers = #tpu.dot_dimension_numbers<[1], [0], [0], [1], [0, 0, 1, 1], [], []>} : vector<8x128xf32>, vector<128x512xf32>, vector<8x512xf32> -> vector<8x512xf32>
    %93 = arith.addf %91, %92 : vector<8x512xf32>
    %94 = vector.extract_strided_slice %93 {offsets = [0, 0], sizes = [8, 128], strides = [1, 1]} : vector<8x512xf32> to vector<8x128xf32>
    %cst_41 = arith.constant 5.000000e-01 : f32
    %95 = vector.broadcast %cst_41 : f32 to vector<8x128xf32>
    %96 = arith.mulf %95, %94 : vector<8x128xf32>
    %97 = math.tanh %96 : vector<8x128xf32>
    %cst_42 = arith.constant 1.000000e+00 : f32
    %98 = vector.broadcast %cst_42 : f32 to vector<8x128xf32>
    %99 = arith.addf %97, %98 : vector<8x128xf32>
    %cst_43 = arith.constant 5.000000e-01 : f32
    %100 = vector.broadcast %cst_43 : f32 to vector<8x128xf32>
    %101 = arith.mulf %100, %99 : vector<8x128xf32>
    %102 = vector.extract_strided_slice %93 {offsets = [0, 128], sizes = [8, 128], strides = [1, 1]} : vector<8x512xf32> to vector<8x128xf32>
    %cst_44 = arith.constant 5.000000e-01 : f32
    %103 = vector.broadcast %cst_44 : f32 to vector<8x128xf32>
    %104 = arith.mulf %103, %102 : vector<8x128xf32>
    %105 = math.tanh %104 : vector<8x128xf32>
    %cst_45 = arith.constant 1.000000e+00 : f32
    %106 = vector.broadcast %cst_45 : f32 to vector<8x128xf32>
    %107 = arith.addf %105, %106 : vector<8x128xf32>
    %cst_46 = arith.constant 5.000000e-01 : f32
    %108 = vector.broadcast %cst_46 : f32 to vector<8x128xf32>
    %109 = arith.mulf %108, %107 : vector<8x128xf32>
    %110 = vector.extract_strided_slice %93 {offsets = [0, 256], sizes = [8, 128], strides = [1, 1]} : vector<8x512xf32> to vector<8x128xf32>
    %111 = math.tanh %110 : vector<8x128xf32>
    %112 = vector.extract_strided_slice %93 {offsets = [0, 384], sizes = [8, 128], strides = [1, 1]} : vector<8x512xf32> to vector<8x128xf32>
    %cst_47 = arith.constant 5.000000e-01 : f32
    %113 = vector.broadcast %cst_47 : f32 to vector<8x128xf32>
    %114 = arith.mulf %113, %112 : vector<8x128xf32>
    %115 = math.tanh %114 : vector<8x128xf32>
    %cst_48 = arith.constant 1.000000e+00 : f32
    %116 = vector.broadcast %cst_48 : f32 to vector<8x128xf32>
    %117 = arith.addf %115, %116 : vector<8x128xf32>
    %cst_49 = arith.constant 5.000000e-01 : f32
    %118 = vector.broadcast %cst_49 : f32 to vector<8x128xf32>
    %119 = arith.mulf %118, %117 : vector<8x128xf32>
    %120 = arith.mulf %109, %85 : vector<8x128xf32>
    %121 = arith.mulf %101, %111 : vector<8x128xf32>
    %122 = arith.addf %120, %121 : vector<8x128xf32>
    %123 = math.tanh %122 : vector<8x128xf32>
    %124 = arith.mulf %119, %123 : vector<8x128xf32>
    %c16_i32 = arith.constant 16 : i32
    %125 = arith.addi %1, %c16_i32 : i32
    %126 = arith.index_cast %125 : i32 to index
    %c0_50 = arith.constant 0 : index
    %127 = vector.load %arg7[%126, %c0_50] : memref<96x128xf32, #tpu.memory_space<vmem>>, vector<8x128xf32>
    tpu.vector_store %arg7[%126, %c0_50], %124 {strides = array<i32>} : memref<96x128xf32, #tpu.memory_space<vmem>>, vector<8x128xf32>,
    %c24 = arith.constant 24 : index
    %c0_51 = arith.constant 0 : index
    %128 = vector.load %arg12[%c24, %c0_51] : memref<96x512xf32, #tpu.memory_space<vmem>>, vector<8x512xf32>
    %cst_52 = arith.constant dense<0.000000e+00> : vector<8x512xf32>
    %129 = tpu.matmul %124, %14, %cst_52 {dimension_numbers = #tpu.dot_dimension_numbers<[1], [0], [0], [1], [0, 0, 1, 1], [], []>} : vector<8x128xf32>, vector<128x512xf32>, vector<8x512xf32> -> vector<8x512xf32>
    %130 = arith.addf %128, %129 : vector<8x512xf32>
    %131 = vector.extract_strided_slice %130 {offsets = [0, 0], sizes = [8, 128], strides = [1, 1]} : vector<8x512xf32> to vector<8x128xf32>
    %cst_53 = arith.constant 5.000000e-01 : f32
    %132 = vector.broadcast %cst_53 : f32 to vector<8x128xf32>
    %133 = arith.mulf %132, %131 : vector<8x128xf32>
    %134 = math.tanh %133 : vector<8x128xf32>
    %cst_54 = arith.constant 1.000000e+00 : f32
    %135 = vector.broadcast %cst_54 : f32 to vector<8x128xf32>
    %136 = arith.addf %134, %135 : vector<8x128xf32>
    %cst_55 = arith.constant 5.000000e-01 : f32
    %137 = vector.broadcast %cst_55 : f32 to vector<8x128xf32>
    %138 = arith.mulf %137, %136 : vector<8x128xf32>
    %139 = vector.extract_strided_slice %130 {offsets = [0, 128], sizes = [8, 128], strides = [1, 1]} : vector<8x512xf32> to vector<8x128xf32>
    %cst_56 = arith.constant 5.000000e-01 : f32
    %140 = vector.broadcast %cst_56 : f32 to vector<8x128xf32>
    %141 = arith.mulf %140, %139 : vector<8x128xf32>
    %142 = math.tanh %141 : vector<8x128xf32>
    %cst_57 = arith.constant 1.000000e+00 : f32
    %143 = vector.broadcast %cst_57 : f32 to vector<8x128xf32>
    %144 = arith.addf %142, %143 : vector<8x128xf32>
    %cst_58 = arith.constant 5.000000e-01 : f32
    %145 = vector.broadcast %cst_58 : f32 to vector<8x128xf32>
    %146 = arith.mulf %145, %144 : vector<8x128xf32>
    %147 = vector.extract_strided_slice %130 {offsets = [0, 256], sizes = [8, 128], strides = [1, 1]} : vector<8x512xf32> to vector<8x128xf32>
    %148 = math.tanh %147 : vector<8x128xf32>
    %149 = vector.extract_strided_slice %130 {offsets = [0, 384], sizes = [8, 128], strides = [1, 1]} : vector<8x512xf32> to vector<8x128xf32>
    %cst_59 = arith.constant 5.000000e-01 : f32
    %150 = vector.broadcast %cst_59 : f32 to vector<8x128xf32>
    %151 = arith.mulf %150, %149 : vector<8x128xf32>
    %152 = math.tanh %151 : vector<8x128xf32>
    %cst_60 = arith.constant 1.000000e+00 : f32
    %153 = vector.broadcast %cst_60 : f32 to vector<8x128xf32>
    %154 = arith.addf %152, %153 : vector<8x128xf32>
    %cst_61 = arith.constant 5.000000e-01 : f32
    %155 = vector.broadcast %cst_61 : f32 to vector<8x128xf32>
    %156 = arith.mulf %155, %154 : vector<8x128xf32>
    %157 = arith.mulf %146, %122 : vector<8x128xf32>
    %158 = arith.mulf %138, %148 : vector<8x128xf32>
    %159 = arith.addf %157, %158 : vector<8x128xf32>
    %160 = math.tanh %159 : vector<8x128xf32>
    %161 = arith.mulf %156, %160 : vector<8x128xf32>
    %c24_i32 = arith.constant 24 : i32
    %162 = arith.addi %1, %c24_i32 : i32
    %163 = arith.index_cast %162 : i32 to index
    %c0_62 = arith.constant 0 : index
    %164 = vector.load %arg7[%163, %c0_62] : memref<96x128xf32, #tpu.memory_space<vmem>>, vector<8x128xf32>
    tpu.vector_store %arg7[%163, %c0_62], %161 {strides = array<i32>} : memref<96x128xf32, #tpu.memory_space<vmem>>, vector<8x128xf32>,
    %c32 = arith.constant 32 : index
    %c0_63 = arith.constant 0 : index
    %165 = vector.load %arg12[%c32, %c0_63] : memref<96x512xf32, #tpu.memory_space<vmem>>, vector<8x512xf32>
    %cst_64 = arith.constant dense<0.000000e+00> : vector<8x512xf32>
    %166 = tpu.matmul %161, %14, %cst_64 {dimension_numbers = #tpu.dot_dimension_numbers<[1], [0], [0], [1], [0, 0, 1, 1], [], []>} : vector<8x128xf32>, vector<128x512xf32>, vector<8x512xf32> -> vector<8x512xf32>
    %167 = arith.addf %165, %166 : vector<8x512xf32>
    %168 = vector.extract_strided_slice %167 {offsets = [0, 0], sizes = [8, 128], strides = [1, 1]} : vector<8x512xf32> to vector<8x128xf32>
    %cst_65 = arith.constant 5.000000e-01 : f32
    %169 = vector.broadcast %cst_65 : f32 to vector<8x128xf32>
    %170 = arith.mulf %169, %168 : vector<8x128xf32>
    %171 = math.tanh %170 : vector<8x128xf32>
    %cst_66 = arith.constant 1.000000e+00 : f32
    %172 = vector.broadcast %cst_66 : f32 to vector<8x128xf32>
    %173 = arith.addf %171, %172 : vector<8x128xf32>
    %cst_67 = arith.constant 5.000000e-01 : f32
    %174 = vector.broadcast %cst_67 : f32 to vector<8x128xf32>
    %175 = arith.mulf %174, %173 : vector<8x128xf32>
    %176 = vector.extract_strided_slice %167 {offsets = [0, 128], sizes = [8, 128], strides = [1, 1]} : vector<8x512xf32> to vector<8x128xf32>
    %cst_68 = arith.constant 5.000000e-01 : f32
    %177 = vector.broadcast %cst_68 : f32 to vector<8x128xf32>
    %178 = arith.mulf %177, %176 : vector<8x128xf32>
    %179 = math.tanh %178 : vector<8x128xf32>
    %cst_69 = arith.constant 1.000000e+00 : f32
    %180 = vector.broadcast %cst_69 : f32 to vector<8x128xf32>
    %181 = arith.addf %179, %180 : vector<8x128xf32>
    %cst_70 = arith.constant 5.000000e-01 : f32
    %182 = vector.broadcast %cst_70 : f32 to vector<8x128xf32>
    %183 = arith.mulf %182, %181 : vector<8x128xf32>
    %184 = vector.extract_strided_slice %167 {offsets = [0, 256], sizes = [8, 128], strides = [1, 1]} : vector<8x512xf32> to vector<8x128xf32>
    %185 = math.tanh %184 : vector<8x128xf32>
    %186 = vector.extract_strided_slice %167 {offsets = [0, 384], sizes = [8, 128], strides = [1, 1]} : vector<8x512xf32> to vector<8x128xf32>
    %cst_71 = arith.constant 5.000000e-01 : f32
    %187 = vector.broadcast %cst_71 : f32 to vector<8x128xf32>
    %188 = arith.mulf %187, %186 : vector<8x128xf32>
    %189 = math.tanh %188 : vector<8x128xf32>
    %cst_72 = arith.constant 1.000000e+00 : f32
    %190 = vector.broadcast %cst_72 : f32 to vector<8x128xf32>
    %191 = arith.addf %189, %190 : vector<8x128xf32>
    %cst_73 = arith.constant 5.000000e-01 : f32
    %192 = vector.broadcast %cst_73 : f32 to vector<8x128xf32>
    %193 = arith.mulf %192, %191 : vector<8x128xf32>
    %194 = arith.mulf %183, %159 : vector<8x128xf32>
    %195 = arith.mulf %175, %185 : vector<8x128xf32>
    %196 = arith.addf %194, %195 : vector<8x128xf32>
    %197 = math.tanh %196 : vector<8x128xf32>
    %198 = arith.mulf %193, %197 : vector<8x128xf32>
    %c32_i32 = arith.constant 32 : i32
    %199 = arith.addi %1, %c32_i32 : i32
    %200 = arith.index_cast %199 : i32 to index
    %c0_74 = arith.constant 0 : index
    %201 = vector.load %arg7[%200, %c0_74] : memref<96x128xf32, #tpu.memory_space<vmem>>, vector<8x128xf32>
    tpu.vector_store %arg7[%200, %c0_74], %198 {strides = array<i32>} : memref<96x128xf32, #tpu.memory_space<vmem>>, vector<8x128xf32>,
    %c40 = arith.constant 40 : index
    %c0_75 = arith.constant 0 : index
    %202 = vector.load %arg12[%c40, %c0_75] : memref<96x512xf32, #tpu.memory_space<vmem>>, vector<8x512xf32>
    %cst_76 = arith.constant dense<0.000000e+00> : vector<8x512xf32>
    %203 = tpu.matmul %198, %14, %cst_76 {dimension_numbers = #tpu.dot_dimension_numbers<[1], [0], [0], [1], [0, 0, 1, 1], [], []>} : vector<8x128xf32>, vector<128x512xf32>, vector<8x512xf32> -> vector<8x512xf32>
    %204 = arith.addf %202, %203 : vector<8x512xf32>
    %205 = vector.extract_strided_slice %204 {offsets = [0, 0], sizes = [8, 128], strides = [1, 1]} : vector<8x512xf32> to vector<8x128xf32>
    %cst_77 = arith.constant 5.000000e-01 : f32
    %206 = vector.broadcast %cst_77 : f32 to vector<8x128xf32>
    %207 = arith.mulf %206, %205 : vector<8x128xf32>
    %208 = math.tanh %207 : vector<8x128xf32>
    %cst_78 = arith.constant 1.000000e+00 : f32
    %209 = vector.broadcast %cst_78 : f32 to vector<8x128xf32>
    %210 = arith.addf %208, %209 : vector<8x128xf32>
    %cst_79 = arith.constant 5.000000e-01 : f32
    %211 = vector.broadcast %cst_79 : f32 to vector<8x128xf32>
    %212 = arith.mulf %211, %210 : vector<8x128xf32>
    %213 = vector.extract_strided_slice %204 {offsets = [0, 128], sizes = [8, 128], strides = [1, 1]} : vector<8x512xf32> to vector<8x128xf32>
    %cst_80 = arith.constant 5.000000e-01 : f32
    %214 = vector.broadcast %cst_80 : f32 to vector<8x128xf32>
    %215 = arith.mulf %214, %213 : vector<8x128xf32>
    %216 = math.tanh %215 : vector<8x128xf32>
    %cst_81 = arith.constant 1.000000e+00 : f32
    %217 = vector.broadcast %cst_81 : f32 to vector<8x128xf32>
    %218 = arith.addf %216, %217 : vector<8x128xf32>
    %cst_82 = arith.constant 5.000000e-01 : f32
    %219 = vector.broadcast %cst_82 : f32 to vector<8x128xf32>
    %220 = arith.mulf %219, %218 : vector<8x128xf32>
    %221 = vector.extract_strided_slice %204 {offsets = [0, 256], sizes = [8, 128], strides = [1, 1]} : vector<8x512xf32> to vector<8x128xf32>
    %222 = math.tanh %221 : vector<8x128xf32>
    %223 = vector.extract_strided_slice %204 {offsets = [0, 384], sizes = [8, 128], strides = [1, 1]} : vector<8x512xf32> to vector<8x128xf32>
    %cst_83 = arith.constant 5.000000e-01 : f32
    %224 = vector.broadcast %cst_83 : f32 to vector<8x128xf32>
    %225 = arith.mulf %224, %223 : vector<8x128xf32>
    %226 = math.tanh %225 : vector<8x128xf32>
    %cst_84 = arith.constant 1.000000e+00 : f32
    %227 = vector.broadcast %cst_84 : f32 to vector<8x128xf32>
    %228 = arith.addf %226, %227 : vector<8x128xf32>
    %cst_85 = arith.constant 5.000000e-01 : f32
    %229 = vector.broadcast %cst_85 : f32 to vector<8x128xf32>
    %230 = arith.mulf %229, %228 : vector<8x128xf32>
    %231 = arith.mulf %220, %196 : vector<8x128xf32>
    %232 = arith.mulf %212, %222 : vector<8x128xf32>
    %233 = arith.addf %231, %232 : vector<8x128xf32>
    %234 = math.tanh %233 : vector<8x128xf32>
    %235 = arith.mulf %230, %234 : vector<8x128xf32>
    %c40_i32 = arith.constant 40 : i32
    %236 = arith.addi %1, %c40_i32 : i32
    %237 = arith.index_cast %236 : i32 to index
    %c0_86 = arith.constant 0 : index
    %238 = vector.load %arg7[%237, %c0_86] : memref<96x128xf32, #tpu.memory_space<vmem>>, vector<8x128xf32>
    tpu.vector_store %arg7[%237, %c0_86], %235 {strides = array<i32>} : memref<96x128xf32, #tpu.memory_space<vmem>>, vector<8x128xf32>,
    %c48 = arith.constant 48 : index
    %c0_87 = arith.constant 0 : index
    %239 = vector.load %arg12[%c48, %c0_87] : memref<96x512xf32, #tpu.memory_space<vmem>>, vector<8x512xf32>
    %cst_88 = arith.constant dense<0.000000e+00> : vector<8x512xf32>
    %240 = tpu.matmul %235, %14, %cst_88 {dimension_numbers = #tpu.dot_dimension_numbers<[1], [0], [0], [1], [0, 0, 1, 1], [], []>} : vector<8x128xf32>, vector<128x512xf32>, vector<8x512xf32> -> vector<8x512xf32>
    %241 = arith.addf %239, %240 : vector<8x512xf32>
    %242 = vector.extract_strided_slice %241 {offsets = [0, 0], sizes = [8, 128], strides = [1, 1]} : vector<8x512xf32> to vector<8x128xf32>
    %cst_89 = arith.constant 5.000000e-01 : f32
    %243 = vector.broadcast %cst_89 : f32 to vector<8x128xf32>
    %244 = arith.mulf %243, %242 : vector<8x128xf32>
    %245 = math.tanh %244 : vector<8x128xf32>
    %cst_90 = arith.constant 1.000000e+00 : f32
    %246 = vector.broadcast %cst_90 : f32 to vector<8x128xf32>
    %247 = arith.addf %245, %246 : vector<8x128xf32>
    %cst_91 = arith.constant 5.000000e-01 : f32
    %248 = vector.broadcast %cst_91 : f32 to vector<8x128xf32>
    %249 = arith.mulf %248, %247 : vector<8x128xf32>
    %250 = vector.extract_strided_slice %241 {offsets = [0, 128], sizes = [8, 128], strides = [1, 1]} : vector<8x512xf32> to vector<8x128xf32>
    %cst_92 = arith.constant 5.000000e-01 : f32
    %251 = vector.broadcast %cst_92 : f32 to vector<8x128xf32>
    %252 = arith.mulf %251, %250 : vector<8x128xf32>
    %253 = math.tanh %252 : vector<8x128xf32>
    %cst_93 = arith.constant 1.000000e+00 : f32
    %254 = vector.broadcast %cst_93 : f32 to vector<8x128xf32>
    %255 = arith.addf %253, %254 : vector<8x128xf32>
    %cst_94 = arith.constant 5.000000e-01 : f32
    %256 = vector.broadcast %cst_94 : f32 to vector<8x128xf32>
    %257 = arith.mulf %256, %255 : vector<8x128xf32>
    %258 = vector.extract_strided_slice %241 {offsets = [0, 256], sizes = [8, 128], strides = [1, 1]} : vector<8x512xf32> to vector<8x128xf32>
    %259 = math.tanh %258 : vector<8x128xf32>
    %260 = vector.extract_strided_slice %241 {offsets = [0, 384], sizes = [8, 128], strides = [1, 1]} : vector<8x512xf32> to vector<8x128xf32>
    %cst_95 = arith.constant 5.000000e-01 : f32
    %261 = vector.broadcast %cst_95 : f32 to vector<8x128xf32>
    %262 = arith.mulf %261, %260 : vector<8x128xf32>
    %263 = math.tanh %262 : vector<8x128xf32>
    %cst_96 = arith.constant 1.000000e+00 : f32
    %264 = vector.broadcast %cst_96 : f32 to vector<8x128xf32>
    %265 = arith.addf %263, %264 : vector<8x128xf32>
    %cst_97 = arith.constant 5.000000e-01 : f32
    %266 = vector.broadcast %cst_97 : f32 to vector<8x128xf32>
    %267 = arith.mulf %266, %265 : vector<8x128xf32>
    %268 = arith.mulf %257, %233 : vector<8x128xf32>
    %269 = arith.mulf %249, %259 : vector<8x128xf32>
    %270 = arith.addf %268, %269 : vector<8x128xf32>
    %271 = math.tanh %270 : vector<8x128xf32>
    %272 = arith.mulf %267, %271 : vector<8x128xf32>
    %c48_i32 = arith.constant 48 : i32
    %273 = arith.addi %1, %c48_i32 : i32
    %274 = arith.index_cast %273 : i32 to index
    %c0_98 = arith.constant 0 : index
    %275 = vector.load %arg7[%274, %c0_98] : memref<96x128xf32, #tpu.memory_space<vmem>>, vector<8x128xf32>
    tpu.vector_store %arg7[%274, %c0_98], %272 {strides = array<i32>} : memref<96x128xf32, #tpu.memory_space<vmem>>, vector<8x128xf32>,
    %c56 = arith.constant 56 : index
    %c0_99 = arith.constant 0 : index
    %276 = vector.load %arg12[%c56, %c0_99] : memref<96x512xf32, #tpu.memory_space<vmem>>, vector<8x512xf32>
    %cst_100 = arith.constant dense<0.000000e+00> : vector<8x512xf32>
    %277 = tpu.matmul %272, %14, %cst_100 {dimension_numbers = #tpu.dot_dimension_numbers<[1], [0], [0], [1], [0, 0, 1, 1], [], []>} : vector<8x128xf32>, vector<128x512xf32>, vector<8x512xf32> -> vector<8x512xf32>
    %278 = arith.addf %276, %277 : vector<8x512xf32>
    %279 = vector.extract_strided_slice %278 {offsets = [0, 0], sizes = [8, 128], strides = [1, 1]} : vector<8x512xf32> to vector<8x128xf32>
    %cst_101 = arith.constant 5.000000e-01 : f32
    %280 = vector.broadcast %cst_101 : f32 to vector<8x128xf32>
    %281 = arith.mulf %280, %279 : vector<8x128xf32>
    %282 = math.tanh %281 : vector<8x128xf32>
    %cst_102 = arith.constant 1.000000e+00 : f32
    %283 = vector.broadcast %cst_102 : f32 to vector<8x128xf32>
    %284 = arith.addf %282, %283 : vector<8x128xf32>
    %cst_103 = arith.constant 5.000000e-01 : f32
    %285 = vector.broadcast %cst_103 : f32 to vector<8x128xf32>
    %286 = arith.mulf %285, %284 : vector<8x128xf32>
    %287 = vector.extract_strided_slice %278 {offsets = [0, 128], sizes = [8, 128], strides = [1, 1]} : vector<8x512xf32> to vector<8x128xf32>
    %cst_104 = arith.constant 5.000000e-01 : f32
    %288 = vector.broadcast %cst_104 : f32 to vector<8x128xf32>
    %289 = arith.mulf %288, %287 : vector<8x128xf32>
    %290 = math.tanh %289 : vector<8x128xf32>
    %cst_105 = arith.constant 1.000000e+00 : f32
    %291 = vector.broadcast %cst_105 : f32 to vector<8x128xf32>
    %292 = arith.addf %290, %291 : vector<8x128xf32>
    %cst_106 = arith.constant 5.000000e-01 : f32
    %293 = vector.broadcast %cst_106 : f32 to vector<8x128xf32>
    %294 = arith.mulf %293, %292 : vector<8x128xf32>
    %295 = vector.extract_strided_slice %278 {offsets = [0, 256], sizes = [8, 128], strides = [1, 1]} : vector<8x512xf32> to vector<8x128xf32>
    %296 = math.tanh %295 : vector<8x128xf32>
    %297 = vector.extract_strided_slice %278 {offsets = [0, 384], sizes = [8, 128], strides = [1, 1]} : vector<8x512xf32> to vector<8x128xf32>
    %cst_107 = arith.constant 5.000000e-01 : f32
    %298 = vector.broadcast %cst_107 : f32 to vector<8x128xf32>
    %299 = arith.mulf %298, %297 : vector<8x128xf32>
    %300 = math.tanh %299 : vector<8x128xf32>
    %cst_108 = arith.constant 1.000000e+00 : f32
    %301 = vector.broadcast %cst_108 : f32 to vector<8x128xf32>
    %302 = arith.addf %300, %301 : vector<8x128xf32>
    %cst_109 = arith.constant 5.000000e-01 : f32
    %303 = vector.broadcast %cst_109 : f32 to vector<8x128xf32>
    %304 = arith.mulf %303, %302 : vector<8x128xf32>
    %305 = arith.mulf %294, %270 : vector<8x128xf32>
    %306 = arith.mulf %286, %296 : vector<8x128xf32>
    %307 = arith.addf %305, %306 : vector<8x128xf32>
    %308 = math.tanh %307 : vector<8x128xf32>
    %309 = arith.mulf %304, %308 : vector<8x128xf32>
    %c56_i32 = arith.constant 56 : i32
    %310 = arith.addi %1, %c56_i32 : i32
    %311 = arith.index_cast %310 : i32 to index
    %c0_110 = arith.constant 0 : index
    %312 = vector.load %arg7[%311, %c0_110] : memref<96x128xf32, #tpu.memory_space<vmem>>, vector<8x128xf32>
    tpu.vector_store %arg7[%311, %c0_110], %309 {strides = array<i32>} : memref<96x128xf32, #tpu.memory_space<vmem>>, vector<8x128xf32>,
    %c64 = arith.constant 64 : index
    %c0_111 = arith.constant 0 : index
    %313 = vector.load %arg12[%c64, %c0_111] : memref<96x512xf32, #tpu.memory_space<vmem>>, vector<8x512xf32>
    %cst_112 = arith.constant dense<0.000000e+00> : vector<8x512xf32>
    %314 = tpu.matmul %309, %14, %cst_112 {dimension_numbers = #tpu.dot_dimension_numbers<[1], [0], [0], [1], [0, 0, 1, 1], [], []>} : vector<8x128xf32>, vector<128x512xf32>, vector<8x512xf32> -> vector<8x512xf32>
    %315 = arith.addf %313, %314 : vector<8x512xf32>
    %316 = vector.extract_strided_slice %315 {offsets = [0, 0], sizes = [8, 128], strides = [1, 1]} : vector<8x512xf32> to vector<8x128xf32>
    %cst_113 = arith.constant 5.000000e-01 : f32
    %317 = vector.broadcast %cst_113 : f32 to vector<8x128xf32>
    %318 = arith.mulf %317, %316 : vector<8x128xf32>
    %319 = math.tanh %318 : vector<8x128xf32>
    %cst_114 = arith.constant 1.000000e+00 : f32
    %320 = vector.broadcast %cst_114 : f32 to vector<8x128xf32>
    %321 = arith.addf %319, %320 : vector<8x128xf32>
    %cst_115 = arith.constant 5.000000e-01 : f32
    %322 = vector.broadcast %cst_115 : f32 to vector<8x128xf32>
    %323 = arith.mulf %322, %321 : vector<8x128xf32>
    %324 = vector.extract_strided_slice %315 {offsets = [0, 128], sizes = [8, 128], strides = [1, 1]} : vector<8x512xf32> to vector<8x128xf32>
    %cst_116 = arith.constant 5.000000e-01 : f32
    %325 = vector.broadcast %cst_116 : f32 to vector<8x128xf32>
    %326 = arith.mulf %325, %324 : vector<8x128xf32>
    %327 = math.tanh %326 : vector<8x128xf32>
    %cst_117 = arith.constant 1.000000e+00 : f32
    %328 = vector.broadcast %cst_117 : f32 to vector<8x128xf32>
    %329 = arith.addf %327, %328 : vector<8x128xf32>
    %cst_118 = arith.constant 5.000000e-01 : f32
    %330 = vector.broadcast %cst_118 : f32 to vector<8x128xf32>
    %331 = arith.mulf %330, %329 : vector<8x128xf32>
    %332 = vector.extract_strided_slice %315 {offsets = [0, 256], sizes = [8, 128], strides = [1, 1]} : vector<8x512xf32> to vector<8x128xf32>
    %333 = math.tanh %332 : vector<8x128xf32>
    %334 = vector.extract_strided_slice %315 {offsets = [0, 384], sizes = [8, 128], strides = [1, 1]} : vector<8x512xf32> to vector<8x128xf32>
    %cst_119 = arith.constant 5.000000e-01 : f32
    %335 = vector.broadcast %cst_119 : f32 to vector<8x128xf32>
    %336 = arith.mulf %335, %334 : vector<8x128xf32>
    %337 = math.tanh %336 : vector<8x128xf32>
    %cst_120 = arith.constant 1.000000e+00 : f32
    %338 = vector.broadcast %cst_120 : f32 to vector<8x128xf32>
    %339 = arith.addf %337, %338 : vector<8x128xf32>
    %cst_121 = arith.constant 5.000000e-01 : f32
    %340 = vector.broadcast %cst_121 : f32 to vector<8x128xf32>
    %341 = arith.mulf %340, %339 : vector<8x128xf32>
    %342 = arith.mulf %331, %307 : vector<8x128xf32>
    %343 = arith.mulf %323, %333 : vector<8x128xf32>
    %344 = arith.addf %342, %343 : vector<8x128xf32>
    %345 = math.tanh %344 : vector<8x128xf32>
    %346 = arith.mulf %341, %345 : vector<8x128xf32>
    %c64_i32 = arith.constant 64 : i32
    %347 = arith.addi %1, %c64_i32 : i32
    %348 = arith.index_cast %347 : i32 to index
    %c0_122 = arith.constant 0 : index
    %349 = vector.load %arg7[%348, %c0_122] : memref<96x128xf32, #tpu.memory_space<vmem>>, vector<8x128xf32>
    tpu.vector_store %arg7[%348, %c0_122], %346 {strides = array<i32>} : memref<96x128xf32, #tpu.memory_space<vmem>>, vector<8x128xf32>,
    %c72 = arith.constant 72 : index
    %c0_123 = arith.constant 0 : index
    %350 = vector.load %arg12[%c72, %c0_123] : memref<96x512xf32, #tpu.memory_space<vmem>>, vector<8x512xf32>
    %cst_124 = arith.constant dense<0.000000e+00> : vector<8x512xf32>
    %351 = tpu.matmul %346, %14, %cst_124 {dimension_numbers = #tpu.dot_dimension_numbers<[1], [0], [0], [1], [0, 0, 1, 1], [], []>} : vector<8x128xf32>, vector<128x512xf32>, vector<8x512xf32> -> vector<8x512xf32>
    %352 = arith.addf %350, %351 : vector<8x512xf32>
    %353 = vector.extract_strided_slice %352 {offsets = [0, 0], sizes = [8, 128], strides = [1, 1]} : vector<8x512xf32> to vector<8x128xf32>
    %cst_125 = arith.constant 5.000000e-01 : f32
    %354 = vector.broadcast %cst_125 : f32 to vector<8x128xf32>
    %355 = arith.mulf %354, %353 : vector<8x128xf32>
    %356 = math.tanh %355 : vector<8x128xf32>
    %cst_126 = arith.constant 1.000000e+00 : f32
    %357 = vector.broadcast %cst_126 : f32 to vector<8x128xf32>
    %358 = arith.addf %356, %357 : vector<8x128xf32>
    %cst_127 = arith.constant 5.000000e-01 : f32
    %359 = vector.broadcast %cst_127 : f32 to vector<8x128xf32>
    %360 = arith.mulf %359, %358 : vector<8x128xf32>
    %361 = vector.extract_strided_slice %352 {offsets = [0, 128], sizes = [8, 128], strides = [1, 1]} : vector<8x512xf32> to vector<8x128xf32>
    %cst_128 = arith.constant 5.000000e-01 : f32
    %362 = vector.broadcast %cst_128 : f32 to vector<8x128xf32>
    %363 = arith.mulf %362, %361 : vector<8x128xf32>
    %364 = math.tanh %363 : vector<8x128xf32>
    %cst_129 = arith.constant 1.000000e+00 : f32
    %365 = vector.broadcast %cst_129 : f32 to vector<8x128xf32>
    %366 = arith.addf %364, %365 : vector<8x128xf32>
    %cst_130 = arith.constant 5.000000e-01 : f32
    %367 = vector.broadcast %cst_130 : f32 to vector<8x128xf32>
    %368 = arith.mulf %367, %366 : vector<8x128xf32>
    %369 = vector.extract_strided_slice %352 {offsets = [0, 256], sizes = [8, 128], strides = [1, 1]} : vector<8x512xf32> to vector<8x128xf32>
    %370 = math.tanh %369 : vector<8x128xf32>
    %371 = vector.extract_strided_slice %352 {offsets = [0, 384], sizes = [8, 128], strides = [1, 1]} : vector<8x512xf32> to vector<8x128xf32>
    %cst_131 = arith.constant 5.000000e-01 : f32
    %372 = vector.broadcast %cst_131 : f32 to vector<8x128xf32>
    %373 = arith.mulf %372, %371 : vector<8x128xf32>
    %374 = math.tanh %373 : vector<8x128xf32>
    %cst_132 = arith.constant 1.000000e+00 : f32
    %375 = vector.broadcast %cst_132 : f32 to vector<8x128xf32>
    %376 = arith.addf %374, %375 : vector<8x128xf32>
    %cst_133 = arith.constant 5.000000e-01 : f32
    %377 = vector.broadcast %cst_133 : f32 to vector<8x128xf32>
    %378 = arith.mulf %377, %376 : vector<8x128xf32>
    %379 = arith.mulf %368, %344 : vector<8x128xf32>
    %380 = arith.mulf %360, %370 : vector<8x128xf32>
    %381 = arith.addf %379, %380 : vector<8x128xf32>
    %382 = math.tanh %381 : vector<8x128xf32>
    %383 = arith.mulf %378, %382 : vector<8x128xf32>
    %c72_i32 = arith.constant 72 : i32
    %384 = arith.addi %1, %c72_i32 : i32
    %385 = arith.index_cast %384 : i32 to index
    %c0_134 = arith.constant 0 : index
    %386 = vector.load %arg7[%385, %c0_134] : memref<96x128xf32, #tpu.memory_space<vmem>>, vector<8x128xf32>
    tpu.vector_store %arg7[%385, %c0_134], %383 {strides = array<i32>} : memref<96x128xf32, #tpu.memory_space<vmem>>, vector<8x128xf32>,
    %c80 = arith.constant 80 : index
    %c0_135 = arith.constant 0 : index
    %387 = vector.load %arg12[%c80, %c0_135] : memref<96x512xf32, #tpu.memory_space<vmem>>, vector<8x512xf32>
    %cst_136 = arith.constant dense<0.000000e+00> : vector<8x512xf32>
    %388 = tpu.matmul %383, %14, %cst_136 {dimension_numbers = #tpu.dot_dimension_numbers<[1], [0], [0], [1], [0, 0, 1, 1], [], []>} : vector<8x128xf32>, vector<128x512xf32>, vector<8x512xf32> -> vector<8x512xf32>
    %389 = arith.addf %387, %388 : vector<8x512xf32>
    %390 = vector.extract_strided_slice %389 {offsets = [0, 0], sizes = [8, 128], strides = [1, 1]} : vector<8x512xf32> to vector<8x128xf32>
    %cst_137 = arith.constant 5.000000e-01 : f32
    %391 = vector.broadcast %cst_137 : f32 to vector<8x128xf32>
    %392 = arith.mulf %391, %390 : vector<8x128xf32>
    %393 = math.tanh %392 : vector<8x128xf32>
    %cst_138 = arith.constant 1.000000e+00 : f32
    %394 = vector.broadcast %cst_138 : f32 to vector<8x128xf32>
    %395 = arith.addf %393, %394 : vector<8x128xf32>
    %cst_139 = arith.constant 5.000000e-01 : f32
    %396 = vector.broadcast %cst_139 : f32 to vector<8x128xf32>
    %397 = arith.mulf %396, %395 : vector<8x128xf32>
    %398 = vector.extract_strided_slice %389 {offsets = [0, 128], sizes = [8, 128], strides = [1, 1]} : vector<8x512xf32> to vector<8x128xf32>
    %cst_140 = arith.constant 5.000000e-01 : f32
    %399 = vector.broadcast %cst_140 : f32 to vector<8x128xf32>
    %400 = arith.mulf %399, %398 : vector<8x128xf32>
    %401 = math.tanh %400 : vector<8x128xf32>
    %cst_141 = arith.constant 1.000000e+00 : f32
    %402 = vector.broadcast %cst_141 : f32 to vector<8x128xf32>
    %403 = arith.addf %401, %402 : vector<8x128xf32>
    %cst_142 = arith.constant 5.000000e-01 : f32
    %404 = vector.broadcast %cst_142 : f32 to vector<8x128xf32>
    %405 = arith.mulf %404, %403 : vector<8x128xf32>
    %406 = vector.extract_strided_slice %389 {offsets = [0, 256], sizes = [8, 128], strides = [1, 1]} : vector<8x512xf32> to vector<8x128xf32>
    %407 = math.tanh %406 : vector<8x128xf32>
    %408 = vector.extract_strided_slice %389 {offsets = [0, 384], sizes = [8, 128], strides = [1, 1]} : vector<8x512xf32> to vector<8x128xf32>
    %cst_143 = arith.constant 5.000000e-01 : f32
    %409 = vector.broadcast %cst_143 : f32 to vector<8x128xf32>
    %410 = arith.mulf %409, %408 : vector<8x128xf32>
    %411 = math.tanh %410 : vector<8x128xf32>
    %cst_144 = arith.constant 1.000000e+00 : f32
    %412 = vector.broadcast %cst_144 : f32 to vector<8x128xf32>
    %413 = arith.addf %411, %412 : vector<8x128xf32>
    %cst_145 = arith.constant 5.000000e-01 : f32
    %414 = vector.broadcast %cst_145 : f32 to vector<8x128xf32>
    %415 = arith.mulf %414, %413 : vector<8x128xf32>
    %416 = arith.mulf %405, %381 : vector<8x128xf32>
    %417 = arith.mulf %397, %407 : vector<8x128xf32>
    %418 = arith.addf %416, %417 : vector<8x128xf32>
    %419 = math.tanh %418 : vector<8x128xf32>
    %420 = arith.mulf %415, %419 : vector<8x128xf32>
    %c80_i32 = arith.constant 80 : i32
    %421 = arith.addi %1, %c80_i32 : i32
    %422 = arith.index_cast %421 : i32 to index
    %c0_146 = arith.constant 0 : index
    %423 = vector.load %arg7[%422, %c0_146] : memref<96x128xf32, #tpu.memory_space<vmem>>, vector<8x128xf32>
    tpu.vector_store %arg7[%422, %c0_146], %420 {strides = array<i32>} : memref<96x128xf32, #tpu.memory_space<vmem>>, vector<8x128xf32>,
    %c88 = arith.constant 88 : index
    %c0_147 = arith.constant 0 : index
    %424 = vector.load %arg12[%c88, %c0_147] : memref<96x512xf32, #tpu.memory_space<vmem>>, vector<8x512xf32>
    %cst_148 = arith.constant dense<0.000000e+00> : vector<8x512xf32>
    %425 = tpu.matmul %420, %14, %cst_148 {dimension_numbers = #tpu.dot_dimension_numbers<[1], [0], [0], [1], [0, 0, 1, 1], [], []>} : vector<8x128xf32>, vector<128x512xf32>, vector<8x512xf32> -> vector<8x512xf32>
    %426 = arith.addf %424, %425 : vector<8x512xf32>
    %427 = vector.extract_strided_slice %426 {offsets = [0, 0], sizes = [8, 128], strides = [1, 1]} : vector<8x512xf32> to vector<8x128xf32>
    %cst_149 = arith.constant 5.000000e-01 : f32
    %428 = vector.broadcast %cst_149 : f32 to vector<8x128xf32>
    %429 = arith.mulf %428, %427 : vector<8x128xf32>
    %430 = math.tanh %429 : vector<8x128xf32>
    %cst_150 = arith.constant 1.000000e+00 : f32
    %431 = vector.broadcast %cst_150 : f32 to vector<8x128xf32>
    %432 = arith.addf %430, %431 : vector<8x128xf32>
    %cst_151 = arith.constant 5.000000e-01 : f32
    %433 = vector.broadcast %cst_151 : f32 to vector<8x128xf32>
    %434 = arith.mulf %433, %432 : vector<8x128xf32>
    %435 = vector.extract_strided_slice %426 {offsets = [0, 128], sizes = [8, 128], strides = [1, 1]} : vector<8x512xf32> to vector<8x128xf32>
    %cst_152 = arith.constant 5.000000e-01 : f32
    %436 = vector.broadcast %cst_152 : f32 to vector<8x128xf32>
    %437 = arith.mulf %436, %435 : vector<8x128xf32>
    %438 = math.tanh %437 : vector<8x128xf32>
    %cst_153 = arith.constant 1.000000e+00 : f32
    %439 = vector.broadcast %cst_153 : f32 to vector<8x128xf32>
    %440 = arith.addf %438, %439 : vector<8x128xf32>
    %cst_154 = arith.constant 5.000000e-01 : f32
    %441 = vector.broadcast %cst_154 : f32 to vector<8x128xf32>
    %442 = arith.mulf %441, %440 : vector<8x128xf32>
    %443 = vector.extract_strided_slice %426 {offsets = [0, 256], sizes = [8, 128], strides = [1, 1]} : vector<8x512xf32> to vector<8x128xf32>
    %444 = math.tanh %443 : vector<8x128xf32>
    %445 = vector.extract_strided_slice %426 {offsets = [0, 384], sizes = [8, 128], strides = [1, 1]} : vector<8x512xf32> to vector<8x128xf32>
    %cst_155 = arith.constant 5.000000e-01 : f32
    %446 = vector.broadcast %cst_155 : f32 to vector<8x128xf32>
    %447 = arith.mulf %446, %445 : vector<8x128xf32>
    %448 = math.tanh %447 : vector<8x128xf32>
    %cst_156 = arith.constant 1.000000e+00 : f32
    %449 = vector.broadcast %cst_156 : f32 to vector<8x128xf32>
    %450 = arith.addf %448, %449 : vector<8x128xf32>
    %cst_157 = arith.constant 5.000000e-01 : f32
    %451 = vector.broadcast %cst_157 : f32 to vector<8x128xf32>
    %452 = arith.mulf %451, %450 : vector<8x128xf32>
    %453 = arith.mulf %442, %418 : vector<8x128xf32>
    %454 = arith.mulf %434, %444 : vector<8x128xf32>
    %455 = arith.addf %453, %454 : vector<8x128xf32>
    %456 = math.tanh %455 : vector<8x128xf32>
    %457 = arith.mulf %452, %456 : vector<8x128xf32>
    %c88_i32 = arith.constant 88 : i32
    %458 = arith.addi %1, %c88_i32 : i32
    %459 = arith.index_cast %458 : i32 to index
    %c0_158 = arith.constant 0 : index
    %460 = vector.load %arg7[%459, %c0_158] : memref<96x128xf32, #tpu.memory_space<vmem>>, vector<8x128xf32>
    tpu.vector_store %arg7[%459, %c0_158], %457 {strides = array<i32>} : memref<96x128xf32, #tpu.memory_space<vmem>>, vector<8x128xf32>,
    %c0_159 = arith.constant 0 : index
    %c0_160 = arith.constant 0 : index
    %461 = vector.load %arg10[%c0_159, %c0_160] : memref<8x128xf32, #tpu.memory_space<vmem>>, vector<8x128xf32>
    tpu.vector_store %arg10[%c0_159, %c0_160], %457 {strides = array<i32>} : memref<8x128xf32, #tpu.memory_space<vmem>>, vector<8x128xf32>,
    %c0_161 = arith.constant 0 : index
    %c0_162 = arith.constant 0 : index
    %462 = vector.load %arg11[%c0_161, %c0_162] : memref<8x128xf32, #tpu.memory_space<vmem>>, vector<8x128xf32>
    tpu.vector_store %arg11[%c0_161, %c0_162], %455 {strides = array<i32>} : memref<8x128xf32, #tpu.memory_space<vmem>>, vector<8x128xf32>,
    %c0_i32_163 = arith.constant 0 : i32
    %463 = arith.cmpi eq, %arg1, %c0_i32_163 : i32
    %464 = arith.extui %463 : i1 to i32
    %c0_i32_164 = arith.constant 0 : i32
    %465 = arith.cmpi ne, %464, %c0_i32_164 : i32
    scf.if %465 {
      %c0_165 = arith.constant 0 : index
      %c0_166 = arith.constant 0 : index
      %c0_167 = arith.constant 0 : index
      %466 = vector.load %arg8[%c0_165, %c0_166, %c0_167] : memref<1x8x128xf32, #tpu.memory_space<vmem>>, vector<1x8x128xf32>
      %467 = vector.shape_cast %466 : vector<1x8x128xf32> to vector<8x128xf32>
      %468 = vector.shape_cast %457 : vector<8x128xf32> to vector<1x8x128xf32>
      tpu.vector_store %arg8[%c0_165, %c0_166, %c0_167], %468 {strides = array<i32>} : memref<1x8x128xf32, #tpu.memory_space<vmem>>, vector<1x8x128xf32>,
      %c0_168 = arith.constant 0 : index
      %c0_169 = arith.constant 0 : index
      %c0_170 = arith.constant 0 : index
      %469 = vector.load %arg9[%c0_168, %c0_169, %c0_170] : memref<1x8x128xf32, #tpu.memory_space<vmem>>, vector<1x8x128xf32>
      %470 = vector.shape_cast %469 : vector<1x8x128xf32> to vector<8x128xf32>
      %471 = vector.shape_cast %455 : vector<8x128xf32> to vector<1x8x128xf32>
      tpu.vector_store %arg9[%c0_168, %c0_169, %c0_170], %471 {strides = array<i32>} : memref<1x8x128xf32, #tpu.memory_space<vmem>>, vector<1x8x128xf32>,
    } else {
    }
    return
  }
  func.func @transform_0(%arg0: i32, %arg1: i32) -> (i32, i32) {
    %c0_i32 = arith.constant 0 : i32
    %c0_i32_0 = arith.constant 0 : i32
    %c0_i32_1 = arith.constant 0 : i32
    return %c0_i32, %c0_i32_0 : i32, i32
  }
  func.func @transform_1(%arg0: i32, %arg1: i32) -> (i32, i32, i32) {
    %c0_i32 = arith.constant 0 : i32
    %c0_i32_0 = arith.constant 0 : i32
    %c0_i32_1 = arith.constant 0 : i32
    return %arg0, %c0_i32, %c0_i32_0 : i32, i32, i32
  }
  func.func @transform_2(%arg0: i32, %arg1: i32) -> (i32, i32, i32) {
    %c0_i32 = arith.constant 0 : i32
    %c0_i32_0 = arith.constant 0 : i32
    %c0_i32_1 = arith.constant 0 : i32
    return %arg0, %c0_i32, %c0_i32_0 : i32, i32, i32
  }
  func.func @transform_3(%arg0: i32, %arg1: i32) -> (i32, i32, i32) {
    %c0_i32 = arith.constant 0 : i32
    %c0_i32_0 = arith.constant 0 : i32
    %c0_i32_1 = arith.constant 0 : i32
    return %arg0, %c0_i32, %c0_i32_0 : i32, i32, i32
  }
  func.func @transform_4(%arg0: i32, %arg1: i32) -> (i32, i32, i32) {
    %c0_i32 = arith.constant 0 : i32
    %c0_i32_0 = arith.constant 0 : i32
    %c0_i32_1 = arith.constant 0 : i32
    return %arg0, %c0_i32, %c0_i32_0 : i32, i32, i32
  }
  func.func @transform_5(%arg0: i32, %arg1: i32) -> (i32, i32) {
    %c0_i32 = arith.constant 0 : i32
    %c0_i32_0 = arith.constant 0 : i32
    %c0_i32_1 = arith.constant 0 : i32
    return %c0_i32, %c0_i32_0 : i32, i32
  }
  func.func @transform_6(%arg0: i32, %arg1: i32) -> (i32, i32, i32) {
    %c0_i32 = arith.constant 0 : i32
    %c0_i32_0 = arith.constant 0 : i32
    %c0_i32_1 = arith.constant 0 : i32
    return %arg0, %c0_i32, %c0_i32_0 : i32, i32, i32
  }
  func.func @transform_7(%arg0: i32, %arg1: i32) -> (i32, i32, i32) {
    %c0_i32 = arith.constant 0 : i32
    %c0_i32_0 = arith.constant 0 : i32
    %c0_i32_1 = arith.constant 0 : i32
    return %arg0, %c0_i32, %c0_i32_0 : i32, i32, i32
  }
}

</mosaic_0001>

<llo_original>
// kernel: tpu_custom_call.1
$region0: #{tpu_custom_call.1}
  #allocation0 [shape = 'u32[]', space=smem, size = 0x4, offset = 0x4, fixed_abs, tag = 'smem constant byte address 0x4 - core index']
  #allocation1 [shape = 'u32[144,128]{1,0:T(1,128)}', space=vmem, size = 0x12000, scoped, tag = 'internal scratch']
  #allocation2 [shape = 'f32[8,128]{1,0:T(8,128)}', space=vmem, size = 0x1000, scoped, tag = 'scratch operand']
  #allocation3 [shape = 'f32[8,128]{1,0:T(8,128)}', space=vmem, size = 0x1000, scoped, tag = 'scratch operand']
  #allocation4 [shape = 'f32[96,512]{1,0:T(8,128)}', space=vmem, size = 0x30000, scoped, tag = 'scratch operand']
  %s0 = inlined_call_operand.hbm [shape: f32[96,128], index: 0, kind: input, shape index: {}]
  %s1 = inlined_call_operand.hbm [shape: f32[2,128,512], index: 1, kind: input, shape index: {}]
  %s2 = inlined_call_operand.hbm [shape: f32[2,128,512], index: 2, kind: input, shape index: {}]
  %s3 = inlined_call_operand.hbm [shape: f32[2,8,128], index: 3, kind: input, shape index: {}]
  %s4 = inlined_call_operand.hbm [shape: f32[2,8,128], index: 4, kind: input, shape index: {}]
  %s5 = inlined_call_operand.hbm [shape: f32[96,128], index: 5, kind: output, shape index: {0}]
  %s6 = inlined_call_operand.hbm [shape: f32[2,8,128], index: 6, kind: output, shape index: {1}]
  %s7 = inlined_call_operand.hbm [shape: f32[2,8,128], index: 7, kind: output, shape index: {2}]
  %8 = xla_tuple %s5, %s6, %s7
  %s9 = sld [smem:[#allocation0]]
  $region105: #{tpu_custom_call.1} parent=0
    _
  %s11 = ssub.s32 1, %s9
  %s12 = scalar_select 0, %s11, %s9
  $region1: #{tpu_custom_call.1} parent=0
    #allocation5 [shape = 'u8[49152]{0}', space=vmem, size = 0xc000, scoped, tag = 'input window, operand 0, single buffered']
    #allocation6 [shape = 's32[2]{0}', space=sflag, size = 0x8, scoped, tag = 'scoped memory for tpu_custom_call.1']
    #allocation7 [shape = 's32[2]{0}', space=sflag, size = 0x8, scoped, tag = 'scoped memory for tpu_custom_call.1']
    #allocation8 [shape = 'u8[524288]{0}', space=vmem, size = 0x80000, scoped, tag = 'input window, operand 1']
    #allocation9 [shape = 's32[2]{0}', space=sflag, size = 0x8, scoped, tag = 'scoped memory for tpu_custom_call.1']
    #allocation10 [shape = 'u8[524288]{0}', space=vmem, size = 0x80000, scoped, tag = 'input window, operand 2']
    #allocation11 [shape = 'u8[8192]{0}', space=vmem, size = 0x2000, scoped, tag = 'input window, operand 3']
    #allocation12 [shape = 's32[2]{0}', space=sflag, size = 0x8, scoped, tag = 'scoped memory for tpu_custom_call.1']
    #allocation13 [shape = 'u8[8192]{0}', space=vmem, size = 0x2000, scoped, tag = 'input window, operand 4']
    #allocation14 [shape = 'u8[49152]{0}', space=vmem, size = 0xc000, scoped, tag = 'output window, operand 0, single buffered']
    #allocation15 [shape = 'u8[8192]{0}', space=vmem, size = 0x2000, scoped, tag = 'output window, operand 1']
    #allocation16 [shape = 's32[2]{0}', space=sflag, size = 0x8, scoped, tag = 'scoped memory for tpu_custom_call.1']
    #allocation17 [shape = 'u8[8192]{0}', space=vmem, size = 0x2000, scoped, tag = 'output window, operand 2']
    %13 = vsyncpa [#allocation6], 0
    %14 = vsyncpa [#allocation9], 0
    %s15 = scalar_lea.sflag [#allocation9], 1
    %16 = vsyncpa %s15, 0
    %17 = vsyncpa [#allocation12], 0
    %s18 = scalar_lea.sflag [#allocation12], 1
    %19 = vsyncpa %s18, 0
    %20 = vsyncpa [#allocation7], 0
    %21 = vsyncpa [#allocation16], 0
    %s22 = scalar_lea.sflag [#allocation16], 1
    %23 = vsyncpa %s22, 0
    loop: start=0, step=1, limit=4
    $region2: #{tpu_custom_call.1} parent=1 // loop_pre_header
      _
    $region3: #{tpu_custom_call.1} parent=1 // loop_header
      %s25 = sphi 0, %s29
      %p26 = scmp.ge.s32.totalorder %s25, 4
      %s32 = sphi 0, %s44
      %s33 = sphi 0, %s40
      %s34 = sphi 0, %s32
      %s35 = sphi 0, %s33
      %s36 = sphi 0, %s34
      %s37 = sphi 0, %s35
      %s45 = sphi 0, %s45
      %s47 = sphi 0, %s45
      %s48 = sphi 0, %s47
      %s62 = sphi 0, %s48
      %s68 = sphi 0, %s70
      %s71 = sphi 0, %s68
      %s72 = sphi 0, %s71
      %s88 = sphi 0, %s72
      %s94 = sphi 0, %s96
      %s97 = sphi 0, %s94
      %s98 = sphi 0, %s97
      %s114 = sphi 0, %s98
      %s120 = sphi 0, %s122
      %s123 = sphi 0, %s120
      %s124 = sphi 0, %s123
      %s140 = sphi 0, %s124
      %s146 = sphi 0, %s148
      %s149 = sphi 0, %s146
      %s150 = sphi 0, %s149
      %s166 = sphi 0, %s150
      %s170 = sphi 0, %s170
      %s172 = sphi 0, %s170
      %s173 = sphi 0, %s172
      %s187 = sphi 0, %s173
      %s193 = sphi 0, %s195
      %s196 = sphi 0, %s193
      %s197 = sphi 0, %s196
      %s213 = sphi 0, %s197
      %s219 = sphi 0, %s221
      %s222 = sphi 0, %s219
      %s223 = sphi 0, %s222
      %s239 = sphi 0, %s223
    $region4: #{tpu_custom_call.1} parent=1 // loop_header_branch
      %28 = sbr.rel (%p26) target = $region8
    $region5: #{tpu_custom_call.1} parent=1 // loop_body
      %s30 = ssub.s32 %s25, 1
      %s31 = ssub.s32 %s25, 2
      %s38 = sadd.s32 1, %s33
      %p39 = scmp.ge.s32.totalorder %s38, 1
      %s40 = scalar_select %p39, 0, %s38
      %s41 = sadd.s32 1, %s32
      %s42 = scalar_select %p39, %s41, %s32
      %p43 = scmp.ge.s32.totalorder %s42, 2
      %s44 = scalar_select %p43, 0, %s42
      %s46 = sadd.s32 %s45, 1
      %p49 = scmp.eq.s32.totalorder %s25, 1
      %p50 = scmp.ne.s32.totalorder %s45, %s47
      %p51 = scmp.eq.s32.totalorder %s25, 0
      %p52 = por %p50, %p51
      %p53 = scmp.ne.s32.totalorder %s45, %s47
      %p54 = scmp.eq.s32.totalorder %s30, 1
      %p55 = por %p53, %p54
      %p56 = scmp.ne.s32.totalorder %s47, %s48
      %p57 = scmp.eq.s32.totalorder %s30, 0
      %p58 = por %p56, %p57
      %p59 = scmp.ne.s32.totalorder %s47, %s48
      %p60 = scmp.eq.s32.totalorder %s31, 1
      %p61 = por %p59, %p60
      %p63 = scmp.ne.s32.totalorder %s48, %s62
      %p64 = scmp.eq.s32.totalorder %s31, 0
      %p65 = por %p63, %p64
      %s66 = ssub.s32 %s32, %s44
      %p67 = scmp.eq.s32.totalorder %s66, 0
      %s69 = sadd.s32 %s68, 1
      %s70 = scalar_select %p67, %s68, %s69
      %p73 = pneg %p67
      %p74 = scmp.eq.s32.totalorder %s25, 1
      %p75 = por %p73, %p74
      %p76 = scmp.ne.s32.totalorder %s68, %s71
      %p77 = scmp.eq.s32.totalorder %s25, 0
      %p78 = por %p76, %p77
      %p79 = scmp.ne.s32.totalorder %s68, %s71
      %p80 = scmp.eq.s32.totalorder %s30, 1
      %p81 = por %p79, %p80
      %p82 = scmp.ne.s32.totalorder %s71, %s72
      %p83 = scmp.eq.s32.totalorder %s30, 0
      %p84 = por %p82, %p83
      %p85 = scmp.ne.s32.totalorder %s71, %s72
      %p86 = scmp.eq.s32.totalorder %s31, 1
      %p87 = por %p85, %p86
      %p89 = scmp.ne.s32.totalorder %s72, %s88
      %p90 = scmp.eq.s32.totalorder %s31, 0
      %p91 = por %p89, %p90
      %s92 = ssub.s32 %s32, %s44
      %p93 = scmp.eq.s32.totalorder %s92, 0
      %s95 = sadd.s32 %s94, 1
      %s96 = scalar_select %p93, %s94, %s95
      %p99 = pneg %p93
      %p100 = scmp.eq.s32.totalorder %s25, 1
      %p101 = por %p99, %p100
      %p102 = scmp.ne.s32.totalorder %s94, %s97
      %p103 = scmp.eq.s32.totalorder %s25, 0
      %p104 = por %p102, %p103
      %p105 = scmp.ne.s32.totalorder %s94, %s97
      %p106 = scmp.eq.s32.totalorder %s30, 1
      %p107 = por %p105, %p106
      %p108 = scmp.ne.s32.totalorder %s97, %s98
      %p109 = scmp.eq.s32.totalorder %s30, 0
      %p110 = por %p108, %p109
      %p111 = scmp.ne.s32.totalorder %s97, %s98
      %p112 = scmp.eq.s32.totalorder %s31, 1
      %p113 = por %p111, %p112
      %p115 = scmp.ne.s32.totalorder %s98, %s114
      %p116 = scmp.eq.s32.totalorder %s31, 0
      %p117 = por %p115, %p116
      %s118 = ssub.s32 %s32, %s44
      %p119 = scmp.eq.s32.totalorder %s118, 0
      %s121 = sadd.s32 %s120, 1
      %s122 = scalar_select %p119, %s120, %s121
      %p125 = pneg %p119
      %p126 = scmp.eq.s32.totalorder %s25, 1
      %p127 = por %p125, %p126
      %p128 = scmp.ne.s32.totalorder %s120, %s123
      %p129 = scmp.eq.s32.totalorder %s25, 0
      %p130 = por %p128, %p129
      %p131 = scmp.ne.s32.totalorder %s120, %s123
      %p132 = scmp.eq.s32.totalorder %s30, 1
      %p133 = por %p131, %p132
      %p134 = scmp.ne.s32.totalorder %s123, %s124
      %p135 = scmp.eq.s32.totalorder %s30, 0
      %p136 = por %p134, %p135
      %p137 = scmp.ne.s32.totalorder %s123, %s124
      %p138 = scmp.eq.s32.totalorder %s31, 1
      %p139 = por %p137, %p138
      %p141 = scmp.ne.s32.totalorder %s124, %s140
      %p142 = scmp.eq.s32.totalorder %s31, 0
      %p143 = por %p141, %p142
      %s144 = ssub.s32 %s32, %s44
      %p145 = scmp.eq.s32.totalorder %s144, 0
      %s147 = sadd.s32 %s146, 1
      %s148 = scalar_select %p145, %s146, %s147
      %p151 = pneg %p145
      %p152 = scmp.eq.s32.totalorder %s25, 1
      %p153 = por %p151, %p152
      %p154 = scmp.ne.s32.totalorder %s146, %s149
      %p155 = scmp.eq.s32.totalorder %s25, 0
      %p156 = por %p154, %p155
      %p157 = scmp.ne.s32.totalorder %s146, %s149
      %p158 = scmp.eq.s32.totalorder %s30, 1
      %p159 = por %p157, %p158
      %p160 = scmp.ne.s32.totalorder %s149, %s150
      %p161 = scmp.eq.s32.totalorder %s30, 0
      %p162 = por %p160, %p161
      %p163 = scmp.ne.s32.totalorder %s149, %s150
      %p164 = scmp.eq.s32.totalorder %s31, 1
      %p165 = por %p163, %p164
      %p167 = scmp.ne.s32.totalorder %s150, %s166
      %p168 = scmp.eq.s32.totalorder %s31, 0
      %p169 = por %p167, %p168
      %s171 = sadd.s32 %s170, 1
      %p174 = scmp.eq.s32.totalorder %s25, 1
      %p175 = scmp.ne.s32.totalorder %s170, %s172
      %p176 = scmp.eq.s32.totalorder %s25, 0
      %p177 = por %p175, %p176
      %p178 = scmp.ne.s32.totalorder %s170, %s172
      %p179 = scmp.eq.s32.totalorder %s30, 1
      %p180 = por %p178, %p179
      %p181 = scmp.ne.s32.totalorder %s172, %s173
      %p182 = scmp.eq.s32.totalorder %s30, 0
      %p183 = por %p181, %p182
      %p184 = scmp.ne.s32.totalorder %s172, %s173
      %p185 = scmp.eq.s32.totalorder %s31, 1
      %p186 = por %p184, %p185
      %p188 = scmp.ne.s32.totalorder %s173, %s187
      %p189 = scmp.eq.s32.totalorder %s31, 0
      %p190 = por %p188, %p189
      %s191 = ssub.s32 %s32, %s44
      %p192 = scmp.eq.s32.totalorder %s191, 0
      %s194 = sadd.s32 %s193, 1
      %s195 = scalar_select %p192, %s193, %s194
      %p198 = pneg %p192
      %p199 = scmp.eq.s32.totalorder %s25, 1
      %p200 = por %p198, %p199
      %p201 = scmp.ne.s32.totalorder %s193, %s196
      %p202 = scmp.eq.s32.totalorder %s25, 0
      %p203 = por %p201, %p202
      %p204 = scmp.ne.s32.totalorder %s193, %s196
      %p205 = scmp.eq.s32.totalorder %s30, 1
      %p206 = por %p204, %p205
      %p207 = scmp.ne.s32.totalorder %s196, %s197
      %p208 = scmp.eq.s32.totalorder %s30, 0
      %p209 = por %p207, %p208
      %p210 = scmp.ne.s32.totalorder %s196, %s197
      %p211 = scmp.eq.s32.totalorder %s31, 1
      %p212 = por %p210, %p211
      %p214 = scmp.ne.s32.totalorder %s197, %s213
      %p215 = scmp.eq.s32.totalorder %s31, 0
      %p216 = por %p214, %p215
      %s217 = ssub.s32 %s32, %s44
      %p218 = scmp.eq.s32.totalorder %s217, 0
      %s220 = sadd.s32 %s219, 1
      %s221 = scalar_select %p218, %s219, %s220
      %p224 = pneg %p218
      %p225 = scmp.eq.s32.totalorder %s25, 1
      %p226 = por %p224, %p225
      %p227 = scmp.ne.s32.totalorder %s219, %s222
      %p228 = scmp.eq.s32.totalorder %s25, 0
      %p229 = por %p227, %p228
      %p230 = scmp.ne.s32.totalorder %s219, %s222
      %p231 = scmp.eq.s32.totalorder %s30, 1
      %p232 = por %p230, %p231
      %p233 = scmp.ne.s32.totalorder %s222, %s223
      %p234 = scmp.eq.s32.totalorder %s30, 0
      %p235 = por %p233, %p234
      %p236 = scmp.ne.s32.totalorder %s222, %s223
      %p237 = scmp.eq.s32.totalorder %s31, 1
      %p238 = por %p236, %p237
      %p240 = scmp.ne.s32.totalorder %s223, %s239
      %p241 = scmp.eq.s32.totalorder %s31, 0
      %p242 = por %p240, %p241
      %p243 = scmp.le.s32.totalorder 1, %s25
      %p244 = scmp.lt.s32.totalorder %s25, 3
      %p245 = pnand %p243, %p244
      %p246 = pneg %p245
      // Predicated region
      $region9: #{tpu_custom_call.1} parent=5 // pred_check
        _
      $region10: #{tpu_custom_call.1} parent=5 // pred_check_branch
        %248 = sbr.rel (%p245) target = $region12
      $region11: #{tpu_custom_call.1} parent=5 // pred_region
        %s249 = ssub.s32 %s25, 1
        // Predicated region
        $region13: #{tpu_custom_call.1} parent=11 // pred_check
          %p250 = pneg %p58
        $region14: #{tpu_custom_call.1} parent=11 // pred_check_branch
          %252 = sbr.rel (%p250) target = $region16
        $region15: #{tpu_custom_call.1} parent=11 // pred_region
          %s254 = ssub.s32 1536, 1536
          %255 = vsyncadd [#allocation6], %s254
          %s256 = sshll.u32 [#allocation5], 4
          %s257 = int_to_ptr.vmem [resolvable:$true] %s256
          %262 = dma.hbm_to_vmem [thread:$0]  %s0, 1536, %s257, [#allocation6], 128, 128, 8
        $region16: #{tpu_custom_call.1} parent=11 // pred_fallthru
          _
      $region12: #{tpu_custom_call.1} parent=5 // pred_fallthru
        _
      %p263 = scmp.lt.s32.totalorder %s25, 2
      // Predicated region
      $region17: #{tpu_custom_call.1} parent=5 // pred_check
        %p264 = pneg %p263
      $region18: #{tpu_custom_call.1} parent=5 // pred_check_branch
        %266 = sbr.rel (%p264) target = $region20
      $region19: #{tpu_custom_call.1} parent=5 // pred_region
        // Predicated region
        $region21: #{tpu_custom_call.1} parent=19 // pred_check
          %p267 = pneg %p78
        $region22: #{tpu_custom_call.1} parent=19 // pred_check_branch
          %269 = sbr.rel (%p267) target = $region24
        $region23: #{tpu_custom_call.1} parent=19 // pred_region
          %s270 = sand.u32 %s25, 1
          %s271 = scalar_lea.sflag [#allocation9], %s270
          %s272 = sand.u32 %s68, 1
          %s273 = smul.addr %s272, 512
          %s274 = scalar_lea.vmem [#allocation8], %s273
          %s276 = ssub.s32 8192, 8192
          %277 = vsyncadd %s271, %s276
          %s278 = smul.addr %s32, 64
          %s279 = smul.addr %s278, 128
          %s280 = scalar_lea.hbm %s1, %s279
          %s281 = sshll.u32 %s274, 4
          %s282 = int_to_ptr.vmem [resolvable:$true] %s281
          %287 = dma.hbm_to_vmem [thread:$0]  %s280, 8192, %s282, %s271, 512, 512, 32
        $region24: #{tpu_custom_call.1} parent=19 // pred_fallthru
          _
        // Predicated region
        $region25: #{tpu_custom_call.1} parent=19 // pred_check
          %p288 = pneg %p104
        $region26: #{tpu_custom_call.1} parent=19 // pred_check_branch
          %290 = sbr.rel (%p288) target = $region28
        $region27: #{tpu_custom_call.1} parent=19 // pred_region
          %s291 = sand.u32 %s25, 1
          %s292 = scalar_lea.sflag [#allocation9], %s291
          %s293 = sand.u32 %s94, 1
          %s294 = smul.addr %s293, 512
          %s295 = scalar_lea.vmem [#allocation10], %s294
          %s297 = ssub.s32 8192, 8192
          %298 = vsyncadd %s292, %s297
          %s299 = smul.addr %s32, 64
          %s300 = smul.addr %s299, 128
          %s301 = scalar_lea.hbm %s2, %s300
          %s302 = sshll.u32 %s295, 4
          %s303 = int_to_ptr.vmem [resolvable:$true] %s302
          %308 = dma.hbm_to_vmem [thread:$0]  %s301, 8192, %s303, %s292, 512, 512, 32
        $region28: #{tpu_custom_call.1} parent=19 // pred_fallthru
          _
        // Predicated region
        $region29: #{tpu_custom_call.1} parent=19 // pred_check
          %p309 = pneg %p130
        $region30: #{tpu_custom_call.1} parent=19 // pred_check_branch
          %311 = sbr.rel (%p309) target = $region32
        $region31: #{tpu_custom_call.1} parent=19 // pred_region
          %s312 = sand.u32 %s25, 1
          %s313 = scalar_lea.sflag [#allocation12], %s312
          %s314 = sand.u32 %s120, 1
          %s315 = smul.addr %s314, 8
          %s316 = scalar_lea.vmem [#allocation11], %s315
          %s318 = ssub.s32 128, 128
          %319 = vsyncadd %s313, %s318
          %s320 = smul.addr %s32, 128
          %s321 = scalar_lea.hbm %s3, %s320
          %s323 = sshll.u32 %s316, 4
          %s324 = int_to_ptr.vmem [resolvable:$true] %s323
          %326 = dma.hbm_to_vmem [thread:$0]  %s321, 128, %s324, %s313
        $region32: #{tpu_custom_call.1} parent=19 // pred_fallthru
          _
        // Predicated region
        $region33: #{tpu_custom_call.1} parent=19 // pred_check
          %p327 = pneg %p156
        $region34: #{tpu_custom_call.1} parent=19 // pred_check_branch
          %329 = sbr.rel (%p327) target = $region36
        $region35: #{tpu_custom_call.1} parent=19 // pred_region
          %s330 = sand.u32 %s25, 1
          %s331 = scalar_lea.sflag [#allocation12], %s330
          %s332 = sand.u32 %s146, 1
          %s333 = smul.addr %s332, 8
          %s334 = scalar_lea.vmem [#allocation13], %s333
          %s336 = ssub.s32 128, 128
          %337 = vsyncadd %s331, %s336
          %s338 = smul.addr %s32, 128
          %s339 = scalar_lea.hbm %s4, %s338
          %s341 = sshll.u32 %s334, 4
          %s342 = int_to_ptr.vmem [resolvable:$true] %s341
          %344 = dma.hbm_to_vmem [thread:$0]  %s339, 128, %s342, %s331
        $region36: #{tpu_custom_call.1} parent=19 // pred_fallthru
          _
      $region20: #{tpu_custom_call.1} parent=5 // pred_fallthru
        _
      %p345 = scmp.le.s32.totalorder 1, %s25
      %p346 = scmp.lt.s32.totalorder %s25, 3
      %p347 = pnand %p345, %p346
      %p348 = pneg %p347
      // Predicated region
      $region37: #{tpu_custom_call.1} parent=5 // pred_check
        _
      $region38: #{tpu_custom_call.1} parent=5 // pred_check_branch
        %350 = sbr.rel (%p347) target = $region40
      $region39: #{tpu_custom_call.1} parent=5 // pred_region
        %s351 = ssub.s32 %s25, 1
        // Predicated region
        $region41: #{tpu_custom_call.1} parent=39 // pred_check
          %p352 = pneg %p58
        $region42: #{tpu_custom_call.1} parent=39 // pred_check_branch
          %354 = sbr.rel (%p352) target = $region44
        $region43: #{tpu_custom_call.1} parent=39 // pred_region
          %355 = dma.done [#allocation6], 1536
        $region44: #{tpu_custom_call.1} parent=39 // pred_fallthru
          _
        %s356 = sand.u32 %s30, 1
        %s357 = scalar_lea.sflag [#allocation9], %s356
        %s358 = sand.u32 %s71, 1
        %s359 = smul.addr %s358, 512
        %s360 = scalar_lea.vmem [#allocation8], %s359
        // Predicated region
        $region45: #{tpu_custom_call.1} parent=39 // pred_check
          %p361 = pneg %p84
        $region46: #{tpu_custom_call.1} parent=39 // pred_check_branch
          %363 = sbr.rel (%p361) target = $region48
        $region47: #{tpu_custom_call.1} parent=39 // pred_region
          %364 = dma.done %s357, 8192
        $region48: #{tpu_custom_call.1} parent=39 // pred_fallthru
          _
        %s365 = sand.u32 %s30, 1
        %s366 = scalar_lea.sflag [#allocation9], %s365
        %s367 = sand.u32 %s97, 1
        %s368 = smul.addr %s367, 512
        %s369 = scalar_lea.vmem [#allocation10], %s368
        // Predicated region
        $region49: #{tpu_custom_call.1} parent=39 // pred_check
          %p370 = pneg %p110
        $region50: #{tpu_custom_call.1} parent=39 // pred_check_branch
          %372 = sbr.rel (%p370) target = $region52
        $region51: #{tpu_custom_call.1} parent=39 // pred_region
          %373 = dma.done %s366, 8192
        $region52: #{tpu_custom_call.1} parent=39 // pred_fallthru
          _
        %s374 = sand.u32 %s30, 1
        %s375 = scalar_lea.sflag [#allocation12], %s374
        %s376 = sand.u32 %s123, 1
        %s377 = smul.addr %s376, 8
        %s378 = scalar_lea.vmem [#allocation11], %s377
        // Predicated region
        $region53: #{tpu_custom_call.1} parent=39 // pred_check
          %p379 = pneg %p136
        $region54: #{tpu_custom_call.1} parent=39 // pred_check_branch
          %381 = sbr.rel (%p379) target = $region56
        $region55: #{tpu_custom_call.1} parent=39 // pred_region
          %382 = dma.done %s375, 128
        $region56: #{tpu_custom_call.1} parent=39 // pred_fallthru
          _
        %s383 = sand.u32 %s30, 1
        %s384 = scalar_lea.sflag [#allocation12], %s383
        %s385 = sand.u32 %s149, 1
        %s386 = smul.addr %s385, 8
        %s387 = scalar_lea.vmem [#allocation13], %s386
        // Predicated region
        $region57: #{tpu_custom_call.1} parent=39 // pred_check
          %p388 = pneg %p162
        $region58: #{tpu_custom_call.1} parent=39 // pred_check_branch
          %390 = sbr.rel (%p388) target = $region60
        $region59: #{tpu_custom_call.1} parent=39 // pred_region
          %391 = dma.done %s384, 128
        $region60: #{tpu_custom_call.1} parent=39 // pred_fallthru
          _
        %p392 = pneg %p58
        %p393 = pneg %p55
        %s394 = sand.u32 %s30, 1
        %s395 = scalar_lea.sflag [#allocation9], %s394
        %s396 = sand.u32 %s71, 1
        %s397 = smul.addr %s396, 512
        %s398 = scalar_lea.vmem [#allocation8], %s397
        %p399 = pneg %p84
        %p400 = pneg %p81
        %s401 = sand.u32 %s30, 1
        %s402 = scalar_lea.sflag [#allocation9], %s401
        %s403 = sand.u32 %s97, 1
        %s404 = smul.addr %s403, 512
        %s405 = scalar_lea.vmem [#allocation10], %s404
        %p406 = pneg %p110
        %p407 = pneg %p107
        %s408 = sand.u32 %s30, 1
        %s409 = scalar_lea.sflag [#allocation12], %s408
        %s410 = sand.u32 %s123, 1
        %s411 = smul.addr %s410, 8
        %s412 = scalar_lea.vmem [#allocation11], %s411
        %p413 = pneg %p136
        %p414 = pneg %p133
        %s415 = sand.u32 %s30, 1
        %s416 = scalar_lea.sflag [#allocation12], %s415
        %s417 = sand.u32 %s149, 1
        %s418 = smul.addr %s417, 8
        %s419 = scalar_lea.vmem [#allocation13], %s418
        %p420 = pneg %p162
        %p421 = pneg %p159
        %p422 = pneg %p183
        %p423 = pneg %p180
        %p424 = pneg %p209
        %p425 = pneg %p206
        %s426 = sand.u32 %s30, 1
        %s427 = scalar_lea.sflag [#allocation16], %s426
        %s428 = sand.u32 %s196, 1
        %s429 = smul.addr %s428, 8
        %s430 = scalar_lea.vmem [#allocation15], %s429
        %p431 = pneg %p235
        %p432 = pneg %p232
        %s433 = sand.u32 %s30, 1
        %s434 = scalar_lea.sflag [#allocation16], %s433
        %s435 = sand.u32 %s222, 1
        %s436 = smul.addr %s435, 8
        %s437 = scalar_lea.vmem [#allocation17], %s436
        %s438 = smul.u32 %s35, 96
        %v439 = vld [vmem:[%s360] sm:$0xff]
        %v440 = vld [vmem:[%s360 + $0x8] sm:$0xff]
        %v441 = vld [vmem:[%s360 + $0x10] sm:$0xff]
        %v442 = vld [vmem:[%s360 + $0x18] sm:$0xff]
        %v443 = vld [vmem:[%s360 + $0x20] sm:$0xff]
        %v444 = vld [vmem:[%s360 + $0x28] sm:$0xff]
        %v445 = vld [vmem:[%s360 + $0x30] sm:$0xff]
        %v446 = vld [vmem:[%s360 + $0x38] sm:$0xff]
        %v447 = vld [vmem:[%s360 + $0x40] sm:$0xff]
        %v448 = vld [vmem:[%s360 + $0x48] sm:$0xff]
        %v449 = vld [vmem:[%s360 + $0x50] sm:$0xff]
        %v450 = vld [vmem:[%s360 + $0x58] sm:$0xff]
        %v451 = vld [vmem:[%s360 + $0x60] sm:$0xff]
        %v452 = vld [vmem:[%s360 + $0x68] sm:$0xff]
        %v453 = vld [vmem:[%s360 + $0x70] sm:$0xff]
        %v454 = vld [vmem:[%s360 + $0x78] sm:$0xff]
        %v455 = vld [vmem:[%s360 + $0x80] sm:$0xff]
        %v456 = vld [vmem:[%s360 + $0x88] sm:$0xff]
        %v457 = vld [vmem:[%s360 + $0x90] sm:$0xff]
        %v458 = vld [vmem:[%s360 + $0x98] sm:$0xff]
        %v459 = vld [vmem:[%s360 + $0xa0] sm:$0xff]
        %v460 = vld [vmem:[%s360 + $0xa8] sm:$0xff]
        %v461 = vld [vmem:[%s360 + $0xb0] sm:$0xff]
        %v462 = vld [vmem:[%s360 + $0xb8] sm:$0xff]
        %v463 = vld [vmem:[%s360 + $0xc0] sm:$0xff]
        %v464 = vld [vmem:[%s360 + $0xc8] sm:$0xff]
        %v465 = vld [vmem:[%s360 + $0xd0] sm:$0xff]
        %v466 = vld [vmem:[%s360 + $0xd8] sm:$0xff]
        %v467 = vld [vmem:[%s360 + $0xe0] sm:$0xff]
        %v468 = vld [vmem:[%s360 + $0xe8] sm:$0xff]
        %v469 = vld [vmem:[%s360 + $0xf0] sm:$0xff]
        %v470 = vld [vmem:[%s360 + $0xf8] sm:$0xff]
        %v471 = vld [vmem:[%s360 + $0x100] sm:$0xff]
        %v472 = vld [vmem:[%s360 + $0x108] sm:$0xff]
        %v473 = vld [vmem:[%s360 + $0x110] sm:$0xff]
        %v474 = vld [vmem:[%s360 + $0x118] sm:$0xff]
        %v475 = vld [vmem:[%s360 + $0x120] sm:$0xff]
        %v476 = vld [vmem:[%s360 + $0x128] sm:$0xff]
        %v477 = vld [vmem:[%s360 + $0x130] sm:$0xff]
        %v478 = vld [vmem:[%s360 + $0x138] sm:$0xff]
        %v479 = vld [vmem:[%s360 + $0x140] sm:$0xff]
        %v480 = vld [vmem:[%s360 + $0x148] sm:$0xff]
        %v481 = vld [vmem:[%s360 + $0x150] sm:$0xff]
        %v482 = vld [vmem:[%s360 + $0x158] sm:$0xff]
        %v483 = vld [vmem:[%s360 + $0x160] sm:$0xff]
        %v484 = vld [vmem:[%s360 + $0x168] sm:$0xff]
        %v485 = vld [vmem:[%s360 + $0x170] sm:$0xff]
        %v486 = vld [vmem:[%s360 + $0x178] sm:$0xff]
        %v487 = vld [vmem:[%s360 + $0x180] sm:$0xff]
        %v488 = vld [vmem:[%s360 + $0x188] sm:$0xff]
        %v489 = vld [vmem:[%s360 + $0x190] sm:$0xff]
        %v490 = vld [vmem:[%s360 + $0x198] sm:$0xff]
        %v491 = vld [vmem:[%s360 + $0x1a0] sm:$0xff]
        %v492 = vld [vmem:[%s360 + $0x1a8] sm:$0xff]
        %v493 = vld [vmem:[%s360 + $0x1b0] sm:$0xff]
        %v494 = vld [vmem:[%s360 + $0x1b8] sm:$0xff]
        %v495 = vld [vmem:[%s360 + $0x1c0] sm:$0xff]
        %v496 = vld [vmem:[%s360 + $0x1c8] sm:$0xff]
        %v497 = vld [vmem:[%s360 + $0x1d0] sm:$0xff]
        %v498 = vld [vmem:[%s360 + $0x1d8] sm:$0xff]
        %v499 = vld [vmem:[%s360 + $0x1e0] sm:$0xff]
        %v500 = vld [vmem:[%s360 + $0x1e8] sm:$0xff]
        %v501 = vld [vmem:[%s360 + $0x1f0] sm:$0xff]
        %v502 = vld [vmem:[%s360 + $0x1f8] sm:$0xff]
        %p503 = scmp.eq.s32.totalorder %s34, 0
        // Predicated region
        $region61: #{tpu_custom_call.1} parent=39 // pred_check
          %p504 = pneg %p503
        $region62: #{tpu_custom_call.1} parent=39 // pred_check_branch
          %506 = sbr.rel (%p504) target = $region64
        $region63: #{tpu_custom_call.1} parent=39 // pred_region
          %s507 = scalar_lea.vmem [#allocation5], %s438
          %v508 = vld [vmem:[%s507] sm:$0xff]
          %v509 = vld [vmem:[%s507 + $0x8] sm:$0xff]
          %v510 = vld [vmem:[%s507 + $0x10] sm:$0xff]
          %v511 = vld [vmem:[%s507 + $0x18] sm:$0xff]
          %v512 = vld [vmem:[%s507 + $0x20] sm:$0xff]
          %v513 = vld [vmem:[%s507 + $0x28] sm:$0xff]
          %v514 = vld [vmem:[%s507 + $0x30] sm:$0xff]
          %v515 = vld [vmem:[%s507 + $0x38] sm:$0xff]
          %v516 = vld [vmem:[%s507 + $0x40] sm:$0xff]
          %v517 = vld [vmem:[%s507 + $0x48] sm:$0xff]
          %v518 = vld [vmem:[%s507 + $0x50] sm:$0xff]
          %v519 = vld [vmem:[%s507 + $0x58] sm:$0xff]
          %520 = vmatprep.subr.mxu0 %v500
          %521 = vmatpush1.msra.mxu0 %v499
          %522 = vmatprep.subr.mxu0 %v496
          %523 = vmatpush1.msra.mxu0 %v495
          %524 = vmatprep.subr.mxu0 %v492
          %525 = vmatpush1.msra.mxu0 %v491
          %526 = vmatprep.subr.mxu0 %v488
          %527 = vmatpush1.msra.mxu0 %v487
          %528 = vmatprep.subr.mxu0 %v484
          %529 = vmatpush1.msra.mxu0 %v483
          %530 = vmatprep.subr.mxu0 %v480
          %531 = vmatpush1.msra.mxu0 %v479
          %532 = vmatprep.subr.mxu0 %v476
          %533 = vmatpush1.msra.mxu0 %v475
          %534 = vmatprep.subr.mxu0 %v472
          %535 = vmatpush1.msra.mxu0 %v471
          %536 = vmatprep.subr.mxu0 %v468
          %537 = vmatpush1.msra.mxu0 %v467
          %538 = vmatprep.subr.mxu0 %v464
          %539 = vmatpush1.msra.mxu0 %v463
          %540 = vmatprep.subr.mxu0 %v460
          %541 = vmatpush1.msra.mxu0 %v459
          %542 = vmatprep.subr.mxu0 %v456
          %543 = vmatpush1.msra.mxu0 %v455
          %544 = vmatprep.subr.mxu0 %v452
          %545 = vmatpush1.msra.mxu0 %v451
          %546 = vmatprep.subr.mxu0 %v448
          %547 = vmatpush1.msra.mxu0 %v447
          %548 = vmatprep.subr.mxu0 %v444
          %549 = vmatpush1.msra.mxu0 %v443
          %550 = vmatprep.subr.mxu0 %v440
          %551 = vmatpush1.msra.mxu0 %v439
          %552 = vmatprep.subr.mxu0 0.0
          %553 = vmatpush2.msra.mxu0 0.0
          %554 = vmatprep.subr.mxu0 0.0
          %555 = vmatpush2.msra.mxu0 0.0
          %556 = vmatprep.subr.mxu0 0.0
          %557 = vmatpush2.msra.mxu0 0.0
          %558 = vmatprep.subr.mxu0 0.0
          %559 = vmatpush2.msra.mxu0 0.0
          %560 = vmatprep.subr.mxu0 0.0
          %561 = vmatpush2.msra.mxu0 0.0
          %562 = vmatprep.subr.mxu0 0.0
          %563 = vmatpush2.msra.mxu0 0.0
          %564 = vmatprep.subr.mxu0 0.0
          %565 = vmatpush2.msra.mxu0 0.0
          %566 = vmatprep.subr.mxu0 0.0
          %567 = vmatpush2.msra.mxu0 0.0
          %568 = vmatprep.subr.mxu0 0.0
          %569 = vmatpush2.msra.mxu0 0.0
          %570 = vmatprep.subr.mxu0 0.0
          %571 = vmatpush2.msra.mxu0 0.0
          %572 = vmatprep.subr.mxu0 0.0
          %573 = vmatpush2.msra.mxu0 0.0
          %574 = vmatprep.subr.mxu0 0.0
          %575 = vmatpush2.msra.mxu0 0.0
          %576 = vmatprep.subr.mxu0 0.0
          %577 = vmatpush2.msra.mxu0 0.0
          %578 = vmatprep.subr.mxu0 0.0
          %579 = vmatpush2.msra.mxu0 0.0
          %580 = vmatprep.subr.mxu0 0.0
          %581 = vmatpush2.msra.mxu0 0.0
          %582 = vmatprep.subr.mxu0 0.0
          %583 = vmatpush2.msra.mxu0 0.0
          %584 = vmatprep.mubr.f32.mxu0 0.0
          %585 = vmatmul.mubr.f32.gmra.mxu0 %v508
          %v586 = vpop.f32.mrf.mxu0
          %v587 = vadd.f32 0.0, %v586
          %v588 = vpop.f32.mrf.mxu0
          %v589 = vadd.f32 0.0, %v588
          %590 = vmatprep.mubr.f32.mxu0 0.0
          %591 = vmatmul.mubr.f32.gmra.mxu0 %v509
          %v592 = vpop.f32.mrf.mxu0
          %v593 = vadd.f32 0.0, %v592
          %v594 = vpop.f32.mrf.mxu0
          %v595 = vadd.f32 0.0, %v594
          %596 = vmatprep.mubr.f32.mxu0 0.0
          %597 = vmatmul.mubr.f32.gmra.mxu0 %v510
          %v598 = vpop.f32.mrf.mxu0
          %v599 = vadd.f32 0.0, %v598
          %v600 = vpop.f32.mrf.mxu0
          %v601 = vadd.f32 0.0, %v600
          %602 = vmatprep.mubr.f32.mxu0 0.0
          %603 = vmatmul.mubr.f32.gmra.mxu0 %v511
          %v604 = vpop.f32.mrf.mxu0
          %v605 = vadd.f32 0.0, %v604
          %v606 = vpop.f32.mrf.mxu0
          %v607 = vadd.f32 0.0, %v606
          %608 = vmatprep.mubr.f32.mxu0 0.0
          %609 = vmatmul.mubr.f32.gmra.mxu0 %v512
          %v610 = vpop.f32.mrf.mxu0
          %v611 = vadd.f32 0.0, %v610
          %v612 = vpop.f32.mrf.mxu0
          %v613 = vadd.f32 0.0, %v612
          %614 = vmatprep.mubr.f32.mxu0 0.0
          %615 = vmatmul.mubr.f32.gmra.mxu0 %v513
          %v616 = vpop.f32.mrf.mxu0
          %v617 = vadd.f32 0.0, %v616
          %v618 = vpop.f32.mrf.mxu0
          %v619 = vadd.f32 0.0, %v618
          %620 = vmatprep.mubr.f32.mxu0 0.0
          %621 = vmatmul.mubr.f32.gmra.mxu0 %v514
          %v622 = vpop.f32.mrf.mxu0
          %v623 = vadd.f32 0.0, %v622
          %v624 = vpop.f32.mrf.mxu0
          %v625 = vadd.f32 0.0, %v624
          %626 = vmatprep.mubr.f32.mxu0 0.0
          %627 = vmatmul.mubr.f32.gmra.mxu0 %v515
          %v628 = vpop.f32.mrf.mxu0
          %v629 = vadd.f32 0.0, %v628
          %v630 = vpop.f32.mrf.mxu0
          %v631 = vadd.f32 0.0, %v630
          %632 = vmatprep.mubr.f32.mxu0 0.0
          %633 = vmatmul.mubr.f32.gmra.mxu0 %v516
          %v634 = vpop.f32.mrf.mxu0
          %v635 = vadd.f32 0.0, %v634
          %v636 = vpop.f32.mrf.mxu0
          %v637 = vadd.f32 0.0, %v636
          %638 = vmatprep.mubr.f32.mxu0 0.0
          %639 = vmatmul.mubr.f32.gmra.mxu0 %v517
          %v640 = vpop.f32.mrf.mxu0
          %v641 = vadd.f32 0.0, %v640
          %v642 = vpop.f32.mrf.mxu0
          %v643 = vadd.f32 0.0, %v642
          %644 = vmatprep.mubr.f32.mxu0 0.0
          %645 = vmatmul.mubr.f32.gmra.mxu0 %v518
          %v646 = vpop.f32.mrf.mxu0
          %v647 = vadd.f32 0.0, %v646
          %v648 = vpop.f32.mrf.mxu0
          %v649 = vadd.f32 0.0, %v648
          %650 = vmatprep.mubr.f32.mxu0 0.0
          %651 = vmatmul.mubr.f32.gmra.mxu0 %v519
          %v652 = vpop.f32.mrf.mxu0
          %v653 = vadd.f32 0.0, %v652
          %v654 = vpop.f32.mrf.mxu0
          %v655 = vadd.f32 0.0, %v654
          %656 = vdwg.mxu0
          %657 = vmatprep.subr.mxu0 %v502
          %658 = vmatpush1.msra.mxu0 %v501
          %659 = vmatprep.subr.mxu0 %v498
          %660 = vmatpush1.msra.mxu0 %v497
          %661 = vmatprep.subr.mxu0 %v494
          %662 = vmatpush1.msra.mxu0 %v493
          %663 = vmatprep.subr.mxu0 %v490
          %664 = vmatpush1.msra.mxu0 %v489
          %665 = vmatprep.subr.mxu0 %v486
          %666 = vmatpush1.msra.mxu0 %v485
          %667 = vmatprep.subr.mxu0 %v482
          %668 = vmatpush1.msra.mxu0 %v481
          %669 = vmatprep.subr.mxu0 %v478
          %670 = vmatpush1.msra.mxu0 %v477
          %671 = vmatprep.subr.mxu0 %v474
          %672 = vmatpush1.msra.mxu0 %v473
          %673 = vmatprep.subr.mxu0 %v470
          %674 = vmatpush1.msra.mxu0 %v469
          %675 = vmatprep.subr.mxu0 %v466
          %676 = vmatpush1.msra.mxu0 %v465
          %677 = vmatprep.subr.mxu0 %v462
          %678 = vmatpush1.msra.mxu0 %v461
          %679 = vmatprep.subr.mxu0 %v458
          %680 = vmatpush1.msra.mxu0 %v457
          %681 = vmatprep.subr.mxu0 %v454
          %682 = vmatpush1.msra.mxu0 %v453
          %683 = vmatprep.subr.mxu0 %v450
          %684 = vmatpush1.msra.mxu0 %v449
          %685 = vmatprep.subr.mxu0 %v446
          %686 = vmatpush1.msra.mxu0 %v445
          %687 = vmatprep.subr.mxu0 %v442
          %688 = vmatpush1.msra.mxu0 %v441
          %689 = vmatprep.subr.mxu0 0.0
          %690 = vmatpush2.msra.mxu0 0.0
          %691 = vmatprep.subr.mxu0 0.0
          %692 = vmatpush2.msra.mxu0 0.0
          %693 = vmatprep.subr.mxu0 0.0
          %694 = vmatpush2.msra.mxu0 0.0
          %695 = vmatprep.subr.mxu0 0.0
          %696 = vmatpush2.msra.mxu0 0.0
          %697 = vmatprep.subr.mxu0 0.0
          %698 = vmatpush2.msra.mxu0 0.0
          %699 = vmatprep.subr.mxu0 0.0
          %700 = vmatpush2.msra.mxu0 0.0
          %701 = vmatprep.subr.mxu0 0.0
          %702 = vmatpush2.msra.mxu0 0.0
          %703 = vmatprep.subr.mxu0 0.0
          %704 = vmatpush2.msra.mxu0 0.0
          %705 = vmatprep.subr.mxu0 0.0
          %706 = vmatpush2.msra.mxu0 0.0
          %707 = vmatprep.subr.mxu0 0.0
          %708 = vmatpush2.msra.mxu0 0.0
          %709 = vmatprep.subr.mxu0 0.0
          %710 = vmatpush2.msra.mxu0 0.0
          %711 = vmatprep.subr.mxu0 0.0
          %712 = vmatpush2.msra.mxu0 0.0
          %713 = vmatprep.subr.mxu0 0.0
          %714 = vmatpush2.msra.mxu0 0.0
          %715 = vmatprep.subr.mxu0 0.0
          %716 = vmatpush2.msra.mxu0 0.0
          %717 = vmatprep.subr.mxu0 0.0
          %718 = vmatpush2.msra.mxu0 0.0
          %719 = vmatprep.subr.mxu0 0.0
          %720 = vmatpush2.msra.mxu0 0.0
          %721 = vmatprep.mubr.f32.mxu0 0.0
          %722 = vmatmul.mubr.f32.gmra.mxu0 %v508
          %v723 = vpop.f32.mrf.mxu0
          %v724 = vadd.f32 0.0, %v723
          %v725 = vpop.f32.mrf.mxu0
          %v726 = vadd.f32 0.0, %v725
          %727 = vmatprep.mubr.f32.mxu0 0.0
          %728 = vmatmul.mubr.f32.gmra.mxu0 %v509
          %v729 = vpop.f32.mrf.mxu0
          %v730 = vadd.f32 0.0, %v729
          %v731 = vpop.f32.mrf.mxu0
          %v732 = vadd.f32 0.0, %v731
          %733 = vmatprep.mubr.f32.mxu0 0.0
          %734 = vmatmul.mubr.f32.gmra.mxu0 %v510
          %v735 = vpop.f32.mrf.mxu0
          %v736 = vadd.f32 0.0, %v735
          %v737 = vpop.f32.mrf.mxu0
          %v738 = vadd.f32 0.0, %v737
          %739 = vmatprep.mubr.f32.mxu0 0.0
          %740 = vmatmul.mubr.f32.gmra.mxu0 %v511
          %v741 = vpop.f32.mrf.mxu0
          %v742 = vadd.f32 0.0, %v741
          %v743 = vpop.f32.mrf.mxu0
          %v744 = vadd.f32 0.0, %v743
          %745 = vmatprep.mubr.f32.mxu0 0.0
          %746 = vmatmul.mubr.f32.gmra.mxu0 %v512
          %v747 = vpop.f32.mrf.mxu0
          %v748 = vadd.f32 0.0, %v747
          %v749 = vpop.f32.mrf.mxu0
          %v750 = vadd.f32 0.0, %v749
          %751 = vmatprep.mubr.f32.mxu0 0.0
          %752 = vmatmul.mubr.f32.gmra.mxu0 %v513
          %v753 = vpop.f32.mrf.mxu0
          %v754 = vadd.f32 0.0, %v753
          %v755 = vpop.f32.mrf.mxu0
          %v756 = vadd.f32 0.0, %v755
          %757 = vmatprep.mubr.f32.mxu0 0.0
          %758 = vmatmul.mubr.f32.gmra.mxu0 %v514
          %v759 = vpop.f32.mrf.mxu0
          %v760 = vadd.f32 0.0, %v759
          %v761 = vpop.f32.mrf.mxu0
          %v762 = vadd.f32 0.0, %v761
          %763 = vmatprep.mubr.f32.mxu0 0.0
          %764 = vmatmul.mubr.f32.gmra.mxu0 %v515
          %v765 = vpop.f32.mrf.mxu0
          %v766 = vadd.f32 0.0, %v765
          %v767 = vpop.f32.mrf.mxu0
          %v768 = vadd.f32 0.0, %v767
          %769 = vmatprep.mubr.f32.mxu0 0.0
          %770 = vmatmul.mubr.f32.gmra.mxu0 %v516
          %v771 = vpop.f32.mrf.mxu0
          %v772 = vadd.f32 0.0, %v771
          %v773 = vpop.f32.mrf.mxu0
          %v774 = vadd.f32 0.0, %v773
          %775 = vmatprep.mubr.f32.mxu0 0.0
          %776 = vmatmul.mubr.f32.gmra.mxu0 %v517
          %v777 = vpop.f32.mrf.mxu0
          %v778 = vadd.f32 0.0, %v777
          %v779 = vpop.f32.mrf.mxu0
          %v780 = vadd.f32 0.0, %v779
          %781 = vmatprep.mubr.f32.mxu0 0.0
          %782 = vmatmul.mubr.f32.gmra.mxu0 %v518
          %v783 = vpop.f32.mrf.mxu0
          %v784 = vadd.f32 0.0, %v783
          %v785 = vpop.f32.mrf.mxu0
          %v786 = vadd.f32 0.0, %v785
          %787 = vmatprep.mubr.f32.mxu0 0.0
          %788 = vmatmul.mubr.f32.gmra.mxu0 %v519
          %v789 = vpop.f32.mrf.mxu0
          %v790 = vadd.f32 0.0, %v789
          %v791 = vpop.f32.mrf.mxu0
          %v792 = vadd.f32 0.0, %v791
          %793 = vdwg.mxu0
          %794 = vst [vmem:[#allocation4] sm:$0xff] %v587
          %795 = vst [vmem:[#allocation4 + $0x8] sm:$0xff] %v589
          %796 = vst [vmem:[#allocation4 + $0x10] sm:$0xff] %v724
          %797 = vst [vmem:[#allocation4 + $0x18] sm:$0xff] %v726
          %798 = vst [vmem:[#allocation4 + $0x20] sm:$0xff] %v593
          %799 = vst [vmem:[#allocation4 + $0x28] sm:$0xff] %v595
          %800 = vst [vmem:[#allocation4 + $0x30] sm:$0xff] %v730
          %801 = vst [vmem:[#allocation4 + $0x38] sm:$0xff] %v732
          %802 = vst [vmem:[#allocation4 + $0x40] sm:$0xff] %v599
          %803 = vst [vmem:[#allocation4 + $0x48] sm:$0xff] %v601
          %804 = vst [vmem:[#allocation4 + $0x50] sm:$0xff] %v736
          %805 = vst [vmem:[#allocation4 + $0x58] sm:$0xff] %v738
          %806 = vst [vmem:[#allocation4 + $0x60] sm:$0xff] %v605
          %807 = vst [vmem:[#allocation4 + $0x68] sm:$0xff] %v607
          %808 = vst [vmem:[#allocation4 + $0x70] sm:$0xff] %v742
          %809 = vst [vmem:[#allocation4 + $0x78] sm:$0xff] %v744
          %810 = vst [vmem:[#allocation4 + $0x80] sm:$0xff] %v611
          %811 = vst [vmem:[#allocation4 + $0x88] sm:$0xff] %v613
          %812 = vst [vmem:[#allocation4 + $0x90] sm:$0xff] %v748
          %813 = vst [vmem:[#allocation4 + $0x98] sm:$0xff] %v750
          %814 = vst [vmem:[#allocation4 + $0xa0] sm:$0xff] %v617
          %815 = vst [vmem:[#allocation4 + $0xa8] sm:$0xff] %v619
          %816 = vst [vmem:[#allocation4 + $0xb0] sm:$0xff] %v754
          %817 = vst [vmem:[#allocation4 + $0xb8] sm:$0xff] %v756
          %818 = vst [vmem:[#allocation4 + $0xc0] sm:$0xff] %v623
          %819 = vst [vmem:[#allocation4 + $0xc8] sm:$0xff] %v625
          %820 = vst [vmem:[#allocation4 + $0xd0] sm:$0xff] %v760
          %821 = vst [vmem:[#allocation4 + $0xd8] sm:$0xff] %v762
          %822 = vst [vmem:[#allocation4 + $0xe0] sm:$0xff] %v629
          %823 = vst [vmem:[#allocation4 + $0xe8] sm:$0xff] %v631
          %824 = vst [vmem:[#allocation4 + $0xf0] sm:$0xff] %v766
          %825 = vst [vmem:[#allocation4 + $0xf8] sm:$0xff] %v768
          %826 = vst [vmem:[#allocation4 + $0x100] sm:$0xff] %v635
          %827 = vst [vmem:[#allocation4 + $0x108] sm:$0xff] %v637
          %828 = vst [vmem:[#allocation4 + $0x110] sm:$0xff] %v772
          %829 = vst [vmem:[#allocation4 + $0x118] sm:$0xff] %v774
          %830 = vst [vmem:[#allocation4 + $0x120] sm:$0xff] %v641
          %831 = vst [vmem:[#allocation4 + $0x128] sm:$0xff] %v643
          %832 = vst [vmem:[#allocation4 + $0x130] sm:$0xff] %v778
          %833 = vst [vmem:[#allocation4 + $0x138] sm:$0xff] %v780
          %834 = vst [vmem:[#allocation4 + $0x140] sm:$0xff] %v647
          %835 = vst [vmem:[#allocation4 + $0x148] sm:$0xff] %v649
          %836 = vst [vmem:[#allocation4 + $0x150] sm:$0xff] %v784
          %837 = vst [vmem:[#allocation4 + $0x158] sm:$0xff] %v786
          %838 = vst [vmem:[#allocation4 + $0x160] sm:$0xff] %v653
          %839 = vst [vmem:[#allocation4 + $0x168] sm:$0xff] %v655
          %840 = vst [vmem:[#allocation4 + $0x170] sm:$0xff] %v790
          %841 = vst [vmem:[#allocation4 + $0x178] sm:$0xff] %v792
        $region64: #{tpu_custom_call.1} parent=39 // pred_fallthru
          _
        %p842 = scmp.gt.s32.totalorder %s34, 0
        // Predicated region
        $region65: #{tpu_custom_call.1} parent=39 // pred_check
          %p843 = pneg %p842
        $region66: #{tpu_custom_call.1} parent=39 // pred_check_branch
          %845 = sbr.rel (%p843) target = $region68
        $region67: #{tpu_custom_call.1} parent=39 // pred_region
          %s846 = scalar_lea.vmem [#allocation14], %s438
          %v847 = vld [vmem:[%s846] sm:$0xff]
          %v848 = vld [vmem:[%s846 + $0x8] sm:$0xff]
          %v849 = vld [vmem:[%s846 + $0x10] sm:$0xff]
          %v850 = vld [vmem:[%s846 + $0x18] sm:$0xff]
          %v851 = vld [vmem:[%s846 + $0x20] sm:$0xff]
          %v852 = vld [vmem:[%s846 + $0x28] sm:$0xff]
          %v853 = vld [vmem:[%s846 + $0x30] sm:$0xff]
          %v854 = vld [vmem:[%s846 + $0x38] sm:$0xff]
          %v855 = vld [vmem:[%s846 + $0x40] sm:$0xff]
          %v856 = vld [vmem:[%s846 + $0x48] sm:$0xff]
          %v857 = vld [vmem:[%s846 + $0x50] sm:$0xff]
          %v858 = vld [vmem:[%s846 + $0x58] sm:$0xff]
          %859 = vmatprep.subr.mxu0 %v500
          %860 = vmatpush1.msra.mxu0 %v499
          %861 = vmatprep.subr.mxu0 %v496
          %862 = vmatpush1.msra.mxu0 %v495
          %863 = vmatprep.subr.mxu0 %v492
          %864 = vmatpush1.msra.mxu0 %v491
          %865 = vmatprep.subr.mxu0 %v488
          %866 = vmatpush1.msra.mxu0 %v487
          %867 = vmatprep.subr.mxu0 %v484
          %868 = vmatpush1.msra.mxu0 %v483
          %869 = vmatprep.subr.mxu0 %v480
          %870 = vmatpush1.msra.mxu0 %v479
          %871 = vmatprep.subr.mxu0 %v476
          %872 = vmatpush1.msra.mxu0 %v475
          %873 = vmatprep.subr.mxu0 %v472
          %874 = vmatpush1.msra.mxu0 %v471
          %875 = vmatprep.subr.mxu0 %v468
          %876 = vmatpush1.msra.mxu0 %v467
          %877 = vmatprep.subr.mxu0 %v464
          %878 = vmatpush1.msra.mxu0 %v463
          %879 = vmatprep.subr.mxu0 %v460
          %880 = vmatpush1.msra.mxu0 %v459
          %881 = vmatprep.subr.mxu0 %v456
          %882 = vmatpush1.msra.mxu0 %v455
          %883 = vmatprep.subr.mxu0 %v452
          %884 = vmatpush1.msra.mxu0 %v451
          %885 = vmatprep.subr.mxu0 %v448
          %886 = vmatpush1.msra.mxu0 %v447
          %887 = vmatprep.subr.mxu0 %v444
          %888 = vmatpush1.msra.mxu0 %v443
          %889 = vmatprep.subr.mxu0 %v440
          %890 = vmatpush1.msra.mxu0 %v439
          %891 = vmatprep.subr.mxu0 0.0
          %892 = vmatpush2.msra.mxu0 0.0
          %893 = vmatprep.subr.mxu0 0.0
          %894 = vmatpush2.msra.mxu0 0.0
          %895 = vmatprep.subr.mxu0 0.0
          %896 = vmatpush2.msra.mxu0 0.0
          %897 = vmatprep.subr.mxu0 0.0
          %898 = vmatpush2.msra.mxu0 0.0
          %899 = vmatprep.subr.mxu0 0.0
          %900 = vmatpush2.msra.mxu0 0.0
          %901 = vmatprep.subr.mxu0 0.0
          %902 = vmatpush2.msra.mxu0 0.0
          %903 = vmatprep.subr.mxu0 0.0
          %904 = vmatpush2.msra.mxu0 0.0
          %905 = vmatprep.subr.mxu0 0.0
          %906 = vmatpush2.msra.mxu0 0.0
          %907 = vmatprep.subr.mxu0 0.0
          %908 = vmatpush2.msra.mxu0 0.0
          %909 = vmatprep.subr.mxu0 0.0
          %910 = vmatpush2.msra.mxu0 0.0
          %911 = vmatprep.subr.mxu0 0.0
          %912 = vmatpush2.msra.mxu0 0.0
          %913 = vmatprep.subr.mxu0 0.0
          %914 = vmatpush2.msra.mxu0 0.0
          %915 = vmatprep.subr.mxu0 0.0
          %916 = vmatpush2.msra.mxu0 0.0
          %917 = vmatprep.subr.mxu0 0.0
          %918 = vmatpush2.msra.mxu0 0.0
          %919 = vmatprep.subr.mxu0 0.0
          %920 = vmatpush2.msra.mxu0 0.0
          %921 = vmatprep.subr.mxu0 0.0
          %922 = vmatpush2.msra.mxu0 0.0
          %923 = vmatprep.mubr.f32.mxu0 0.0
          %924 = vmatmul.mubr.f32.gmra.mxu0 %v847
          %v925 = vpop.f32.mrf.mxu0
          %v926 = vadd.f32 0.0, %v925
          %v927 = vpop.f32.mrf.mxu0
          %v928 = vadd.f32 0.0, %v927
          %929 = vmatprep.mubr.f32.mxu0 0.0
          %930 = vmatmul.mubr.f32.gmra.mxu0 %v848
          %v931 = vpop.f32.mrf.mxu0
          %v932 = vadd.f32 0.0, %v931
          %v933 = vpop.f32.mrf.mxu0
          %v934 = vadd.f32 0.0, %v933
          %935 = vmatprep.mubr.f32.mxu0 0.0
          %936 = vmatmul.mubr.f32.gmra.mxu0 %v849
          %v937 = vpop.f32.mrf.mxu0
          %v938 = vadd.f32 0.0, %v937
          %v939 = vpop.f32.mrf.mxu0
          %v940 = vadd.f32 0.0, %v939
          %941 = vmatprep.mubr.f32.mxu0 0.0
          %942 = vmatmul.mubr.f32.gmra.mxu0 %v850
          %v943 = vpop.f32.mrf.mxu0
          %v944 = vadd.f32 0.0, %v943
          %v945 = vpop.f32.mrf.mxu0
          %v946 = vadd.f32 0.0, %v945
          %947 = vmatprep.mubr.f32.mxu0 0.0
          %948 = vmatmul.mubr.f32.gmra.mxu0 %v851
          %v949 = vpop.f32.mrf.mxu0
          %v950 = vadd.f32 0.0, %v949
          %v951 = vpop.f32.mrf.mxu0
          %v952 = vadd.f32 0.0, %v951
          %953 = vmatprep.mubr.f32.mxu0 0.0
          %954 = vmatmul.mubr.f32.gmra.mxu0 %v852
          %v955 = vpop.f32.mrf.mxu0
          %v956 = vadd.f32 0.0, %v955
          %v957 = vpop.f32.mrf.mxu0
          %v958 = vadd.f32 0.0, %v957
          %959 = vmatprep.mubr.f32.mxu0 0.0
          %960 = vmatmul.mubr.f32.gmra.mxu0 %v853
          %v961 = vpop.f32.mrf.mxu0
          %v962 = vadd.f32 0.0, %v961
          %v963 = vpop.f32.mrf.mxu0
          %v964 = vadd.f32 0.0, %v963
          %965 = vmatprep.mubr.f32.mxu0 0.0
          %966 = vmatmul.mubr.f32.gmra.mxu0 %v854
          %v967 = vpop.f32.mrf.mxu0
          %v968 = vadd.f32 0.0, %v967
          %v969 = vpop.f32.mrf.mxu0
          %v970 = vadd.f32 0.0, %v969
          %971 = vmatprep.mubr.f32.mxu0 0.0
          %972 = vmatmul.mubr.f32.gmra.mxu0 %v855
          %v973 = vpop.f32.mrf.mxu0
          %v974 = vadd.f32 0.0, %v973
          %v975 = vpop.f32.mrf.mxu0
          %v976 = vadd.f32 0.0, %v975
          %977 = vmatprep.mubr.f32.mxu0 0.0
          %978 = vmatmul.mubr.f32.gmra.mxu0 %v856
          %v979 = vpop.f32.mrf.mxu0
          %v980 = vadd.f32 0.0, %v979
          %v981 = vpop.f32.mrf.mxu0
          %v982 = vadd.f32 0.0, %v981
          %983 = vmatprep.mubr.f32.mxu0 0.0
          %984 = vmatmul.mubr.f32.gmra.mxu0 %v857
          %v985 = vpop.f32.mrf.mxu0
          %v986 = vadd.f32 0.0, %v985
          %v987 = vpop.f32.mrf.mxu0
          %v988 = vadd.f32 0.0, %v987
          %989 = vmatprep.mubr.f32.mxu0 0.0
          %990 = vmatmul.mubr.f32.gmra.mxu0 %v858
          %v991 = vpop.f32.mrf.mxu0
          %v992 = vadd.f32 0.0, %v991
          %v993 = vpop.f32.mrf.mxu0
          %v994 = vadd.f32 0.0, %v993
          %995 = vdwg.mxu0
          %996 = vmatprep.subr.mxu0 %v502
          %997 = vmatpush1.msra.mxu0 %v501
          %998 = vmatprep.subr.mxu0 %v498
          %999 = vmatpush1.msra.mxu0 %v497
          %1000 = vmatprep.subr.mxu0 %v494
          %1001 = vmatpush1.msra.mxu0 %v493
          %1002 = vmatprep.subr.mxu0 %v490
          %1003 = vmatpush1.msra.mxu0 %v489
          %1004 = vmatprep.subr.mxu0 %v486
          %1005 = vmatpush1.msra.mxu0 %v485
          %1006 = vmatprep.subr.mxu0 %v482
          %1007 = vmatpush1.msra.mxu0 %v481
          %1008 = vmatprep.subr.mxu0 %v478
          %1009 = vmatpush1.msra.mxu0 %v477
          %1010 = vmatprep.subr.mxu0 %v474
          %1011 = vmatpush1.msra.mxu0 %v473
          %1012 = vmatprep.subr.mxu0 %v470
          %1013 = vmatpush1.msra.mxu0 %v469
          %1014 = vmatprep.subr.mxu0 %v466
          %1015 = vmatpush1.msra.mxu0 %v465
          %1016 = vmatprep.subr.mxu0 %v462
          %1017 = vmatpush1.msra.mxu0 %v461
          %1018 = vmatprep.subr.mxu0 %v458
          %1019 = vmatpush1.msra.mxu0 %v457
          %1020 = vmatprep.subr.mxu0 %v454
          %1021 = vmatpush1.msra.mxu0 %v453
          %1022 = vmatprep.subr.mxu0 %v450
          %1023 = vmatpush1.msra.mxu0 %v449
          %1024 = vmatprep.subr.mxu0 %v446
          %1025 = vmatpush1.msra.mxu0 %v445
          %1026 = vmatprep.subr.mxu0 %v442
          %1027 = vmatpush1.msra.mxu0 %v441
          %1028 = vmatprep.subr.mxu0 0.0
          %1029 = vmatpush2.msra.mxu0 0.0
          %1030 = vmatprep.subr.mxu0 0.0
          %1031 = vmatpush2.msra.mxu0 0.0
          %1032 = vmatprep.subr.mxu0 0.0
          %1033 = vmatpush2.msra.mxu0 0.0
          %1034 = vmatprep.subr.mxu0 0.0
          %1035 = vmatpush2.msra.mxu0 0.0
          %1036 = vmatprep.subr.mxu0 0.0
          %1037 = vmatpush2.msra.mxu0 0.0
          %1038 = vmatprep.subr.mxu0 0.0
          %1039 = vmatpush2.msra.mxu0 0.0
          %1040 = vmatprep.subr.mxu0 0.0
          %1041 = vmatpush2.msra.mxu0 0.0
          %1042 = vmatprep.subr.mxu0 0.0
          %1043 = vmatpush2.msra.mxu0 0.0
          %1044 = vmatprep.subr.mxu0 0.0
          %1045 = vmatpush2.msra.mxu0 0.0
          %1046 = vmatprep.subr.mxu0 0.0
          %1047 = vmatpush2.msra.mxu0 0.0
          %1048 = vmatprep.subr.mxu0 0.0
          %1049 = vmatpush2.msra.mxu0 0.0
          %1050 = vmatprep.subr.mxu0 0.0
          %1051 = vmatpush2.msra.mxu0 0.0
          %1052 = vmatprep.subr.mxu0 0.0
          %1053 = vmatpush2.msra.mxu0 0.0
          %1054 = vmatprep.subr.mxu0 0.0
          %1055 = vmatpush2.msra.mxu0 0.0
          %1056 = vmatprep.subr.mxu0 0.0
          %1057 = vmatpush2.msra.mxu0 0.0
          %1058 = vmatprep.subr.mxu0 0.0
          %1059 = vmatpush2.msra.mxu0 0.0
          %1060 = vmatprep.mubr.f32.mxu0 0.0
          %1061 = vmatmul.mubr.f32.gmra.mxu0 %v847
          %v1062 = vpop.f32.mrf.mxu0
          %v1063 = vadd.f32 0.0, %v1062
          %v1064 = vpop.f32.mrf.mxu0
          %v1065 = vadd.f32 0.0, %v1064
          %1066 = vmatprep.mubr.f32.mxu0 0.0
          %1067 = vmatmul.mubr.f32.gmra.mxu0 %v848
          %v1068 = vpop.f32.mrf.mxu0
          %v1069 = vadd.f32 0.0, %v1068
          %v1070 = vpop.f32.mrf.mxu0
          %v1071 = vadd.f32 0.0, %v1070
          %1072 = vmatprep.mubr.f32.mxu0 0.0
          %1073 = vmatmul.mubr.f32.gmra.mxu0 %v849
          %v1074 = vpop.f32.mrf.mxu0
          %v1075 = vadd.f32 0.0, %v1074
          %v1076 = vpop.f32.mrf.mxu0
          %v1077 = vadd.f32 0.0, %v1076
          %1078 = vmatprep.mubr.f32.mxu0 0.0
          %1079 = vmatmul.mubr.f32.gmra.mxu0 %v850
          %v1080 = vpop.f32.mrf.mxu0
          %v1081 = vadd.f32 0.0, %v1080
          %v1082 = vpop.f32.mrf.mxu0
          %v1083 = vadd.f32 0.0, %v1082
          %1084 = vmatprep.mubr.f32.mxu0 0.0
          %1085 = vmatmul.mubr.f32.gmra.mxu0 %v851
          %v1086 = vpop.f32.mrf.mxu0
          %v1087 = vadd.f32 0.0, %v1086
          %v1088 = vpop.f32.mrf.mxu0
          %v1089 = vadd.f32 0.0, %v1088
          %1090 = vmatprep.mubr.f32.mxu0 0.0
          %1091 = vmatmul.mubr.f32.gmra.mxu0 %v852
          %v1092 = vpop.f32.mrf.mxu0
          %v1093 = vadd.f32 0.0, %v1092
          %v1094 = vpop.f32.mrf.mxu0
          %v1095 = vadd.f32 0.0, %v1094
          %1096 = vmatprep.mubr.f32.mxu0 0.0
          %1097 = vmatmul.mubr.f32.gmra.mxu0 %v853
          %v1098 = vpop.f32.mrf.mxu0
          %v1099 = vadd.f32 0.0, %v1098
          %v1100 = vpop.f32.mrf.mxu0
          %v1101 = vadd.f32 0.0, %v1100
          %1102 = vmatprep.mubr.f32.mxu0 0.0
          %1103 = vmatmul.mubr.f32.gmra.mxu0 %v854
          %v1104 = vpop.f32.mrf.mxu0
          %v1105 = vadd.f32 0.0, %v1104
          %v1106 = vpop.f32.mrf.mxu0
          %v1107 = vadd.f32 0.0, %v1106
          %1108 = vmatprep.mubr.f32.mxu0 0.0
          %1109 = vmatmul.mubr.f32.gmra.mxu0 %v855
          %v1110 = vpop.f32.mrf.mxu0
          %v1111 = vadd.f32 0.0, %v1110
          %v1112 = vpop.f32.mrf.mxu0
          %v1113 = vadd.f32 0.0, %v1112
          %1114 = vmatprep.mubr.f32.mxu0 0.0
          %1115 = vmatmul.mubr.f32.gmra.mxu0 %v856
          %v1116 = vpop.f32.mrf.mxu0
          %v1117 = vadd.f32 0.0, %v1116
          %v1118 = vpop.f32.mrf.mxu0
          %v1119 = vadd.f32 0.0, %v1118
          %1120 = vmatprep.mubr.f32.mxu0 0.0
          %1121 = vmatmul.mubr.f32.gmra.mxu0 %v857
          %v1122 = vpop.f32.mrf.mxu0
          %v1123 = vadd.f32 0.0, %v1122
          %v1124 = vpop.f32.mrf.mxu0
          %v1125 = vadd.f32 0.0, %v1124
          %1126 = vmatprep.mubr.f32.mxu0 0.0
          %1127 = vmatmul.mubr.f32.gmra.mxu0 %v858
          %v1128 = vpop.f32.mrf.mxu0
          %v1129 = vadd.f32 0.0, %v1128
          %v1130 = vpop.f32.mrf.mxu0
          %v1131 = vadd.f32 0.0, %v1130
          %1132 = vdwg.mxu0
          %1133 = vst [vmem:[#allocation4] sm:$0xff] %v926
          %1134 = vst [vmem:[#allocation4 + $0x8] sm:$0xff] %v928
          %1135 = vst [vmem:[#allocation4 + $0x10] sm:$0xff] %v1063
          %1136 = vst [vmem:[#allocation4 + $0x18] sm:$0xff] %v1065
          %1137 = vst [vmem:[#allocation4 + $0x20] sm:$0xff] %v932
          %1138 = vst [vmem:[#allocation4 + $0x28] sm:$0xff] %v934
          %1139 = vst [vmem:[#allocation4 + $0x30] sm:$0xff] %v1069
          %1140 = vst [vmem:[#allocation4 + $0x38] sm:$0xff] %v1071
          %1141 = vst [vmem:[#allocation4 + $0x40] sm:$0xff] %v938
          %1142 = vst [vmem:[#allocation4 + $0x48] sm:$0xff] %v940
          %1143 = vst [vmem:[#allocation4 + $0x50] sm:$0xff] %v1075
          %1144 = vst [vmem:[#allocation4 + $0x58] sm:$0xff] %v1077
          %1145 = vst [vmem:[#allocation4 + $0x60] sm:$0xff] %v944
          %1146 = vst [vmem:[#allocation4 + $0x68] sm:$0xff] %v946
          %1147 = vst [vmem:[#allocation4 + $0x70] sm:$0xff] %v1081
          %1148 = vst [vmem:[#allocation4 + $0x78] sm:$0xff] %v1083
          %1149 = vst [vmem:[#allocation4 + $0x80] sm:$0xff] %v950
          %1150 = vst [vmem:[#allocation4 + $0x88] sm:$0xff] %v952
          %1151 = vst [vmem:[#allocation4 + $0x90] sm:$0xff] %v1087
          %1152 = vst [vmem:[#allocation4 + $0x98] sm:$0xff] %v1089
          %1153 = vst [vmem:[#allocation4 + $0xa0] sm:$0xff] %v956
          %1154 = vst [vmem:[#allocation4 + $0xa8] sm:$0xff] %v958
          %1155 = vst [vmem:[#allocation4 + $0xb0] sm:$0xff] %v1093
          %1156 = vst [vmem:[#allocation4 + $0xb8] sm:$0xff] %v1095
          %1157 = vst [vmem:[#allocation4 + $0xc0] sm:$0xff] %v962
          %1158 = vst [vmem:[#allocation4 + $0xc8] sm:$0xff] %v964
          %1159 = vst [vmem:[#allocation4 + $0xd0] sm:$0xff] %v1099
          %1160 = vst [vmem:[#allocation4 + $0xd8] sm:$0xff] %v1101
          %1161 = vst [vmem:[#allocation4 + $0xe0] sm:$0xff] %v968
          %1162 = vst [vmem:[#allocation4 + $0xe8] sm:$0xff] %v970
          %1163 = vst [vmem:[#allocation4 + $0xf0] sm:$0xff] %v1105
          %1164 = vst [vmem:[#allocation4 + $0xf8] sm:$0xff] %v1107
          %1165 = vst [vmem:[#allocation4 + $0x100] sm:$0xff] %v974
          %1166 = vst [vmem:[#allocation4 + $0x108] sm:$0xff] %v976
          %1167 = vst [vmem:[#allocation4 + $0x110] sm:$0xff] %v1111
          %1168 = vst [vmem:[#allocation4 + $0x118] sm:$0xff] %v1113
          %1169 = vst [vmem:[#allocation4 + $0x120] sm:$0xff] %v980
          %1170 = vst [vmem:[#allocation4 + $0x128] sm:$0xff] %v982
          %1171 = vst [vmem:[#allocation4 + $0x130] sm:$0xff] %v1117
          %1172 = vst [vmem:[#allocation4 + $0x138] sm:$0xff] %v1119
          %1173 = vst [vmem:[#allocation4 + $0x140] sm:$0xff] %v986
          %1174 = vst [vmem:[#allocation4 + $0x148] sm:$0xff] %v988
          %1175 = vst [vmem:[#allocation4 + $0x150] sm:$0xff] %v1123
          %1176 = vst [vmem:[#allocation4 + $0x158] sm:$0xff] %v1125
          %1177 = vst [vmem:[#allocation4 + $0x160] sm:$0xff] %v992
          %1178 = vst [vmem:[#allocation4 + $0x168] sm:$0xff] %v994
          %1179 = vst [vmem:[#allocation4 + $0x170] sm:$0xff] %v1129
          %1180 = vst [vmem:[#allocation4 + $0x178] sm:$0xff] %v1131
        $region68: #{tpu_custom_call.1} parent=39 // pred_fallthru
          _
        %p1181 = scmp.eq.s32.totalorder %s35, 0
        // Predicated region
        $region69: #{tpu_custom_call.1} parent=39 // pred_check
          %p1182 = pneg %p1181
        $region70: #{tpu_custom_call.1} parent=39 // pred_check_branch
          %1184 = sbr.rel (%p1182) target = $region72
        $region71: #{tpu_custom_call.1} parent=39 // pred_region
          %v1185 = vld [vmem:[%s378] sm:$0xff]
          %1186 = vst [vmem:[#allocation2] sm:$0xff] %v1185
          %v1187 = vld [vmem:[%s387] sm:$0xff]
          %1188 = vst [vmem:[#allocation3] sm:$0xff] %v1187
        $region72: #{tpu_custom_call.1} parent=39 // pred_fallthru
          _
        %v1189 = vld [vmem:[%s369] sm:$0xff]
        %v1190 = vld [vmem:[%s369 + $0x8] sm:$0xff]
        %v1191 = vld [vmem:[%s369 + $0x10] sm:$0xff]
        %v1192 = vld [vmem:[%s369 + $0x18] sm:$0xff]
        %v1193 = vld [vmem:[%s369 + $0x20] sm:$0xff]
        %v1194 = vld [vmem:[%s369 + $0x28] sm:$0xff]
        %v1195 = vld [vmem:[%s369 + $0x30] sm:$0xff]
        %v1196 = vld [vmem:[%s369 + $0x38] sm:$0xff]
        %v1197 = vld [vmem:[%s369 + $0x40] sm:$0xff]
        %v1198 = vld [vmem:[%s369 + $0x48] sm:$0xff]
        %v1199 = vld [vmem:[%s369 + $0x50] sm:$0xff]
        %v1200 = vld [vmem:[%s369 + $0x58] sm:$0xff]
        %v1201 = vld [vmem:[%s369 + $0x60] sm:$0xff]
        %v1202 = vld [vmem:[%s369 + $0x68] sm:$0xff]
        %v1203 = vld [vmem:[%s369 + $0x70] sm:$0xff]
        %v1204 = vld [vmem:[%s369 + $0x78] sm:$0xff]
        %v1205 = vld [vmem:[%s369 + $0x80] sm:$0xff]
        %v1206 = vld [vmem:[%s369 + $0x88] sm:$0xff]
        %v1207 = vld [vmem:[%s369 + $0x90] sm:$0xff]
        %v1208 = vld [vmem:[%s369 + $0x98] sm:$0xff]
        %v1209 = vld [vmem:[%s369 + $0xa0] sm:$0xff]
        %v1210 = vld [vmem:[%s369 + $0xa8] sm:$0xff]
        %v1211 = vld [vmem:[%s369 + $0xb0] sm:$0xff]
        %v1212 = vld [vmem:[%s369 + $0xb8] sm:$0xff]
        %v1213 = vld [vmem:[%s369 + $0xc0] sm:$0xff]
        %v1214 = vld [vmem:[%s369 + $0xc8] sm:$0xff]
        %v1215 = vld [vmem:[%s369 + $0xd0] sm:$0xff]
        %v1216 = vld [vmem:[%s369 + $0xd8] sm:$0xff]
        %v1217 = vld [vmem:[%s369 + $0xe0] sm:$0xff]
        %v1218 = vld [vmem:[%s369 + $0xe8] sm:$0xff]
        %v1219 = vld [vmem:[%s369 + $0xf0] sm:$0xff]
        %v1220 = vld [vmem:[%s369 + $0xf8] sm:$0xff]
        %v1221 = vld [vmem:[%s369 + $0x100] sm:$0xff]
        %v1222 = vld [vmem:[%s369 + $0x108] sm:$0xff]
        %v1223 = vld [vmem:[%s369 + $0x110] sm:$0xff]
        %v1224 = vld [vmem:[%s369 + $0x118] sm:$0xff]
        %v1225 = vld [vmem:[%s369 + $0x120] sm:$0xff]
        %v1226 = vld [vmem:[%s369 + $0x128] sm:$0xff]
        %v1227 = vld [vmem:[%s369 + $0x130] sm:$0xff]
        %v1228 = vld [vmem:[%s369 + $0x138] sm:$0xff]
        %v1229 = vld [vmem:[%s369 + $0x140] sm:$0xff]
        %v1230 = vld [vmem:[%s369 + $0x148] sm:$0xff]
        %v1231 = vld [vmem:[%s369 + $0x150] sm:$0xff]
        %v1232 = vld [vmem:[%s369 + $0x158] sm:$0xff]
        %v1233 = vld [vmem:[%s369 + $0x160] sm:$0xff]
        %v1234 = vld [vmem:[%s369 + $0x168] sm:$0xff]
        %v1235 = vld [vmem:[%s369 + $0x170] sm:$0xff]
        %v1236 = vld [vmem:[%s369 + $0x178] sm:$0xff]
        %v1237 = vld [vmem:[%s369 + $0x180] sm:$0xff]
        %v1238 = vld [vmem:[%s369 + $0x188] sm:$0xff]
        %v1239 = vld [vmem:[%s369 + $0x190] sm:$0xff]
        %v1240 = vld [vmem:[%s369 + $0x198] sm:$0xff]
        %v1241 = vld [vmem:[%s369 + $0x1a0] sm:$0xff]
        %v1242 = vld [vmem:[%s369 + $0x1a8] sm:$0xff]
        %v1243 = vld [vmem:[%s369 + $0x1b0] sm:$0xff]
        %v1244 = vld [vmem:[%s369 + $0x1b8] sm:$0xff]
        %v1245 = vld [vmem:[%s369 + $0x1c0] sm:$0xff]
        %v1246 = vld [vmem:[%s369 + $0x1c8] sm:$0xff]
        %v1247 = vld [vmem:[%s369 + $0x1d0] sm:$0xff]
        %v1248 = vld [vmem:[%s369 + $0x1d8] sm:$0xff]
        %v1249 = vld [vmem:[%s369 + $0x1e0] sm:$0xff]
        %v1250 = vld [vmem:[%s369 + $0x1e8] sm:$0xff]
        %v1251 = vld [vmem:[%s369 + $0x1f0] sm:$0xff]
        %v1252 = vld [vmem:[%s369 + $0x1f8] sm:$0xff]
        %v1253 = vld [vmem:[#allocation2] sm:$0xff]
        %v1254 = vld [vmem:[#allocation3] sm:$0xff]
        %v1255 = vld [vmem:[#allocation4] sm:$0xff]
        %v1256 = vld [vmem:[#allocation4 + $0x8] sm:$0xff]
        %v1257 = vld [vmem:[#allocation4 + $0x10] sm:$0xff]
        %v1258 = vld [vmem:[#allocation4 + $0x18] sm:$0xff]
        %1259 = vmatprep.subr.mxu0 %v1250
        %1260 = vmatpush1.msra.mxu0 %v1249
        %1261 = vmatprep.subr.mxu0 %v1246
        %1262 = vmatpush1.msra.mxu0 %v1245
        %1263 = vmatprep.subr.mxu0 %v1242
        %1264 = vmatpush1.msra.mxu0 %v1241
        %1265 = vmatprep.subr.mxu0 %v1238
        %1266 = vmatpush1.msra.mxu0 %v1237
        %1267 = vmatprep.subr.mxu0 %v1234
        %1268 = vmatpush1.msra.mxu0 %v1233
        %1269 = vmatprep.subr.mxu0 %v1230
        %1270 = vmatpush1.msra.mxu0 %v1229
        %1271 = vmatprep.subr.mxu0 %v1226
        %1272 = vmatpush1.msra.mxu0 %v1225
        %1273 = vmatprep.subr.mxu0 %v1222
        %1274 = vmatpush1.msra.mxu0 %v1221
        %1275 = vmatprep.subr.mxu0 %v1218
        %1276 = vmatpush1.msra.mxu0 %v1217
        %1277 = vmatprep.subr.mxu0 %v1214
        %1278 = vmatpush1.msra.mxu0 %v1213
        %1279 = vmatprep.subr.mxu0 %v1210
        %1280 = vmatpush1.msra.mxu0 %v1209
        %1281 = vmatprep.subr.mxu0 %v1206
        %1282 = vmatpush1.msra.mxu0 %v1205
        %1283 = vmatprep.subr.mxu0 %v1202
        %1284 = vmatpush1.msra.mxu0 %v1201
        %1285 = vmatprep.subr.mxu0 %v1198
        %1286 = vmatpush1.msra.mxu0 %v1197
        %1287 = vmatprep.subr.mxu0 %v1194
        %1288 = vmatpush1.msra.mxu0 %v1193
        %1289 = vmatprep.subr.mxu0 %v1190
        %1290 = vmatpush1.msra.mxu0 %v1189
        %1291 = vmatprep.subr.mxu0 0.0
        %1292 = vmatpush2.msra.mxu0 0.0
        %1293 = vmatprep.subr.mxu0 0.0
        %1294 = vmatpush2.msra.mxu0 0.0
        %1295 = vmatprep.subr.mxu0 0.0
        %1296 = vmatpush2.msra.mxu0 0.0
        %1297 = vmatprep.subr.mxu0 0.0
        %1298 = vmatpush2.msra.mxu0 0.0
        %1299 = vmatprep.subr.mxu0 0.0
        %1300 = vmatpush2.msra.mxu0 0.0
        %1301 = vmatprep.subr.mxu0 0.0
        %1302 = vmatpush2.msra.mxu0 0.0
        %1303 = vmatprep.subr.mxu0 0.0
        %1304 = vmatpush2.msra.mxu0 0.0
        %1305 = vmatprep.subr.mxu0 0.0
        %1306 = vmatpush2.msra.mxu0 0.0
        %1307 = vmatprep.subr.mxu0 0.0
        %1308 = vmatpush2.msra.mxu0 0.0
        %1309 = vmatprep.subr.mxu0 0.0
        %1310 = vmatpush2.msra.mxu0 0.0
        %1311 = vmatprep.subr.mxu0 0.0
        %1312 = vmatpush2.msra.mxu0 0.0
        %1313 = vmatprep.subr.mxu0 0.0
        %1314 = vmatpush2.msra.mxu0 0.0
        %1315 = vmatprep.subr.mxu0 0.0
        %1316 = vmatpush2.msra.mxu0 0.0
        %1317 = vmatprep.subr.mxu0 0.0
        %1318 = vmatpush2.msra.mxu0 0.0
        %1319 = vmatprep.subr.mxu0 0.0
        %1320 = vmatpush2.msra.mxu0 0.0
        %1321 = vmatprep.subr.mxu0 0.0
        %1322 = vmatpush2.msra.mxu0 0.0
        %1323 = vmatprep.mubr.f32.mxu0 0.0
        %1324 = vmatmul.mubr.f32.gmra.mxu0 %v1253
        %v1325 = vpop.f32.mrf.mxu0
        %v1326 = vadd.f32 0.0, %v1325
        %v1327 = vpop.f32.mrf.mxu0
        %v1328 = vadd.f32 0.0, %v1327
        %1329 = vdwg.mxu0
        %1330 = vmatprep.subr.mxu0 %v1252
        %1331 = vmatpush1.msra.mxu0 %v1251
        %1332 = vmatprep.subr.mxu0 %v1248
        %1333 = vmatpush1.msra.mxu0 %v1247
        %1334 = vmatprep.subr.mxu0 %v1244
        %1335 = vmatpush1.msra.mxu0 %v1243
        %1336 = vmatprep.subr.mxu0 %v1240
        %1337 = vmatpush1.msra.mxu0 %v1239
        %1338 = vmatprep.subr.mxu0 %v1236
        %1339 = vmatpush1.msra.mxu0 %v1235
        %1340 = vmatprep.subr.mxu0 %v1232
        %1341 = vmatpush1.msra.mxu0 %v1231
        %1342 = vmatprep.subr.mxu0 %v1228
        %1343 = vmatpush1.msra.mxu0 %v1227
        %1344 = vmatprep.subr.mxu0 %v1224
        %1345 = vmatpush1.msra.mxu0 %v1223
        %1346 = vmatprep.subr.mxu0 %v1220
        %1347 = vmatpush1.msra.mxu0 %v1219
        %1348 = vmatprep.subr.mxu0 %v1216
        %1349 = vmatpush1.msra.mxu0 %v1215
        %1350 = vmatprep.subr.mxu0 %v1212
        %1351 = vmatpush1.msra.mxu0 %v1211
        %1352 = vmatprep.subr.mxu0 %v1208
        %1353 = vmatpush1.msra.mxu0 %v1207
        %1354 = vmatprep.subr.mxu0 %v1204
        %1355 = vmatpush1.msra.mxu0 %v1203
        %1356 = vmatprep.subr.mxu0 %v1200
        %1357 = vmatpush1.msra.mxu0 %v1199
        %1358 = vmatprep.subr.mxu0 %v1196
        %1359 = vmatpush1.msra.mxu0 %v1195
        %1360 = vmatprep.subr.mxu0 %v1192
        %1361 = vmatpush1.msra.mxu0 %v1191
        %1362 = vmatprep.subr.mxu0 0.0
        %1363 = vmatpush2.msra.mxu0 0.0
        %1364 = vmatprep.subr.mxu0 0.0
        %1365 = vmatpush2.msra.mxu0 0.0
        %1366 = vmatprep.subr.mxu0 0.0
        %1367 = vmatpush2.msra.mxu0 0.0
        %1368 = vmatprep.subr.mxu0 0.0
        %1369 = vmatpush2.msra.mxu0 0.0
        %1370 = vmatprep.subr.mxu0 0.0
        %1371 = vmatpush2.msra.mxu0 0.0
        %1372 = vmatprep.subr.mxu0 0.0
        %1373 = vmatpush2.msra.mxu0 0.0
        %1374 = vmatprep.subr.mxu0 0.0
        %1375 = vmatpush2.msra.mxu0 0.0
        %1376 = vmatprep.subr.mxu0 0.0
        %1377 = vmatpush2.msra.mxu0 0.0
        %1378 = vmatprep.subr.mxu0 0.0
        %1379 = vmatpush2.msra.mxu0 0.0
        %1380 = vmatprep.subr.mxu0 0.0
        %1381 = vmatpush2.msra.mxu0 0.0
        %1382 = vmatprep.subr.mxu0 0.0
        %1383 = vmatpush2.msra.mxu0 0.0
        %1384 = vmatprep.subr.mxu0 0.0
        %1385 = vmatpush2.msra.mxu0 0.0
        %1386 = vmatprep.subr.mxu0 0.0
        %1387 = vmatpush2.msra.mxu0 0.0
        %1388 = vmatprep.subr.mxu0 0.0
        %1389 = vmatpush2.msra.mxu0 0.0
        %1390 = vmatprep.subr.mxu0 0.0
        %1391 = vmatpush2.msra.mxu0 0.0
        %1392 = vmatprep.subr.mxu0 0.0
        %1393 = vmatpush2.msra.mxu0 0.0
        %1394 = vmatprep.mubr.f32.mxu0 0.0
        %1395 = vmatmul.mubr.f32.gmra.mxu0 %v1253
        %v1396 = vpop.f32.mrf.mxu0
        %v1397 = vadd.f32 0.0, %v1396
        %v1398 = vpop.f32.mrf.mxu0
        %v1399 = vadd.f32 0.0, %v1398
        %1400 = vdwg.mxu0
        %v1401 = vadd.f32 %v1255, %v1326
        %v1402 = vadd.f32 %v1256, %v1328
        %v1403 = vadd.f32 %v1257, %v1397
        %v1404 = vadd.f32 %v1258, %v1399
        %v1405 = vmul.f32 %v1401, 0.5
        %v1406 = vtanh.pop %v1405
        %v1407 = vadd.f32 %v1406, 1.0
        %v1408 = vmul.f32 %v1407, 0.5
        %v1409 = vmul.f32 %v1402, 0.5
        %v1410 = vtanh.pop %v1409
        %v1411 = vadd.f32 %v1410, 1.0
        %v1412 = vmul.f32 %v1411, 0.5
        %v1413 = vtanh.pop %v1403
        %v1414 = vmul.f32 %v1404, 0.5
        %v1415 = vtanh.pop %v1414
        %v1416 = vadd.f32 %v1415, 1.0
        %v1417 = vmul.f32 %v1416, 0.5
        %v1418 = vmul.f32 %v1412, %v1254
        %v1419 = vmul.f32 %v1408, %v1413
        %v1420 = vadd.f32 %v1418, %v1419
        %v1421 = vtanh.pop %v1420
        %v1422 = vmul.f32 %v1417, %v1421
        %s1423 = scalar_lea.vmem [#allocation14], %s438
        %1424 = vst [vmem:[%s1423] sm:$0xff] %v1422
        %v1425 = vld [vmem:[#allocation4 + $0x20] sm:$0xff]
        %v1426 = vld [vmem:[#allocation4 + $0x28] sm:$0xff]
        %v1427 = vld [vmem:[#allocation4 + $0x30] sm:$0xff]
        %v1428 = vld [vmem:[#allocation4 + $0x38] sm:$0xff]
        %1429 = vmatprep.subr.mxu0 %v1250
        %1430 = vmatpush1.msra.mxu0 %v1249
        %1431 = vmatprep.subr.mxu0 %v1246
        %1432 = vmatpush1.msra.mxu0 %v1245
        %1433 = vmatprep.subr.mxu0 %v1242
        %1434 = vmatpush1.msra.mxu0 %v1241
        %1435 = vmatprep.subr.mxu0 %v1238
        %1436 = vmatpush1.msra.mxu0 %v1237
        %1437 = vmatprep.subr.mxu0 %v1234
        %1438 = vmatpush1.msra.mxu0 %v1233
        %1439 = vmatprep.subr.mxu0 %v1230
        %1440 = vmatpush1.msra.mxu0 %v1229
        %1441 = vmatprep.subr.mxu0 %v1226
        %1442 = vmatpush1.msra.mxu0 %v1225
        %1443 = vmatprep.subr.mxu0 %v1222
        %1444 = vmatpush1.msra.mxu0 %v1221
        %1445 = vmatprep.subr.mxu0 %v1218
        %1446 = vmatpush1.msra.mxu0 %v1217
        %1447 = vmatprep.subr.mxu0 %v1214
        %1448 = vmatpush1.msra.mxu0 %v1213
        %1449 = vmatprep.subr.mxu0 %v1210
        %1450 = vmatpush1.msra.mxu0 %v1209
        %1451 = vmatprep.subr.mxu0 %v1206
        %1452 = vmatpush1.msra.mxu0 %v1205
        %1453 = vmatprep.subr.mxu0 %v1202
        %1454 = vmatpush1.msra.mxu0 %v1201
        %1455 = vmatprep.subr.mxu0 %v1198
        %1456 = vmatpush1.msra.mxu0 %v1197
        %1457 = vmatprep.subr.mxu0 %v1194
        %1458 = vmatpush1.msra.mxu0 %v1193
        %1459 = vmatprep.subr.mxu0 %v1190
        %1460 = vmatpush1.msra.mxu0 %v1189
        %1461 = vmatprep.subr.mxu0 0.0
        %1462 = vmatpush2.msra.mxu0 0.0
        %1463 = vmatprep.subr.mxu0 0.0
        %1464 = vmatpush2.msra.mxu0 0.0
        %1465 = vmatprep.subr.mxu0 0.0
        %1466 = vmatpush2.msra.mxu0 0.0
        %1467 = vmatprep.subr.mxu0 0.0
        %1468 = vmatpush2.msra.mxu0 0.0
        %1469 = vmatprep.subr.mxu0 0.0
        %1470 = vmatpush2.msra.mxu0 0.0
        %1471 = vmatprep.subr.mxu0 0.0
        %1472 = vmatpush2.msra.mxu0 0.0
        %1473 = vmatprep.subr.mxu0 0.0
        %1474 = vmatpush2.msra.mxu0 0.0
        %1475 = vmatprep.subr.mxu0 0.0
        %1476 = vmatpush2.msra.mxu0 0.0
        %1477 = vmatprep.subr.mxu0 0.0
        %1478 = vmatpush2.msra.mxu0 0.0
        %1479 = vmatprep.subr.mxu0 0.0
        %1480 = vmatpush2.msra.mxu0 0.0
        %1481 = vmatprep.subr.mxu0 0.0
        %1482 = vmatpush2.msra.mxu0 0.0
        %1483 = vmatprep.subr.mxu0 0.0
        %1484 = vmatpush2.msra.mxu0 0.0
        %1485 = vmatprep.subr.mxu0 0.0
        %1486 = vmatpush2.msra.mxu0 0.0
        %1487 = vmatprep.subr.mxu0 0.0
        %1488 = vmatpush2.msra.mxu0 0.0
        %1489 = vmatprep.subr.mxu0 0.0
        %1490 = vmatpush2.msra.mxu0 0.0
        %1491 = vmatprep.subr.mxu0 0.0
        %1492 = vmatpush2.msra.mxu0 0.0
        %1493 = vmatprep.mubr.f32.mxu0 0.0
        %1494 = vmatmul.mubr.f32.gmra.mxu0 %v1422
        %v1495 = vpop.f32.mrf.mxu0
        %v1496 = vadd.f32 0.0, %v1495
        %v1497 = vpop.f32.mrf.mxu0
        %v1498 = vadd.f32 0.0, %v1497
        %1499 = vdwg.mxu0
        %1500 = vmatprep.subr.mxu0 %v1252
        %1501 = vmatpush1.msra.mxu0 %v1251
        %1502 = vmatprep.subr.mxu0 %v1248
        %1503 = vmatpush1.msra.mxu0 %v1247
        %1504 = vmatprep.subr.mxu0 %v1244
        %1505 = vmatpush1.msra.mxu0 %v1243
        %1506 = vmatprep.subr.mxu0 %v1240
        %1507 = vmatpush1.msra.mxu0 %v1239
        %1508 = vmatprep.subr.mxu0 %v1236
        %1509 = vmatpush1.msra.mxu0 %v1235
        %1510 = vmatprep.subr.mxu0 %v1232
        %1511 = vmatpush1.msra.mxu0 %v1231
        %1512 = vmatprep.subr.mxu0 %v1228
        %1513 = vmatpush1.msra.mxu0 %v1227
        %1514 = vmatprep.subr.mxu0 %v1224
        %1515 = vmatpush1.msra.mxu0 %v1223
        %1516 = vmatprep.subr.mxu0 %v1220
        %1517 = vmatpush1.msra.mxu0 %v1219
        %1518 = vmatprep.subr.mxu0 %v1216
        %1519 = vmatpush1.msra.mxu0 %v1215
        %1520 = vmatprep.subr.mxu0 %v1212
        %1521 = vmatpush1.msra.mxu0 %v1211
        %1522 = vmatprep.subr.mxu0 %v1208
        %1523 = vmatpush1.msra.mxu0 %v1207
        %1524 = vmatprep.subr.mxu0 %v1204
        %1525 = vmatpush1.msra.mxu0 %v1203
        %1526 = vmatprep.subr.mxu0 %v1200
        %1527 = vmatpush1.msra.mxu0 %v1199
        %1528 = vmatprep.subr.mxu0 %v1196
        %1529 = vmatpush1.msra.mxu0 %v1195
        %1530 = vmatprep.subr.mxu0 %v1192
        %1531 = vmatpush1.msra.mxu0 %v1191
        %1532 = vmatprep.subr.mxu0 0.0
        %1533 = vmatpush2.msra.mxu0 0.0
        %1534 = vmatprep.subr.mxu0 0.0
        %1535 = vmatpush2.msra.mxu0 0.0
        %1536 = vmatprep.subr.mxu0 0.0
        %1537 = vmatpush2.msra.mxu0 0.0
        %1538 = vmatprep.subr.mxu0 0.0
        %1539 = vmatpush2.msra.mxu0 0.0
        %1540 = vmatprep.subr.mxu0 0.0
        %1541 = vmatpush2.msra.mxu0 0.0
        %1542 = vmatprep.subr.mxu0 0.0
        %1543 = vmatpush2.msra.mxu0 0.0
        %1544 = vmatprep.subr.mxu0 0.0
        %1545 = vmatpush2.msra.mxu0 0.0
        %1546 = vmatprep.subr.mxu0 0.0
        %1547 = vmatpush2.msra.mxu0 0.0
        %1548 = vmatprep.subr.mxu0 0.0
        %1549 = vmatpush2.msra.mxu0 0.0
        %1550 = vmatprep.subr.mxu0 0.0
        %1551 = vmatpush2.msra.mxu0 0.0
        %1552 = vmatprep.subr.mxu0 0.0
        %1553 = vmatpush2.msra.mxu0 0.0
        %1554 = vmatprep.subr.mxu0 0.0
        %1555 = vmatpush2.msra.mxu0 0.0
        %1556 = vmatprep.subr.mxu0 0.0
        %1557 = vmatpush2.msra.mxu0 0.0
        %1558 = vmatprep.subr.mxu0 0.0
        %1559 = vmatpush2.msra.mxu0 0.0
        %1560 = vmatprep.subr.mxu0 0.0
        %1561 = vmatpush2.msra.mxu0 0.0
        %1562 = vmatprep.subr.mxu0 0.0
        %1563 = vmatpush2.msra.mxu0 0.0
        %1564 = vmatprep.mubr.f32.mxu0 0.0
        %1565 = vmatmul.mubr.f32.gmra.mxu0 %v1422
        %v1566 = vpop.f32.mrf.mxu0
        %v1567 = vadd.f32 0.0, %v1566
        %v1568 = vpop.f32.mrf.mxu0
        %v1569 = vadd.f32 0.0, %v1568
        %1570 = vdwg.mxu0
        %v1571 = vadd.f32 %v1425, %v1496
        %v1572 = vadd.f32 %v1426, %v1498
        %v1573 = vadd.f32 %v1427, %v1567
        %v1574 = vadd.f32 %v1428, %v1569
        %v1575 = vmul.f32 %v1571, 0.5
        %v1576 = vtanh.pop %v1575
        %v1577 = vadd.f32 %v1576, 1.0
        %v1578 = vmul.f32 %v1577, 0.5
        %v1579 = vmul.f32 %v1572, 0.5
        %v1580 = vtanh.pop %v1579
        %v1581 = vadd.f32 %v1580, 1.0
        %v1582 = vmul.f32 %v1581, 0.5
        %v1583 = vtanh.pop %v1573
        %v1584 = vmul.f32 %v1574, 0.5
        %v1585 = vtanh.pop %v1584
        %v1586 = vadd.f32 %v1585, 1.0
        %v1587 = vmul.f32 %v1586, 0.5
        %v1588 = vmul.f32 %v1582, %v1420
        %v1589 = vmul.f32 %v1578, %v1583
        %v1590 = vadd.f32 %v1588, %v1589
        %v1591 = vtanh.pop %v1590
        %v1592 = vmul.f32 %v1587, %v1591
        %s1593 = sadd.s32 %s438, 8
        %s1594 = scalar_lea.vmem [#allocation14], %s1593
        %1595 = vst [vmem:[%s1594] sm:$0xff] %v1592
        %v1596 = vld [vmem:[#allocation4 + $0x40] sm:$0xff]
        %v1597 = vld [vmem:[#allocation4 + $0x48] sm:$0xff]
        %v1598 = vld [vmem:[#allocation4 + $0x50] sm:$0xff]
        %v1599 = vld [vmem:[#allocation4 + $0x58] sm:$0xff]
        %1600 = vmatprep.subr.mxu0 %v1250
        %1601 = vmatpush1.msra.mxu0 %v1249
        %1602 = vmatprep.subr.mxu0 %v1246
        %1603 = vmatpush1.msra.mxu0 %v1245
        %1604 = vmatprep.subr.mxu0 %v1242
        %1605 = vmatpush1.msra.mxu0 %v1241
        %1606 = vmatprep.subr.mxu0 %v1238
        %1607 = vmatpush1.msra.mxu0 %v1237
        %1608 = vmatprep.subr.mxu0 %v1234
        %1609 = vmatpush1.msra.mxu0 %v1233
        %1610 = vmatprep.subr.mxu0 %v1230
        %1611 = vmatpush1.msra.mxu0 %v1229
        %1612 = vmatprep.subr.mxu0 %v1226
        %1613 = vmatpush1.msra.mxu0 %v1225
        %1614 = vmatprep.subr.mxu0 %v1222
        %1615 = vmatpush1.msra.mxu0 %v1221
        %1616 = vmatprep.subr.mxu0 %v1218
        %1617 = vmatpush1.msra.mxu0 %v1217
        %1618 = vmatprep.subr.mxu0 %v1214
        %1619 = vmatpush1.msra.mxu0 %v1213
        %1620 = vmatprep.subr.mxu0 %v1210
        %1621 = vmatpush1.msra.mxu0 %v1209
        %1622 = vmatprep.subr.mxu0 %v1206
        %1623 = vmatpush1.msra.mxu0 %v1205
        %1624 = vmatprep.subr.mxu0 %v1202
        %1625 = vmatpush1.msra.mxu0 %v1201
        %1626 = vmatprep.subr.mxu0 %v1198
        %1627 = vmatpush1.msra.mxu0 %v1197
        %1628 = vmatprep.subr.mxu0 %v1194
        %1629 = vmatpush1.msra.mxu0 %v1193
        %1630 = vmatprep.subr.mxu0 %v1190
        %1631 = vmatpush1.msra.mxu0 %v1189
        %1632 = vmatprep.subr.mxu0 0.0
        %1633 = vmatpush2.msra.mxu0 0.0
        %1634 = vmatprep.subr.mxu0 0.0
        %1635 = vmatpush2.msra.mxu0 0.0
        %1636 = vmatprep.subr.mxu0 0.0
        %1637 = vmatpush2.msra.mxu0 0.0
        %1638 = vmatprep.subr.mxu0 0.0
        %1639 = vmatpush2.msra.mxu0 0.0
        %1640 = vmatprep.subr.mxu0 0.0
        %1641 = vmatpush2.msra.mxu0 0.0
        %1642 = vmatprep.subr.mxu0 0.0
        %1643 = vmatpush2.msra.mxu0 0.0
        %1644 = vmatprep.subr.mxu0 0.0
        %1645 = vmatpush2.msra.mxu0 0.0
        %1646 = vmatprep.subr.mxu0 0.0
        %1647 = vmatpush2.msra.mxu0 0.0
        %1648 = vmatprep.subr.mxu0 0.0
        %1649 = vmatpush2.msra.mxu0 0.0
        %1650 = vmatprep.subr.mxu0 0.0
        %1651 = vmatpush2.msra.mxu0 0.0
        %1652 = vmatprep.subr.mxu0 0.0
        %1653 = vmatpush2.msra.mxu0 0.0
        %1654 = vmatprep.subr.mxu0 0.0
        %1655 = vmatpush2.msra.mxu0 0.0
        %1656 = vmatprep.subr.mxu0 0.0
        %1657 = vmatpush2.msra.mxu0 0.0
        %1658 = vmatprep.subr.mxu0 0.0
        %1659 = vmatpush2.msra.mxu0 0.0
        %1660 = vmatprep.subr.mxu0 0.0
        %1661 = vmatpush2.msra.mxu0 0.0
        %1662 = vmatprep.subr.mxu0 0.0
        %1663 = vmatpush2.msra.mxu0 0.0
        %1664 = vmatprep.mubr.f32.mxu0 0.0
        %1665 = vmatmul.mubr.f32.gmra.mxu0 %v1592
        %v1666 = vpop.f32.mrf.mxu0
        %v1667 = vadd.f32 0.0, %v1666
        %v1668 = vpop.f32.mrf.mxu0
        %v1669 = vadd.f32 0.0, %v1668
        %1670 = vdwg.mxu0
        %1671 = vmatprep.subr.mxu0 %v1252
        %1672 = vmatpush1.msra.mxu0 %v1251
        %1673 = vmatprep.subr.mxu0 %v1248
        %1674 = vmatpush1.msra.mxu0 %v1247
        %1675 = vmatprep.subr.mxu0 %v1244
        %1676 = vmatpush1.msra.mxu0 %v1243
        %1677 = vmatprep.subr.mxu0 %v1240
        %1678 = vmatpush1.msra.mxu0 %v1239
        %1679 = vmatprep.subr.mxu0 %v1236
        %1680 = vmatpush1.msra.mxu0 %v1235
        %1681 = vmatprep.subr.mxu0 %v1232
        %1682 = vmatpush1.msra.mxu0 %v1231
        %1683 = vmatprep.subr.mxu0 %v1228
        %1684 = vmatpush1.msra.mxu0 %v1227
        %1685 = vmatprep.subr.mxu0 %v1224
        %1686 = vmatpush1.msra.mxu0 %v1223
        %1687 = vmatprep.subr.mxu0 %v1220
        %1688 = vmatpush1.msra.mxu0 %v1219
        %1689 = vmatprep.subr.mxu0 %v1216
        %1690 = vmatpush1.msra.mxu0 %v1215
        %1691 = vmatprep.subr.mxu0 %v1212
        %1692 = vmatpush1.msra.mxu0 %v1211
        %1693 = vmatprep.subr.mxu0 %v1208
        %1694 = vmatpush1.msra.mxu0 %v1207
        %1695 = vmatprep.subr.mxu0 %v1204
        %1696 = vmatpush1.msra.mxu0 %v1203
        %1697 = vmatprep.subr.mxu0 %v1200
        %1698 = vmatpush1.msra.mxu0 %v1199
        %1699 = vmatprep.subr.mxu0 %v1196
        %1700 = vmatpush1.msra.mxu0 %v1195
        %1701 = vmatprep.subr.mxu0 %v1192
        %1702 = vmatpush1.msra.mxu0 %v1191
        %1703 = vmatprep.subr.mxu0 0.0
        %1704 = vmatpush2.msra.mxu0 0.0
        %1705 = vmatprep.subr.mxu0 0.0
        %1706 = vmatpush2.msra.mxu0 0.0
        %1707 = vmatprep.subr.mxu0 0.0
        %1708 = vmatpush2.msra.mxu0 0.0
        %1709 = vmatprep.subr.mxu0 0.0
        %1710 = vmatpush2.msra.mxu0 0.0
        %1711 = vmatprep.subr.mxu0 0.0
        %1712 = vmatpush2.msra.mxu0 0.0
        %1713 = vmatprep.subr.mxu0 0.0
        %1714 = vmatpush2.msra.mxu0 0.0
        %1715 = vmatprep.subr.mxu0 0.0
        %1716 = vmatpush2.msra.mxu0 0.0
        %1717 = vmatprep.subr.mxu0 0.0
        %1718 = vmatpush2.msra.mxu0 0.0
        %1719 = vmatprep.subr.mxu0 0.0
        %1720 = vmatpush2.msra.mxu0 0.0
        %1721 = vmatprep.subr.mxu0 0.0
        %1722 = vmatpush2.msra.mxu0 0.0
        %1723 = vmatprep.subr.mxu0 0.0
        %1724 = vmatpush2.msra.mxu0 0.0
        %1725 = vmatprep.subr.mxu0 0.0
        %1726 = vmatpush2.msra.mxu0 0.0
        %1727 = vmatprep.subr.mxu0 0.0
        %1728 = vmatpush2.msra.mxu0 0.0
        %1729 = vmatprep.subr.mxu0 0.0
        %1730 = vmatpush2.msra.mxu0 0.0
        %1731 = vmatprep.subr.mxu0 0.0
        %1732 = vmatpush2.msra.mxu0 0.0
        %1733 = vmatprep.subr.mxu0 0.0
        %1734 = vmatpush2.msra.mxu0 0.0
        %1735 = vmatprep.mubr.f32.mxu0 0.0
        %1736 = vmatmul.mubr.f32.gmra.mxu0 %v1592
        %v1737 = vpop.f32.mrf.mxu0
        %v1738 = vadd.f32 0.0, %v1737
        %v1739 = vpop.f32.mrf.mxu0
        %v1740 = vadd.f32 0.0, %v1739
        %1741 = vdwg.mxu0
        %v1742 = vadd.f32 %v1596, %v1667
        %v1743 = vadd.f32 %v1597, %v1669
        %v1744 = vadd.f32 %v1598, %v1738
        %v1745 = vadd.f32 %v1599, %v1740
        %v1746 = vmul.f32 %v1742, 0.5
        %v1747 = vtanh.pop %v1746
        %v1748 = vadd.f32 %v1747, 1.0
        %v1749 = vmul.f32 %v1748, 0.5
        %v1750 = vmul.f32 %v1743, 0.5
        %v1751 = vtanh.pop %v1750
        %v1752 = vadd.f32 %v1751, 1.0
        %v1753 = vmul.f32 %v1752, 0.5
        %v1754 = vtanh.pop %v1744
        %v1755 = vmul.f32 %v1745, 0.5
        %v1756 = vtanh.pop %v1755
        %v1757 = vadd.f32 %v1756, 1.0
        %v1758 = vmul.f32 %v1757, 0.5
        %v1759 = vmul.f32 %v1753, %v1590
        %v1760 = vmul.f32 %v1749, %v1754
        %v1761 = vadd.f32 %v1759, %v1760
        %v1762 = vtanh.pop %v1761
        %v1763 = vmul.f32 %v1758, %v1762
        %s1764 = sadd.s32 %s438, 16
        %s1765 = scalar_lea.vmem [#allocation14], %s1764
        %1766 = vst [vmem:[%s1765] sm:$0xff] %v1763
        %v1767 = vld [vmem:[#allocation4 + $0x60] sm:$0xff]
        %v1768 = vld [vmem:[#allocation4 + $0x68] sm:$0xff]
        %v1769 = vld [vmem:[#allocation4 + $0x70] sm:$0xff]
        %v1770 = vld [vmem:[#allocation4 + $0x78] sm:$0xff]
        %1771 = vmatprep.subr.mxu0 %v1250
        %1772 = vmatpush1.msra.mxu0 %v1249
        %1773 = vmatprep.subr.mxu0 %v1246
        %1774 = vmatpush1.msra.mxu0 %v1245
        %1775 = vmatprep.subr.mxu0 %v1242
        %1776 = vmatpush1.msra.mxu0 %v1241
        %1777 = vmatprep.subr.mxu0 %v1238
        %1778 = vmatpush1.msra.mxu0 %v1237
        %1779 = vmatprep.subr.mxu0 %v1234
        %1780 = vmatpush1.msra.mxu0 %v1233
        %1781 = vmatprep.subr.mxu0 %v1230
        %1782 = vmatpush1.msra.mxu0 %v1229
        %1783 = vmatprep.subr.mxu0 %v1226
        %1784 = vmatpush1.msra.mxu0 %v1225
        %1785 = vmatprep.subr.mxu0 %v1222
        %1786 = vmatpush1.msra.mxu0 %v1221
        %1787 = vmatprep.subr.mxu0 %v1218
        %1788 = vmatpush1.msra.mxu0 %v1217
        %1789 = vmatprep.subr.mxu0 %v1214
        %1790 = vmatpush1.msra.mxu0 %v1213
        %1791 = vmatprep.subr.mxu0 %v1210
        %1792 = vmatpush1.msra.mxu0 %v1209
        %1793 = vmatprep.subr.mxu0 %v1206
        %1794 = vmatpush1.msra.mxu0 %v1205
        %1795 = vmatprep.subr.mxu0 %v1202
        %1796 = vmatpush1.msra.mxu0 %v1201
        %1797 = vmatprep.subr.mxu0 %v1198
        %1798 = vmatpush1.msra.mxu0 %v1197
        %1799 = vmatprep.subr.mxu0 %v1194
        %1800 = vmatpush1.msra.mxu0 %v1193
        %1801 = vmatprep.subr.mxu0 %v1190
        %1802 = vmatpush1.msra.mxu0 %v1189
        %1803 = vmatprep.subr.mxu0 0.0
        %1804 = vmatpush2.msra.mxu0 0.0
        %1805 = vmatprep.subr.mxu0 0.0
        %1806 = vmatpush2.msra.mxu0 0.0
        %1807 = vmatprep.subr.mxu0 0.0
        %1808 = vmatpush2.msra.mxu0 0.0
        %1809 = vmatprep.subr.mxu0 0.0
        %1810 = vmatpush2.msra.mxu0 0.0
        %1811 = vmatprep.subr.mxu0 0.0
        %1812 = vmatpush2.msra.mxu0 0.0
        %1813 = vmatprep.subr.mxu0 0.0
        %1814 = vmatpush2.msra.mxu0 0.0
        %1815 = vmatprep.subr.mxu0 0.0
        %1816 = vmatpush2.msra.mxu0 0.0
        %1817 = vmatprep.subr.mxu0 0.0
        %1818 = vmatpush2.msra.mxu0 0.0
        %1819 = vmatprep.subr.mxu0 0.0
        %1820 = vmatpush2.msra.mxu0 0.0
        %1821 = vmatprep.subr.mxu0 0.0
        %1822 = vmatpush2.msra.mxu0 0.0
        %1823 = vmatprep.subr.mxu0 0.0
        %1824 = vmatpush2.msra.mxu0 0.0
        %1825 = vmatprep.subr.mxu0 0.0
        %1826 = vmatpush2.msra.mxu0 0.0
        %1827 = vmatprep.subr.mxu0 0.0
        %1828 = vmatpush2.msra.mxu0 0.0
        %1829 = vmatprep.subr.mxu0 0.0
        %1830 = vmatpush2.msra.mxu0 0.0
        %1831 = vmatprep.subr.mxu0 0.0
        %1832 = vmatpush2.msra.mxu0 0.0
        %1833 = vmatprep.subr.mxu0 0.0
        %1834 = vmatpush2.msra.mxu0 0.0
        %1835 = vmatprep.mubr.f32.mxu0 0.0
        %1836 = vmatmul.mubr.f32.gmra.mxu0 %v1763
        %v1837 = vpop.f32.mrf.mxu0
        %v1838 = vadd.f32 0.0, %v1837
        %v1839 = vpop.f32.mrf.mxu0
        %v1840 = vadd.f32 0.0, %v1839
        %1841 = vdwg.mxu0
        %1842 = vmatprep.subr.mxu0 %v1252
        %1843 = vmatpush1.msra.mxu0 %v1251
        %1844 = vmatprep.subr.mxu0 %v1248
        %1845 = vmatpush1.msra.mxu0 %v1247
        %1846 = vmatprep.subr.mxu0 %v1244
        %1847 = vmatpush1.msra.mxu0 %v1243
        %1848 = vmatprep.subr.mxu0 %v1240
        %1849 = vmatpush1.msra.mxu0 %v1239
        %1850 = vmatprep.subr.mxu0 %v1236
        %1851 = vmatpush1.msra.mxu0 %v1235
        %1852 = vmatprep.subr.mxu0 %v1232
        %1853 = vmatpush1.msra.mxu0 %v1231
        %1854 = vmatprep.subr.mxu0 %v1228
        %1855 = vmatpush1.msra.mxu0 %v1227
        %1856 = vmatprep.subr.mxu0 %v1224
        %1857 = vmatpush1.msra.mxu0 %v1223
        %1858 = vmatprep.subr.mxu0 %v1220
        %1859 = vmatpush1.msra.mxu0 %v1219
        %1860 = vmatprep.subr.mxu0 %v1216
        %1861 = vmatpush1.msra.mxu0 %v1215
        %1862 = vmatprep.subr.mxu0 %v1212
        %1863 = vmatpush1.msra.mxu0 %v1211
        %1864 = vmatprep.subr.mxu0 %v1208
        %1865 = vmatpush1.msra.mxu0 %v1207
        %1866 = vmatprep.subr.mxu0 %v1204
        %1867 = vmatpush1.msra.mxu0 %v1203
        %1868 = vmatprep.subr.mxu0 %v1200
        %1869 = vmatpush1.msra.mxu0 %v1199
        %1870 = vmatprep.subr.mxu0 %v1196
        %1871 = vmatpush1.msra.mxu0 %v1195
        %1872 = vmatprep.subr.mxu0 %v1192
        %1873 = vmatpush1.msra.mxu0 %v1191
        %1874 = vmatprep.subr.mxu0 0.0
        %1875 = vmatpush2.msra.mxu0 0.0
        %1876 = vmatprep.subr.mxu0 0.0
        %1877 = vmatpush2.msra.mxu0 0.0
        %1878 = vmatprep.subr.mxu0 0.0
        %1879 = vmatpush2.msra.mxu0 0.0
        %1880 = vmatprep.subr.mxu0 0.0
        %1881 = vmatpush2.msra.mxu0 0.0
        %1882 = vmatprep.subr.mxu0 0.0
        %1883 = vmatpush2.msra.mxu0 0.0
        %1884 = vmatprep.subr.mxu0 0.0
        %1885 = vmatpush2.msra.mxu0 0.0
        %1886 = vmatprep.subr.mxu0 0.0
        %1887 = vmatpush2.msra.mxu0 0.0
        %1888 = vmatprep.subr.mxu0 0.0
        %1889 = vmatpush2.msra.mxu0 0.0
        %1890 = vmatprep.subr.mxu0 0.0
        %1891 = vmatpush2.msra.mxu0 0.0
        %1892 = vmatprep.subr.mxu0 0.0
        %1893 = vmatpush2.msra.mxu0 0.0
        %1894 = vmatprep.subr.mxu0 0.0
        %1895 = vmatpush2.msra.mxu0 0.0
        %1896 = vmatprep.subr.mxu0 0.0
        %1897 = vmatpush2.msra.mxu0 0.0
        %1898 = vmatprep.subr.mxu0 0.0
        %1899 = vmatpush2.msra.mxu0 0.0
        %1900 = vmatprep.subr.mxu0 0.0
        %1901 = vmatpush2.msra.mxu0 0.0
        %1902 = vmatprep.subr.mxu0 0.0
        %1903 = vmatpush2.msra.mxu0 0.0
        %1904 = vmatprep.subr.mxu0 0.0
        %1905 = vmatpush2.msra.mxu0 0.0
        %1906 = vmatprep.mubr.f32.mxu0 0.0
        %1907 = vmatmul.mubr.f32.gmra.mxu0 %v1763
        %v1908 = vpop.f32.mrf.mxu0
        %v1909 = vadd.f32 0.0, %v1908
        %v1910 = vpop.f32.mrf.mxu0
        %v1911 = vadd.f32 0.0, %v1910
        %1912 = vdwg.mxu0
        %v1913 = vadd.f32 %v1767, %v1838
        %v1914 = vadd.f32 %v1768, %v1840
        %v1915 = vadd.f32 %v1769, %v1909
        %v1916 = vadd.f32 %v1770, %v1911
        %v1917 = vmul.f32 %v1913, 0.5
        %v1918 = vtanh.pop %v1917
        %v1919 = vadd.f32 %v1918, 1.0
        %v1920 = vmul.f32 %v1919, 0.5
        %v1921 = vmul.f32 %v1914, 0.5
        %v1922 = vtanh.pop %v1921
        %v1923 = vadd.f32 %v1922, 1.0
        %v1924 = vmul.f32 %v1923, 0.5
        %v1925 = vtanh.pop %v1915
        %v1926 = vmul.f32 %v1916, 0.5
        %v1927 = vtanh.pop %v1926
        %v1928 = vadd.f32 %v1927, 1.0
        %v1929 = vmul.f32 %v1928, 0.5
        %v1930 = vmul.f32 %v1924, %v1761
        %v1931 = vmul.f32 %v1920, %v1925
        %v1932 = vadd.f32 %v1930, %v1931
        %v1933 = vtanh.pop %v1932
        %v1934 = vmul.f32 %v1929, %v1933
        %s1935 = sadd.s32 %s438, 24
        %s1936 = scalar_lea.vmem [#allocation14], %s1935
        %1937 = vst [vmem:[%s1936] sm:$0xff] %v1934
        %v1938 = vld [vmem:[#allocation4 + $0x80] sm:$0xff]
        %v1939 = vld [vmem:[#allocation4 + $0x88] sm:$0xff]
        %v1940 = vld [vmem:[#allocation4 + $0x90] sm:$0xff]
        %v1941 = vld [vmem:[#allocation4 + $0x98] sm:$0xff]
        %1942 = vmatprep.subr.mxu0 %v1250
        %1943 = vmatpush1.msra.mxu0 %v1249
        %1944 = vmatprep.subr.mxu0 %v1246
        %1945 = vmatpush1.msra.mxu0 %v1245
        %1946 = vmatprep.subr.mxu0 %v1242
        %1947 = vmatpush1.msra.mxu0 %v1241
        %1948 = vmatprep.subr.mxu0 %v1238
        %1949 = vmatpush1.msra.mxu0 %v1237
        %1950 = vmatprep.subr.mxu0 %v1234
        %1951 = vmatpush1.msra.mxu0 %v1233
        %1952 = vmatprep.subr.mxu0 %v1230
        %1953 = vmatpush1.msra.mxu0 %v1229
        %1954 = vmatprep.subr.mxu0 %v1226
        %1955 = vmatpush1.msra.mxu0 %v1225
        %1956 = vmatprep.subr.mxu0 %v1222
        %1957 = vmatpush1.msra.mxu0 %v1221
        %1958 = vmatprep.subr.mxu0 %v1218
        %1959 = vmatpush1.msra.mxu0 %v1217
        %1960 = vmatprep.subr.mxu0 %v1214
        %1961 = vmatpush1.msra.mxu0 %v1213
        %1962 = vmatprep.subr.mxu0 %v1210
        %1963 = vmatpush1.msra.mxu0 %v1209
        %1964 = vmatprep.subr.mxu0 %v1206
        %1965 = vmatpush1.msra.mxu0 %v1205
        %1966 = vmatprep.subr.mxu0 %v1202
        %1967 = vmatpush1.msra.mxu0 %v1201
        %1968 = vmatprep.subr.mxu0 %v1198
        %1969 = vmatpush1.msra.mxu0 %v1197
        %1970 = vmatprep.subr.mxu0 %v1194
        %1971 = vmatpush1.msra.mxu0 %v1193
        %1972 = vmatprep.subr.mxu0 %v1190
        %1973 = vmatpush1.msra.mxu0 %v1189
        %1974 = vmatprep.subr.mxu0 0.0
        %1975 = vmatpush2.msra.mxu0 0.0
        %1976 = vmatprep.subr.mxu0 0.0
        %1977 = vmatpush2.msra.mxu0 0.0
        %1978 = vmatprep.subr.mxu0 0.0
        %1979 = vmatpush2.msra.mxu0 0.0
        %1980 = vmatprep.subr.mxu0 0.0
        %1981 = vmatpush2.msra.mxu0 0.0
        %1982 = vmatprep.subr.mxu0 0.0
        %1983 = vmatpush2.msra.mxu0 0.0
        %1984 = vmatprep.subr.mxu0 0.0
        %1985 = vmatpush2.msra.mxu0 0.0
        %1986 = vmatprep.subr.mxu0 0.0
        %1987 = vmatpush2.msra.mxu0 0.0
        %1988 = vmatprep.subr.mxu0 0.0
        %1989 = vmatpush2.msra.mxu0 0.0
        %1990 = vmatprep.subr.mxu0 0.0
        %1991 = vmatpush2.msra.mxu0 0.0
        %1992 = vmatprep.subr.mxu0 0.0
        %1993 = vmatpush2.msra.mxu0 0.0
        %1994 = vmatprep.subr.mxu0 0.0
        %1995 = vmatpush2.msra.mxu0 0.0
        %1996 = vmatprep.subr.mxu0 0.0
        %1997 = vmatpush2.msra.mxu0 0.0
        %1998 = vmatprep.subr.mxu0 0.0
        %1999 = vmatpush2.msra.mxu0 0.0
        %2000 = vmatprep.subr.mxu0 0.0
        %2001 = vmatpush2.msra.mxu0 0.0
        %2002 = vmatprep.subr.mxu0 0.0
        %2003 = vmatpush2.msra.mxu0 0.0
        %2004 = vmatprep.subr.mxu0 0.0
        %2005 = vmatpush2.msra.mxu0 0.0
        %2006 = vmatprep.mubr.f32.mxu0 0.0
        %2007 = vmatmul.mubr.f32.gmra.mxu0 %v1934
        %v2008 = vpop.f32.mrf.mxu0
        %v2009 = vadd.f32 0.0, %v2008
        %v2010 = vpop.f32.mrf.mxu0
        %v2011 = vadd.f32 0.0, %v2010
        %2012 = vdwg.mxu0
        %2013 = vmatprep.subr.mxu0 %v1252
        %2014 = vmatpush1.msra.mxu0 %v1251
        %2015 = vmatprep.subr.mxu0 %v1248
        %2016 = vmatpush1.msra.mxu0 %v1247
        %2017 = vmatprep.subr.mxu0 %v1244
        %2018 = vmatpush1.msra.mxu0 %v1243
        %2019 = vmatprep.subr.mxu0 %v1240
        %2020 = vmatpush1.msra.mxu0 %v1239
        %2021 = vmatprep.subr.mxu0 %v1236
        %2022 = vmatpush1.msra.mxu0 %v1235
        %2023 = vmatprep.subr.mxu0 %v1232
        %2024 = vmatpush1.msra.mxu0 %v1231
        %2025 = vmatprep.subr.mxu0 %v1228
        %2026 = vmatpush1.msra.mxu0 %v1227
        %2027 = vmatprep.subr.mxu0 %v1224
        %2028 = vmatpush1.msra.mxu0 %v1223
        %2029 = vmatprep.subr.mxu0 %v1220
        %2030 = vmatpush1.msra.mxu0 %v1219
        %2031 = vmatprep.subr.mxu0 %v1216
        %2032 = vmatpush1.msra.mxu0 %v1215
        %2033 = vmatprep.subr.mxu0 %v1212
        %2034 = vmatpush1.msra.mxu0 %v1211
        %2035 = vmatprep.subr.mxu0 %v1208
        %2036 = vmatpush1.msra.mxu0 %v1207
        %2037 = vmatprep.subr.mxu0 %v1204
        %2038 = vmatpush1.msra.mxu0 %v1203
        %2039 = vmatprep.subr.mxu0 %v1200
        %2040 = vmatpush1.msra.mxu0 %v1199
        %2041 = vmatprep.subr.mxu0 %v1196
        %2042 = vmatpush1.msra.mxu0 %v1195
        %2043 = vmatprep.subr.mxu0 %v1192
        %2044 = vmatpush1.msra.mxu0 %v1191
        %2045 = vmatprep.subr.mxu0 0.0
        %2046 = vmatpush2.msra.mxu0 0.0
        %2047 = vmatprep.subr.mxu0 0.0
        %2048 = vmatpush2.msra.mxu0 0.0
        %2049 = vmatprep.subr.mxu0 0.0
        %2050 = vmatpush2.msra.mxu0 0.0
        %2051 = vmatprep.subr.mxu0 0.0
        %2052 = vmatpush2.msra.mxu0 0.0
        %2053 = vmatprep.subr.mxu0 0.0
        %2054 = vmatpush2.msra.mxu0 0.0
        %2055 = vmatprep.subr.mxu0 0.0
        %2056 = vmatpush2.msra.mxu0 0.0
        %2057 = vmatprep.subr.mxu0 0.0
        %2058 = vmatpush2.msra.mxu0 0.0
        %2059 = vmatprep.subr.mxu0 0.0
        %2060 = vmatpush2.msra.mxu0 0.0
        %2061 = vmatprep.subr.mxu0 0.0
        %2062 = vmatpush2.msra.mxu0 0.0
        %2063 = vmatprep.subr.mxu0 0.0
        %2064 = vmatpush2.msra.mxu0 0.0
        %2065 = vmatprep.subr.mxu0 0.0
        %2066 = vmatpush2.msra.mxu0 0.0
        %2067 = vmatprep.subr.mxu0 0.0
        %2068 = vmatpush2.msra.mxu0 0.0
        %2069 = vmatprep.subr.mxu0 0.0
        %2070 = vmatpush2.msra.mxu0 0.0
        %2071 = vmatprep.subr.mxu0 0.0
        %2072 = vmatpush2.msra.mxu0 0.0
        %2073 = vmatprep.subr.mxu0 0.0
        %2074 = vmatpush2.msra.mxu0 0.0
        %2075 = vmatprep.subr.mxu0 0.0
        %2076 = vmatpush2.msra.mxu0 0.0
        %2077 = vmatprep.mubr.f32.mxu0 0.0
        %2078 = vmatmul.mubr.f32.gmra.mxu0 %v1934
        %v2079 = vpop.f32.mrf.mxu0
        %v2080 = vadd.f32 0.0, %v2079
        %v2081 = vpop.f32.mrf.mxu0
        %v2082 = vadd.f32 0.0, %v2081
        %2083 = vdwg.mxu0
        %v2084 = vadd.f32 %v1938, %v2009
        %v2085 = vadd.f32 %v1939, %v2011
        %v2086 = vadd.f32 %v1940, %v2080
        %v2087 = vadd.f32 %v1941, %v2082
        %v2088 = vmul.f32 %v2084, 0.5
        %v2089 = vtanh.pop %v2088
        %v2090 = vadd.f32 %v2089, 1.0
        %v2091 = vmul.f32 %v2090, 0.5
        %v2092 = vmul.f32 %v2085, 0.5
        %v2093 = vtanh.pop %v2092
        %v2094 = vadd.f32 %v2093, 1.0
        %v2095 = vmul.f32 %v2094, 0.5
        %v2096 = vtanh.pop %v2086
        %v2097 = vmul.f32 %v2087, 0.5
        %v2098 = vtanh.pop %v2097
        %v2099 = vadd.f32 %v2098, 1.0
        %v2100 = vmul.f32 %v2099, 0.5
        %v2101 = vmul.f32 %v2095, %v1932
        %v2102 = vmul.f32 %v2091, %v2096
        %v2103 = vadd.f32 %v2101, %v2102
        %v2104 = vtanh.pop %v2103
        %v2105 = vmul.f32 %v2100, %v2104
        %s2106 = sadd.s32 %s438, 32
        %s2107 = scalar_lea.vmem [#allocation14], %s2106
        %2108 = vst [vmem:[%s2107] sm:$0xff] %v2105
        %v2109 = vld [vmem:[#allocation4 + $0xa0] sm:$0xff]
        %v2110 = vld [vmem:[#allocation4 + $0xa8] sm:$0xff]
        %v2111 = vld [vmem:[#allocation4 + $0xb0] sm:$0xff]
        %v2112 = vld [vmem:[#allocation4 + $0xb8] sm:$0xff]
        %2113 = vmatprep.subr.mxu0 %v1250
        %2114 = vmatpush1.msra.mxu0 %v1249
        %2115 = vmatprep.subr.mxu0 %v1246
        %2116 = vmatpush1.msra.mxu0 %v1245
        %2117 = vmatprep.subr.mxu0 %v1242
        %2118 = vmatpush1.msra.mxu0 %v1241
        %2119 = vmatprep.subr.mxu0 %v1238
        %2120 = vmatpush1.msra.mxu0 %v1237
        %2121 = vmatprep.subr.mxu0 %v1234
        %2122 = vmatpush1.msra.mxu0 %v1233
        %2123 = vmatprep.subr.mxu0 %v1230
        %2124 = vmatpush1.msra.mxu0 %v1229
        %2125 = vmatprep.subr.mxu0 %v1226
        %2126 = vmatpush1.msra.mxu0 %v1225
        %2127 = vmatprep.subr.mxu0 %v1222
        %2128 = vmatpush1.msra.mxu0 %v1221
        %2129 = vmatprep.subr.mxu0 %v1218
        %2130 = vmatpush1.msra.mxu0 %v1217
        %2131 = vmatprep.subr.mxu0 %v1214
        %2132 = vmatpush1.msra.mxu0 %v1213
        %2133 = vmatprep.subr.mxu0 %v1210
        %2134 = vmatpush1.msra.mxu0 %v1209
        %2135 = vmatprep.subr.mxu0 %v1206
        %2136 = vmatpush1.msra.mxu0 %v1205
        %2137 = vmatprep.subr.mxu0 %v1202
        %2138 = vmatpush1.msra.mxu0 %v1201
        %2139 = vmatprep.subr.mxu0 %v1198
        %2140 = vmatpush1.msra.mxu0 %v1197
        %2141 = vmatprep.subr.mxu0 %v1194
        %2142 = vmatpush1.msra.mxu0 %v1193
        %2143 = vmatprep.subr.mxu0 %v1190
        %2144 = vmatpush1.msra.mxu0 %v1189
        %2145 = vmatprep.subr.mxu0 0.0
        %2146 = vmatpush2.msra.mxu0 0.0
        %2147 = vmatprep.subr.mxu0 0.0
        %2148 = vmatpush2.msra.mxu0 0.0
        %2149 = vmatprep.subr.mxu0 0.0
        %2150 = vmatpush2.msra.mxu0 0.0
        %2151 = vmatprep.subr.mxu0 0.0
        %2152 = vmatpush2.msra.mxu0 0.0
        %2153 = vmatprep.subr.mxu0 0.0
        %2154 = vmatpush2.msra.mxu0 0.0
        %2155 = vmatprep.subr.mxu0 0.0
        %2156 = vmatpush2.msra.mxu0 0.0
        %2157 = vmatprep.subr.mxu0 0.0
        %2158 = vmatpush2.msra.mxu0 0.0
        %2159 = vmatprep.subr.mxu0 0.0
        %2160 = vmatpush2.msra.mxu0 0.0
        %2161 = vmatprep.subr.mxu0 0.0
        %2162 = vmatpush2.msra.mxu0 0.0
        %2163 = vmatprep.subr.mxu0 0.0
        %2164 = vmatpush2.msra.mxu0 0.0
        %2165 = vmatprep.subr.mxu0 0.0
        %2166 = vmatpush2.msra.mxu0 0.0
        %2167 = vmatprep.subr.mxu0 0.0
        %2168 = vmatpush2.msra.mxu0 0.0
        %2169 = vmatprep.subr.mxu0 0.0
        %2170 = vmatpush2.msra.mxu0 0.0
        %2171 = vmatprep.subr.mxu0 0.0
        %2172 = vmatpush2.msra.mxu0 0.0
        %2173 = vmatprep.subr.mxu0 0.0
        %2174 = vmatpush2.msra.mxu0 0.0
        %2175 = vmatprep.subr.mxu0 0.0
        %2176 = vmatpush2.msra.mxu0 0.0
        %2177 = vmatprep.mubr.f32.mxu0 0.0
        %2178 = vmatmul.mubr.f32.gmra.mxu0 %v2105
        %v2179 = vpop.f32.mrf.mxu0
        %v2180 = vadd.f32 0.0, %v2179
        %v2181 = vpop.f32.mrf.mxu0
        %v2182 = vadd.f32 0.0, %v2181
        %2183 = vdwg.mxu0
        %2184 = vmatprep.subr.mxu0 %v1252
        %2185 = vmatpush1.msra.mxu0 %v1251
        %2186 = vmatprep.subr.mxu0 %v1248
        %2187 = vmatpush1.msra.mxu0 %v1247
        %2188 = vmatprep.subr.mxu0 %v1244
        %2189 = vmatpush1.msra.mxu0 %v1243
        %2190 = vmatprep.subr.mxu0 %v1240
        %2191 = vmatpush1.msra.mxu0 %v1239
        %2192 = vmatprep.subr.mxu0 %v1236
        %2193 = vmatpush1.msra.mxu0 %v1235
        %2194 = vmatprep.subr.mxu0 %v1232
        %2195 = vmatpush1.msra.mxu0 %v1231
        %2196 = vmatprep.subr.mxu0 %v1228
        %2197 = vmatpush1.msra.mxu0 %v1227
        %2198 = vmatprep.subr.mxu0 %v1224
        %2199 = vmatpush1.msra.mxu0 %v1223
        %2200 = vmatprep.subr.mxu0 %v1220
        %2201 = vmatpush1.msra.mxu0 %v1219
        %2202 = vmatprep.subr.mxu0 %v1216
        %2203 = vmatpush1.msra.mxu0 %v1215
        %2204 = vmatprep.subr.mxu0 %v1212
        %2205 = vmatpush1.msra.mxu0 %v1211
        %2206 = vmatprep.subr.mxu0 %v1208
        %2207 = vmatpush1.msra.mxu0 %v1207
        %2208 = vmatprep.subr.mxu0 %v1204
        %2209 = vmatpush1.msra.mxu0 %v1203
        %2210 = vmatprep.subr.mxu0 %v1200
        %2211 = vmatpush1.msra.mxu0 %v1199
        %2212 = vmatprep.subr.mxu0 %v1196
        %2213 = vmatpush1.msra.mxu0 %v1195
        %2214 = vmatprep.subr.mxu0 %v1192
        %2215 = vmatpush1.msra.mxu0 %v1191
        %2216 = vmatprep.subr.mxu0 0.0
        %2217 = vmatpush2.msra.mxu0 0.0
        %2218 = vmatprep.subr.mxu0 0.0
        %2219 = vmatpush2.msra.mxu0 0.0
        %2220 = vmatprep.subr.mxu0 0.0
        %2221 = vmatpush2.msra.mxu0 0.0
        %2222 = vmatprep.subr.mxu0 0.0
        %2223 = vmatpush2.msra.mxu0 0.0
        %2224 = vmatprep.subr.mxu0 0.0
        %2225 = vmatpush2.msra.mxu0 0.0
        %2226 = vmatprep.subr.mxu0 0.0
        %2227 = vmatpush2.msra.mxu0 0.0
        %2228 = vmatprep.subr.mxu0 0.0
        %2229 = vmatpush2.msra.mxu0 0.0
        %2230 = vmatprep.subr.mxu0 0.0
        %2231 = vmatpush2.msra.mxu0 0.0
        %2232 = vmatprep.subr.mxu0 0.0
        %2233 = vmatpush2.msra.mxu0 0.0
        %2234 = vmatprep.subr.mxu0 0.0
        %2235 = vmatpush2.msra.mxu0 0.0
        %2236 = vmatprep.subr.mxu0 0.0
        %2237 = vmatpush2.msra.mxu0 0.0
        %2238 = vmatprep.subr.mxu0 0.0
        %2239 = vmatpush2.msra.mxu0 0.0
        %2240 = vmatprep.subr.mxu0 0.0
        %2241 = vmatpush2.msra.mxu0 0.0
        %2242 = vmatprep.subr.mxu0 0.0
        %2243 = vmatpush2.msra.mxu0 0.0
        %2244 = vmatprep.subr.mxu0 0.0
        %2245 = vmatpush2.msra.mxu0 0.0
        %2246 = vmatprep.subr.mxu0 0.0
        %2247 = vmatpush2.msra.mxu0 0.0
        %2248 = vmatprep.mubr.f32.mxu0 0.0
        %2249 = vmatmul.mubr.f32.gmra.mxu0 %v2105
        %v2250 = vpop.f32.mrf.mxu0
        %v2251 = vadd.f32 0.0, %v2250
        %v2252 = vpop.f32.mrf.mxu0
        %v2253 = vadd.f32 0.0, %v2252
        %2254 = vdwg.mxu0
        %v2255 = vadd.f32 %v2109, %v2180
        %v2256 = vadd.f32 %v2110, %v2182
        %v2257 = vadd.f32 %v2111, %v2251
        %v2258 = vadd.f32 %v2112, %v2253
        %v2259 = vmul.f32 %v2255, 0.5
        %v2260 = vtanh.pop %v2259
        %v2261 = vadd.f32 %v2260, 1.0
        %v2262 = vmul.f32 %v2261, 0.5
        %v2263 = vmul.f32 %v2256, 0.5
        %v2264 = vtanh.pop %v2263
        %v2265 = vadd.f32 %v2264, 1.0
        %v2266 = vmul.f32 %v2265, 0.5
        %v2267 = vtanh.pop %v2257
        %v2268 = vmul.f32 %v2258, 0.5
        %v2269 = vtanh.pop %v2268
        %v2270 = vadd.f32 %v2269, 1.0
        %v2271 = vmul.f32 %v2270, 0.5
        %v2272 = vmul.f32 %v2266, %v2103
        %v2273 = vmul.f32 %v2262, %v2267
        %v2274 = vadd.f32 %v2272, %v2273
        %v2275 = vtanh.pop %v2274
        %v2276 = vmul.f32 %v2271, %v2275
        %s2277 = sadd.s32 %s438, 40
        %s2278 = scalar_lea.vmem [#allocation14], %s2277
        %2279 = vst [vmem:[%s2278] sm:$0xff] %v2276
        %v2280 = vld [vmem:[#allocation4 + $0xc0] sm:$0xff]
        %v2281 = vld [vmem:[#allocation4 + $0xc8] sm:$0xff]
        %v2282 = vld [vmem:[#allocation4 + $0xd0] sm:$0xff]
        %v2283 = vld [vmem:[#allocation4 + $0xd8] sm:$0xff]
        %2284 = vmatprep.subr.mxu0 %v1250
        %2285 = vmatpush1.msra.mxu0 %v1249
        %2286 = vmatprep.subr.mxu0 %v1246
        %2287 = vmatpush1.msra.mxu0 %v1245
        %2288 = vmatprep.subr.mxu0 %v1242
        %2289 = vmatpush1.msra.mxu0 %v1241
        %2290 = vmatprep.subr.mxu0 %v1238
        %2291 = vmatpush1.msra.mxu0 %v1237
        %2292 = vmatprep.subr.mxu0 %v1234
        %2293 = vmatpush1.msra.mxu0 %v1233
        %2294 = vmatprep.subr.mxu0 %v1230
        %2295 = vmatpush1.msra.mxu0 %v1229
        %2296 = vmatprep.subr.mxu0 %v1226
        %2297 = vmatpush1.msra.mxu0 %v1225
        %2298 = vmatprep.subr.mxu0 %v1222
        %2299 = vmatpush1.msra.mxu0 %v1221
        %2300 = vmatprep.subr.mxu0 %v1218
        %2301 = vmatpush1.msra.mxu0 %v1217
        %2302 = vmatprep.subr.mxu0 %v1214
        %2303 = vmatpush1.msra.mxu0 %v1213
        %2304 = vmatprep.subr.mxu0 %v1210
        %2305 = vmatpush1.msra.mxu0 %v1209
        %2306 = vmatprep.subr.mxu0 %v1206
        %2307 = vmatpush1.msra.mxu0 %v1205
        %2308 = vmatprep.subr.mxu0 %v1202
        %2309 = vmatpush1.msra.mxu0 %v1201
        %2310 = vmatprep.subr.mxu0 %v1198
        %2311 = vmatpush1.msra.mxu0 %v1197
        %2312 = vmatprep.subr.mxu0 %v1194
        %2313 = vmatpush1.msra.mxu0 %v1193
        %2314 = vmatprep.subr.mxu0 %v1190
        %2315 = vmatpush1.msra.mxu0 %v1189
        %2316 = vmatprep.subr.mxu0 0.0
        %2317 = vmatpush2.msra.mxu0 0.0
        %2318 = vmatprep.subr.mxu0 0.0
        %2319 = vmatpush2.msra.mxu0 0.0
        %2320 = vmatprep.subr.mxu0 0.0
        %2321 = vmatpush2.msra.mxu0 0.0
        %2322 = vmatprep.subr.mxu0 0.0
        %2323 = vmatpush2.msra.mxu0 0.0
        %2324 = vmatprep.subr.mxu0 0.0
        %2325 = vmatpush2.msra.mxu0 0.0
        %2326 = vmatprep.subr.mxu0 0.0
        %2327 = vmatpush2.msra.mxu0 0.0
        %2328 = vmatprep.subr.mxu0 0.0
        %2329 = vmatpush2.msra.mxu0 0.0
        %2330 = vmatprep.subr.mxu0 0.0
        %2331 = vmatpush2.msra.mxu0 0.0
        %2332 = vmatprep.subr.mxu0 0.0
        %2333 = vmatpush2.msra.mxu0 0.0
        %2334 = vmatprep.subr.mxu0 0.0
        %2335 = vmatpush2.msra.mxu0 0.0
        %2336 = vmatprep.subr.mxu0 0.0
        %2337 = vmatpush2.msra.mxu0 0.0
        %2338 = vmatprep.subr.mxu0 0.0
        %2339 = vmatpush2.msra.mxu0 0.0
        %2340 = vmatprep.subr.mxu0 0.0
        %2341 = vmatpush2.msra.mxu0 0.0
        %2342 = vmatprep.subr.mxu0 0.0
        %2343 = vmatpush2.msra.mxu0 0.0
        %2344 = vmatprep.subr.mxu0 0.0
        %2345 = vmatpush2.msra.mxu0 0.0
        %2346 = vmatprep.subr.mxu0 0.0
        %2347 = vmatpush2.msra.mxu0 0.0
        %2348 = vmatprep.mubr.f32.mxu0 0.0
        %2349 = vmatmul.mubr.f32.gmra.mxu0 %v2276
        %v2350 = vpop.f32.mrf.mxu0
        %v2351 = vadd.f32 0.0, %v2350
        %v2352 = vpop.f32.mrf.mxu0
        %v2353 = vadd.f32 0.0, %v2352
        %2354 = vdwg.mxu0
        %2355 = vmatprep.subr.mxu0 %v1252
        %2356 = vmatpush1.msra.mxu0 %v1251
        %2357 = vmatprep.subr.mxu0 %v1248
        %2358 = vmatpush1.msra.mxu0 %v1247
        %2359 = vmatprep.subr.mxu0 %v1244
        %2360 = vmatpush1.msra.mxu0 %v1243
        %2361 = vmatprep.subr.mxu0 %v1240
        %2362 = vmatpush1.msra.mxu0 %v1239
        %2363 = vmatprep.subr.mxu0 %v1236
        %2364 = vmatpush1.msra.mxu0 %v1235
        %2365 = vmatprep.subr.mxu0 %v1232
        %2366 = vmatpush1.msra.mxu0 %v1231
        %2367 = vmatprep.subr.mxu0 %v1228
        %2368 = vmatpush1.msra.mxu0 %v1227
        %2369 = vmatprep.subr.mxu0 %v1224
        %2370 = vmatpush1.msra.mxu0 %v1223
        %2371 = vmatprep.subr.mxu0 %v1220
        %2372 = vmatpush1.msra.mxu0 %v1219
        %2373 = vmatprep.subr.mxu0 %v1216
        %2374 = vmatpush1.msra.mxu0 %v1215
        %2375 = vmatprep.subr.mxu0 %v1212
        %2376 = vmatpush1.msra.mxu0 %v1211
        %2377 = vmatprep.subr.mxu0 %v1208
        %2378 = vmatpush1.msra.mxu0 %v1207
        %2379 = vmatprep.subr.mxu0 %v1204
        %2380 = vmatpush1.msra.mxu0 %v1203
        %2381 = vmatprep.subr.mxu0 %v1200
        %2382 = vmatpush1.msra.mxu0 %v1199
        %2383 = vmatprep.subr.mxu0 %v1196
        %2384 = vmatpush1.msra.mxu0 %v1195
        %2385 = vmatprep.subr.mxu0 %v1192
        %2386 = vmatpush1.msra.mxu0 %v1191
        %2387 = vmatprep.subr.mxu0 0.0
        %2388 = vmatpush2.msra.mxu0 0.0
        %2389 = vmatprep.subr.mxu0 0.0
        %2390 = vmatpush2.msra.mxu0 0.0
        %2391 = vmatprep.subr.mxu0 0.0
        %2392 = vmatpush2.msra.mxu0 0.0
        %2393 = vmatprep.subr.mxu0 0.0
        %2394 = vmatpush2.msra.mxu0 0.0
        %2395 = vmatprep.subr.mxu0 0.0
        %2396 = vmatpush2.msra.mxu0 0.0
        %2397 = vmatprep.subr.mxu0 0.0
        %2398 = vmatpush2.msra.mxu0 0.0
        %2399 = vmatprep.subr.mxu0 0.0
        %2400 = vmatpush2.msra.mxu0 0.0
        %2401 = vmatprep.subr.mxu0 0.0
        %2402 = vmatpush2.msra.mxu0 0.0
        %2403 = vmatprep.subr.mxu0 0.0
        %2404 = vmatpush2.msra.mxu0 0.0
        %2405 = vmatprep.subr.mxu0 0.0
        %2406 = vmatpush2.msra.mxu0 0.0
        %2407 = vmatprep.subr.mxu0 0.0
        %2408 = vmatpush2.msra.mxu0 0.0
        %2409 = vmatprep.subr.mxu0 0.0
        %2410 = vmatpush2.msra.mxu0 0.0
        %2411 = vmatprep.subr.mxu0 0.0
        %2412 = vmatpush2.msra.mxu0 0.0
        %2413 = vmatprep.subr.mxu0 0.0
        %2414 = vmatpush2.msra.mxu0 0.0
        %2415 = vmatprep.subr.mxu0 0.0
        %2416 = vmatpush2.msra.mxu0 0.0
        %2417 = vmatprep.subr.mxu0 0.0
        %2418 = vmatpush2.msra.mxu0 0.0
        %2419 = vmatprep.mubr.f32.mxu0 0.0
        %2420 = vmatmul.mubr.f32.gmra.mxu0 %v2276
        %v2421 = vpop.f32.mrf.mxu0
        %v2422 = vadd.f32 0.0, %v2421
        %v2423 = vpop.f32.mrf.mxu0
        %v2424 = vadd.f32 0.0, %v2423
        %2425 = vdwg.mxu0
        %v2426 = vadd.f32 %v2280, %v2351
        %v2427 = vadd.f32 %v2281, %v2353
        %v2428 = vadd.f32 %v2282, %v2422
        %v2429 = vadd.f32 %v2283, %v2424
        %v2430 = vmul.f32 %v2426, 0.5
        %v2431 = vtanh.pop %v2430
        %v2432 = vadd.f32 %v2431, 1.0
        %v2433 = vmul.f32 %v2432, 0.5
        %v2434 = vmul.f32 %v2427, 0.5
        %v2435 = vtanh.pop %v2434
        %v2436 = vadd.f32 %v2435, 1.0
        %v2437 = vmul.f32 %v2436, 0.5
        %v2438 = vtanh.pop %v2428
        %v2439 = vmul.f32 %v2429, 0.5
        %v2440 = vtanh.pop %v2439
        %v2441 = vadd.f32 %v2440, 1.0
        %v2442 = vmul.f32 %v2441, 0.5
        %v2443 = vmul.f32 %v2437, %v2274
        %v2444 = vmul.f32 %v2433, %v2438
        %v2445 = vadd.f32 %v2443, %v2444
        %v2446 = vtanh.pop %v2445
        %v2447 = vmul.f32 %v2442, %v2446
        %s2448 = sadd.s32 %s438, 48
        %s2449 = scalar_lea.vmem [#allocation14], %s2448
        %2450 = vst [vmem:[%s2449] sm:$0xff] %v2447
        %v2451 = vld [vmem:[#allocation4 + $0xe0] sm:$0xff]
        %v2452 = vld [vmem:[#allocation4 + $0xe8] sm:$0xff]
        %v2453 = vld [vmem:[#allocation4 + $0xf0] sm:$0xff]
        %v2454 = vld [vmem:[#allocation4 + $0xf8] sm:$0xff]
        %2455 = vmatprep.subr.mxu0 %v1250
        %2456 = vmatpush1.msra.mxu0 %v1249
        %2457 = vmatprep.subr.mxu0 %v1246
        %2458 = vmatpush1.msra.mxu0 %v1245
        %2459 = vmatprep.subr.mxu0 %v1242
        %2460 = vmatpush1.msra.mxu0 %v1241
        %2461 = vmatprep.subr.mxu0 %v1238
        %2462 = vmatpush1.msra.mxu0 %v1237
        %2463 = vmatprep.subr.mxu0 %v1234
        %2464 = vmatpush1.msra.mxu0 %v1233
        %2465 = vmatprep.subr.mxu0 %v1230
        %2466 = vmatpush1.msra.mxu0 %v1229
        %2467 = vmatprep.subr.mxu0 %v1226
        %2468 = vmatpush1.msra.mxu0 %v1225
        %2469 = vmatprep.subr.mxu0 %v1222
        %2470 = vmatpush1.msra.mxu0 %v1221
        %2471 = vmatprep.subr.mxu0 %v1218
        %2472 = vmatpush1.msra.mxu0 %v1217
        %2473 = vmatprep.subr.mxu0 %v1214
        %2474 = vmatpush1.msra.mxu0 %v1213
        %2475 = vmatprep.subr.mxu0 %v1210
        %2476 = vmatpush1.msra.mxu0 %v1209
        %2477 = vmatprep.subr.mxu0 %v1206
        %2478 = vmatpush1.msra.mxu0 %v1205
        %2479 = vmatprep.subr.mxu0 %v1202
        %2480 = vmatpush1.msra.mxu0 %v1201
        %2481 = vmatprep.subr.mxu0 %v1198
        %2482 = vmatpush1.msra.mxu0 %v1197
        %2483 = vmatprep.subr.mxu0 %v1194
        %2484 = vmatpush1.msra.mxu0 %v1193
        %2485 = vmatprep.subr.mxu0 %v1190
        %2486 = vmatpush1.msra.mxu0 %v1189
        %2487 = vmatprep.subr.mxu0 0.0
        %2488 = vmatpush2.msra.mxu0 0.0
        %2489 = vmatprep.subr.mxu0 0.0
        %2490 = vmatpush2.msra.mxu0 0.0
        %2491 = vmatprep.subr.mxu0 0.0
        %2492 = vmatpush2.msra.mxu0 0.0
        %2493 = vmatprep.subr.mxu0 0.0
        %2494 = vmatpush2.msra.mxu0 0.0
        %2495 = vmatprep.subr.mxu0 0.0
        %2496 = vmatpush2.msra.mxu0 0.0
        %2497 = vmatprep.subr.mxu0 0.0
        %2498 = vmatpush2.msra.mxu0 0.0
        %2499 = vmatprep.subr.mxu0 0.0
        %2500 = vmatpush2.msra.mxu0 0.0
        %2501 = vmatprep.subr.mxu0 0.0
        %2502 = vmatpush2.msra.mxu0 0.0
        %2503 = vmatprep.subr.mxu0 0.0
        %2504 = vmatpush2.msra.mxu0 0.0
        %2505 = vmatprep.subr.mxu0 0.0
        %2506 = vmatpush2.msra.mxu0 0.0
        %2507 = vmatprep.subr.mxu0 0.0
        %2508 = vmatpush2.msra.mxu0 0.0
        %2509 = vmatprep.subr.mxu0 0.0
        %2510 = vmatpush2.msra.mxu0 0.0
        %2511 = vmatprep.subr.mxu0 0.0
        %2512 = vmatpush2.msra.mxu0 0.0
        %2513 = vmatprep.subr.mxu0 0.0
        %2514 = vmatpush2.msra.mxu0 0.0
        %2515 = vmatprep.subr.mxu0 0.0
        %2516 = vmatpush2.msra.mxu0 0.0
        %2517 = vmatprep.subr.mxu0 0.0
        %2518 = vmatpush2.msra.mxu0 0.0
        %2519 = vmatprep.mubr.f32.mxu0 0.0
        %2520 = vmatmul.mubr.f32.gmra.mxu0 %v2447
        %v2521 = vpop.f32.mrf.mxu0
        %v2522 = vadd.f32 0.0, %v2521
        %v2523 = vpop.f32.mrf.mxu0
        %v2524 = vadd.f32 0.0, %v2523
        %2525 = vdwg.mxu0
        %2526 = vmatprep.subr.mxu0 %v1252
        %2527 = vmatpush1.msra.mxu0 %v1251
        %2528 = vmatprep.subr.mxu0 %v1248
        %2529 = vmatpush1.msra.mxu0 %v1247
        %2530 = vmatprep.subr.mxu0 %v1244
        %2531 = vmatpush1.msra.mxu0 %v1243
        %2532 = vmatprep.subr.mxu0 %v1240
        %2533 = vmatpush1.msra.mxu0 %v1239
        %2534 = vmatprep.subr.mxu0 %v1236
        %2535 = vmatpush1.msra.mxu0 %v1235
        %2536 = vmatprep.subr.mxu0 %v1232
        %2537 = vmatpush1.msra.mxu0 %v1231
        %2538 = vmatprep.subr.mxu0 %v1228
        %2539 = vmatpush1.msra.mxu0 %v1227
        %2540 = vmatprep.subr.mxu0 %v1224
        %2541 = vmatpush1.msra.mxu0 %v1223
        %2542 = vmatprep.subr.mxu0 %v1220
        %2543 = vmatpush1.msra.mxu0 %v1219
        %2544 = vmatprep.subr.mxu0 %v1216
        %2545 = vmatpush1.msra.mxu0 %v1215
        %2546 = vmatprep.subr.mxu0 %v1212
        %2547 = vmatpush1.msra.mxu0 %v1211
        %2548 = vmatprep.subr.mxu0 %v1208
        %2549 = vmatpush1.msra.mxu0 %v1207
        %2550 = vmatprep.subr.mxu0 %v1204
        %2551 = vmatpush1.msra.mxu0 %v1203
        %2552 = vmatprep.subr.mxu0 %v1200
        %2553 = vmatpush1.msra.mxu0 %v1199
        %2554 = vmatprep.subr.mxu0 %v1196
        %2555 = vmatpush1.msra.mxu0 %v1195
        %2556 = vmatprep.subr.mxu0 %v1192
        %2557 = vmatpush1.msra.mxu0 %v1191
        %2558 = vmatprep.subr.mxu0 0.0
        %2559 = vmatpush2.msra.mxu0 0.0
        %2560 = vmatprep.subr.mxu0 0.0
        %2561 = vmatpush2.msra.mxu0 0.0
        %2562 = vmatprep.subr.mxu0 0.0
        %2563 = vmatpush2.msra.mxu0 0.0
        %2564 = vmatprep.subr.mxu0 0.0
        %2565 = vmatpush2.msra.mxu0 0.0
        %2566 = vmatprep.subr.mxu0 0.0
        %2567 = vmatpush2.msra.mxu0 0.0
        %2568 = vmatprep.subr.mxu0 0.0
        %2569 = vmatpush2.msra.mxu0 0.0
        %2570 = vmatprep.subr.mxu0 0.0
        %2571 = vmatpush2.msra.mxu0 0.0
        %2572 = vmatprep.subr.mxu0 0.0
        %2573 = vmatpush2.msra.mxu0 0.0
        %2574 = vmatprep.subr.mxu0 0.0
        %2575 = vmatpush2.msra.mxu0 0.0
        %2576 = vmatprep.subr.mxu0 0.0
        %2577 = vmatpush2.msra.mxu0 0.0
        %2578 = vmatprep.subr.mxu0 0.0
        %2579 = vmatpush2.msra.mxu0 0.0
        %2580 = vmatprep.subr.mxu0 0.0
        %2581 = vmatpush2.msra.mxu0 0.0
        %2582 = vmatprep.subr.mxu0 0.0
        %2583 = vmatpush2.msra.mxu0 0.0
        %2584 = vmatprep.subr.mxu0 0.0
        %2585 = vmatpush2.msra.mxu0 0.0
        %2586 = vmatprep.subr.mxu0 0.0
        %2587 = vmatpush2.msra.mxu0 0.0
        %2588 = vmatprep.subr.mxu0 0.0
        %2589 = vmatpush2.msra.mxu0 0.0
        %2590 = vmatprep.mubr.f32.mxu0 0.0
        %2591 = vmatmul.mubr.f32.gmra.mxu0 %v2447
        %v2592 = vpop.f32.mrf.mxu0
        %v2593 = vadd.f32 0.0, %v2592
        %v2594 = vpop.f32.mrf.mxu0
        %v2595 = vadd.f32 0.0, %v2594
        %2596 = vdwg.mxu0
        %v2597 = vadd.f32 %v2451, %v2522
        %v2598 = vadd.f32 %v2452, %v2524
        %v2599 = vadd.f32 %v2453, %v2593
        %v2600 = vadd.f32 %v2454, %v2595
        %v2601 = vmul.f32 %v2597, 0.5
        %v2602 = vtanh.pop %v2601
        %v2603 = vadd.f32 %v2602, 1.0
        %v2604 = vmul.f32 %v2603, 0.5
        %v2605 = vmul.f32 %v2598, 0.5
        %v2606 = vtanh.pop %v2605
        %v2607 = vadd.f32 %v2606, 1.0
        %v2608 = vmul.f32 %v2607, 0.5
        %v2609 = vtanh.pop %v2599
        %v2610 = vmul.f32 %v2600, 0.5
        %v2611 = vtanh.pop %v2610
        %v2612 = vadd.f32 %v2611, 1.0
        %v2613 = vmul.f32 %v2612, 0.5
        %v2614 = vmul.f32 %v2608, %v2445
        %v2615 = vmul.f32 %v2604, %v2609
        %v2616 = vadd.f32 %v2614, %v2615
        %v2617 = vtanh.pop %v2616
        %v2618 = vmul.f32 %v2613, %v2617
        %s2619 = sadd.s32 %s438, 56
        %s2620 = scalar_lea.vmem [#allocation14], %s2619
        %2621 = vst [vmem:[%s2620] sm:$0xff] %v2618
        %v2622 = vld [vmem:[#allocation4 + $0x100] sm:$0xff]
        %v2623 = vld [vmem:[#allocation4 + $0x108] sm:$0xff]
        %v2624 = vld [vmem:[#allocation4 + $0x110] sm:$0xff]
        %v2625 = vld [vmem:[#allocation4 + $0x118] sm:$0xff]
        %2626 = vmatprep.subr.mxu0 %v1250
        %2627 = vmatpush1.msra.mxu0 %v1249
        %2628 = vmatprep.subr.mxu0 %v1246
        %2629 = vmatpush1.msra.mxu0 %v1245
        %2630 = vmatprep.subr.mxu0 %v1242
        %2631 = vmatpush1.msra.mxu0 %v1241
        %2632 = vmatprep.subr.mxu0 %v1238
        %2633 = vmatpush1.msra.mxu0 %v1237
        %2634 = vmatprep.subr.mxu0 %v1234
        %2635 = vmatpush1.msra.mxu0 %v1233
        %2636 = vmatprep.subr.mxu0 %v1230
        %2637 = vmatpush1.msra.mxu0 %v1229
        %2638 = vmatprep.subr.mxu0 %v1226
        %2639 = vmatpush1.msra.mxu0 %v1225
        %2640 = vmatprep.subr.mxu0 %v1222
        %2641 = vmatpush1.msra.mxu0 %v1221
        %2642 = vmatprep.subr.mxu0 %v1218
        %2643 = vmatpush1.msra.mxu0 %v1217
        %2644 = vmatprep.subr.mxu0 %v1214
        %2645 = vmatpush1.msra.mxu0 %v1213
        %2646 = vmatprep.subr.mxu0 %v1210
        %2647 = vmatpush1.msra.mxu0 %v1209
        %2648 = vmatprep.subr.mxu0 %v1206
        %2649 = vmatpush1.msra.mxu0 %v1205
        %2650 = vmatprep.subr.mxu0 %v1202
        %2651 = vmatpush1.msra.mxu0 %v1201
        %2652 = vmatprep.subr.mxu0 %v1198
        %2653 = vmatpush1.msra.mxu0 %v1197
        %2654 = vmatprep.subr.mxu0 %v1194
        %2655 = vmatpush1.msra.mxu0 %v1193
        %2656 = vmatprep.subr.mxu0 %v1190
        %2657 = vmatpush1.msra.mxu0 %v1189
        %2658 = vmatprep.subr.mxu0 0.0
        %2659 = vmatpush2.msra.mxu0 0.0
        %2660 = vmatprep.subr.mxu0 0.0
        %2661 = vmatpush2.msra.mxu0 0.0
        %2662 = vmatprep.subr.mxu0 0.0
        %2663 = vmatpush2.msra.mxu0 0.0
        %2664 = vmatprep.subr.mxu0 0.0
        %2665 = vmatpush2.msra.mxu0 0.0
        %2666 = vmatprep.subr.mxu0 0.0
        %2667 = vmatpush2.msra.mxu0 0.0
        %2668 = vmatprep.subr.mxu0 0.0
        %2669 = vmatpush2.msra.mxu0 0.0
        %2670 = vmatprep.subr.mxu0 0.0
        %2671 = vmatpush2.msra.mxu0 0.0
        %2672 = vmatprep.subr.mxu0 0.0
        %2673 = vmatpush2.msra.mxu0 0.0
        %2674 = vmatprep.subr.mxu0 0.0
        %2675 = vmatpush2.msra.mxu0 0.0
        %2676 = vmatprep.subr.mxu0 0.0
        %2677 = vmatpush2.msra.mxu0 0.0
        %2678 = vmatprep.subr.mxu0 0.0
        %2679 = vmatpush2.msra.mxu0 0.0
        %2680 = vmatprep.subr.mxu0 0.0
        %2681 = vmatpush2.msra.mxu0 0.0
        %2682 = vmatprep.subr.mxu0 0.0
        %2683 = vmatpush2.msra.mxu0 0.0
        %2684 = vmatprep.subr.mxu0 0.0
        %2685 = vmatpush2.msra.mxu0 0.0
        %2686 = vmatprep.subr.mxu0 0.0
        %2687 = vmatpush2.msra.mxu0 0.0
        %2688 = vmatprep.subr.mxu0 0.0
        %2689 = vmatpush2.msra.mxu0 0.0
        %2690 = vmatprep.mubr.f32.mxu0 0.0
        %2691 = vmatmul.mubr.f32.gmra.mxu0 %v2618
        %v2692 = vpop.f32.mrf.mxu0
        %v2693 = vadd.f32 0.0, %v2692
        %v2694 = vpop.f32.mrf.mxu0
        %v2695 = vadd.f32 0.0, %v2694
        %2696 = vdwg.mxu0
        %2697 = vmatprep.subr.mxu0 %v1252
        %2698 = vmatpush1.msra.mxu0 %v1251
        %2699 = vmatprep.subr.mxu0 %v1248
        %2700 = vmatpush1.msra.mxu0 %v1247
        %2701 = vmatprep.subr.mxu0 %v1244
        %2702 = vmatpush1.msra.mxu0 %v1243
        %2703 = vmatprep.subr.mxu0 %v1240
        %2704 = vmatpush1.msra.mxu0 %v1239
        %2705 = vmatprep.subr.mxu0 %v1236
        %2706 = vmatpush1.msra.mxu0 %v1235
        %2707 = vmatprep.subr.mxu0 %v1232
        %2708 = vmatpush1.msra.mxu0 %v1231
        %2709 = vmatprep.subr.mxu0 %v1228
        %2710 = vmatpush1.msra.mxu0 %v1227
        %2711 = vmatprep.subr.mxu0 %v1224
        %2712 = vmatpush1.msra.mxu0 %v1223
        %2713 = vmatprep.subr.mxu0 %v1220
        %2714 = vmatpush1.msra.mxu0 %v1219
        %2715 = vmatprep.subr.mxu0 %v1216
        %2716 = vmatpush1.msra.mxu0 %v1215
        %2717 = vmatprep.subr.mxu0 %v1212
        %2718 = vmatpush1.msra.mxu0 %v1211
        %2719 = vmatprep.subr.mxu0 %v1208
        %2720 = vmatpush1.msra.mxu0 %v1207
        %2721 = vmatprep.subr.mxu0 %v1204
        %2722 = vmatpush1.msra.mxu0 %v1203
        %2723 = vmatprep.subr.mxu0 %v1200
        %2724 = vmatpush1.msra.mxu0 %v1199
        %2725 = vmatprep.subr.mxu0 %v1196
        %2726 = vmatpush1.msra.mxu0 %v1195
        %2727 = vmatprep.subr.mxu0 %v1192
        %2728 = vmatpush1.msra.mxu0 %v1191
        %2729 = vmatprep.subr.mxu0 0.0
        %2730 = vmatpush2.msra.mxu0 0.0
        %2731 = vmatprep.subr.mxu0 0.0
        %2732 = vmatpush2.msra.mxu0 0.0
        %2733 = vmatprep.subr.mxu0 0.0
        %2734 = vmatpush2.msra.mxu0 0.0
        %2735 = vmatprep.subr.mxu0 0.0
        %2736 = vmatpush2.msra.mxu0 0.0
        %2737 = vmatprep.subr.mxu0 0.0
        %2738 = vmatpush2.msra.mxu0 0.0
        %2739 = vmatprep.subr.mxu0 0.0
        %2740 = vmatpush2.msra.mxu0 0.0
        %2741 = vmatprep.subr.mxu0 0.0
        %2742 = vmatpush2.msra.mxu0 0.0
        %2743 = vmatprep.subr.mxu0 0.0
        %2744 = vmatpush2.msra.mxu0 0.0
        %2745 = vmatprep.subr.mxu0 0.0
        %2746 = vmatpush2.msra.mxu0 0.0
        %2747 = vmatprep.subr.mxu0 0.0
        %2748 = vmatpush2.msra.mxu0 0.0
        %2749 = vmatprep.subr.mxu0 0.0
        %2750 = vmatpush2.msra.mxu0 0.0
        %2751 = vmatprep.subr.mxu0 0.0
        %2752 = vmatpush2.msra.mxu0 0.0
        %2753 = vmatprep.subr.mxu0 0.0
        %2754 = vmatpush2.msra.mxu0 0.0
        %2755 = vmatprep.subr.mxu0 0.0
        %2756 = vmatpush2.msra.mxu0 0.0
        %2757 = vmatprep.subr.mxu0 0.0
        %2758 = vmatpush2.msra.mxu0 0.0
        %2759 = vmatprep.subr.mxu0 0.0
        %2760 = vmatpush2.msra.mxu0 0.0
        %2761 = vmatprep.mubr.f32.mxu0 0.0
        %2762 = vmatmul.mubr.f32.gmra.mxu0 %v2618
        %v2763 = vpop.f32.mrf.mxu0
        %v2764 = vadd.f32 0.0, %v2763
        %v2765 = vpop.f32.mrf.mxu0
        %v2766 = vadd.f32 0.0, %v2765
        %2767 = vdwg.mxu0
        %v2768 = vadd.f32 %v2622, %v2693
        %v2769 = vadd.f32 %v2623, %v2695
        %v2770 = vadd.f32 %v2624, %v2764
        %v2771 = vadd.f32 %v2625, %v2766
        %v2772 = vmul.f32 %v2768, 0.5
        %v2773 = vtanh.pop %v2772
        %v2774 = vadd.f32 %v2773, 1.0
        %v2775 = vmul.f32 %v2774, 0.5
        %v2776 = vmul.f32 %v2769, 0.5
        %v2777 = vtanh.pop %v2776
        %v2778 = vadd.f32 %v2777, 1.0
        %v2779 = vmul.f32 %v2778, 0.5
        %v2780 = vtanh.pop %v2770
        %v2781 = vmul.f32 %v2771, 0.5
        %v2782 = vtanh.pop %v2781
        %v2783 = vadd.f32 %v2782, 1.0
        %v2784 = vmul.f32 %v2783, 0.5
        %v2785 = vmul.f32 %v2779, %v2616
        %v2786 = vmul.f32 %v2775, %v2780
        %v2787 = vadd.f32 %v2785, %v2786
        %v2788 = vtanh.pop %v2787
        %v2789 = vmul.f32 %v2784, %v2788
        %s2790 = sadd.s32 %s438, 64
        %s2791 = scalar_lea.vmem [#allocation14], %s2790
        %2792 = vst [vmem:[%s2791] sm:$0xff] %v2789
        %v2793 = vld [vmem:[#allocation4 + $0x120] sm:$0xff]
        %v2794 = vld [vmem:[#allocation4 + $0x128] sm:$0xff]
        %v2795 = vld [vmem:[#allocation4 + $0x130] sm:$0xff]
        %v2796 = vld [vmem:[#allocation4 + $0x138] sm:$0xff]
        %2797 = vmatprep.subr.mxu0 %v1250
        %2798 = vmatpush1.msra.mxu0 %v1249
        %2799 = vmatprep.subr.mxu0 %v1246
        %2800 = vmatpush1.msra.mxu0 %v1245
        %2801 = vmatprep.subr.mxu0 %v1242
        %2802 = vmatpush1.msra.mxu0 %v1241
        %2803 = vmatprep.subr.mxu0 %v1238
        %2804 = vmatpush1.msra.mxu0 %v1237
        %2805 = vmatprep.subr.mxu0 %v1234
        %2806 = vmatpush1.msra.mxu0 %v1233
        %2807 = vmatprep.subr.mxu0 %v1230
        %2808 = vmatpush1.msra.mxu0 %v1229
        %2809 = vmatprep.subr.mxu0 %v1226
        %2810 = vmatpush1.msra.mxu0 %v1225
        %2811 = vmatprep.subr.mxu0 %v1222
        %2812 = vmatpush1.msra.mxu0 %v1221
        %2813 = vmatprep.subr.mxu0 %v1218
        %2814 = vmatpush1.msra.mxu0 %v1217
        %2815 = vmatprep.subr.mxu0 %v1214
        %2816 = vmatpush1.msra.mxu0 %v1213
        %2817 = vmatprep.subr.mxu0 %v1210
        %2818 = vmatpush1.msra.mxu0 %v1209
        %2819 = vmatprep.subr.mxu0 %v1206
        %2820 = vmatpush1.msra.mxu0 %v1205
        %2821 = vmatprep.subr.mxu0 %v1202
        %2822 = vmatpush1.msra.mxu0 %v1201
        %2823 = vmatprep.subr.mxu0 %v1198
        %2824 = vmatpush1.msra.mxu0 %v1197
        %2825 = vmatprep.subr.mxu0 %v1194
        %2826 = vmatpush1.msra.mxu0 %v1193
        %2827 = vmatprep.subr.mxu0 %v1190
        %2828 = vmatpush1.msra.mxu0 %v1189
        %2829 = vmatprep.subr.mxu0 0.0
        %2830 = vmatpush2.msra.mxu0 0.0
        %2831 = vmatprep.subr.mxu0 0.0
        %2832 = vmatpush2.msra.mxu0 0.0
        %2833 = vmatprep.subr.mxu0 0.0
        %2834 = vmatpush2.msra.mxu0 0.0
        %2835 = vmatprep.subr.mxu0 0.0
        %2836 = vmatpush2.msra.mxu0 0.0
        %2837 = vmatprep.subr.mxu0 0.0
        %2838 = vmatpush2.msra.mxu0 0.0
        %2839 = vmatprep.subr.mxu0 0.0
        %2840 = vmatpush2.msra.mxu0 0.0
        %2841 = vmatprep.subr.mxu0 0.0
        %2842 = vmatpush2.msra.mxu0 0.0
        %2843 = vmatprep.subr.mxu0 0.0
        %2844 = vmatpush2.msra.mxu0 0.0
        %2845 = vmatprep.subr.mxu0 0.0
        %2846 = vmatpush2.msra.mxu0 0.0
        %2847 = vmatprep.subr.mxu0 0.0
        %2848 = vmatpush2.msra.mxu0 0.0
        %2849 = vmatprep.subr.mxu0 0.0
        %2850 = vmatpush2.msra.mxu0 0.0
        %2851 = vmatprep.subr.mxu0 0.0
        %2852 = vmatpush2.msra.mxu0 0.0
        %2853 = vmatprep.subr.mxu0 0.0
        %2854 = vmatpush2.msra.mxu0 0.0
        %2855 = vmatprep.subr.mxu0 0.0
        %2856 = vmatpush2.msra.mxu0 0.0
        %2857 = vmatprep.subr.mxu0 0.0
        %2858 = vmatpush2.msra.mxu0 0.0
        %2859 = vmatprep.subr.mxu0 0.0
        %2860 = vmatpush2.msra.mxu0 0.0
        %2861 = vmatprep.mubr.f32.mxu0 0.0
        %2862 = vmatmul.mubr.f32.gmra.mxu0 %v2789
        %v2863 = vpop.f32.mrf.mxu0
        %v2864 = vadd.f32 0.0, %v2863
        %v2865 = vpop.f32.mrf.mxu0
        %v2866 = vadd.f32 0.0, %v2865
        %2867 = vdwg.mxu0
        %2868 = vmatprep.subr.mxu0 %v1252
        %2869 = vmatpush1.msra.mxu0 %v1251
        %2870 = vmatprep.subr.mxu0 %v1248
        %2871 = vmatpush1.msra.mxu0 %v1247
        %2872 = vmatprep.subr.mxu0 %v1244
        %2873 = vmatpush1.msra.mxu0 %v1243
        %2874 = vmatprep.subr.mxu0 %v1240
        %2875 = vmatpush1.msra.mxu0 %v1239
        %2876 = vmatprep.subr.mxu0 %v1236
        %2877 = vmatpush1.msra.mxu0 %v1235
        %2878 = vmatprep.subr.mxu0 %v1232
        %2879 = vmatpush1.msra.mxu0 %v1231
        %2880 = vmatprep.subr.mxu0 %v1228
        %2881 = vmatpush1.msra.mxu0 %v1227
        %2882 = vmatprep.subr.mxu0 %v1224
        %2883 = vmatpush1.msra.mxu0 %v1223
        %2884 = vmatprep.subr.mxu0 %v1220
        %2885 = vmatpush1.msra.mxu0 %v1219
        %2886 = vmatprep.subr.mxu0 %v1216
        %2887 = vmatpush1.msra.mxu0 %v1215
        %2888 = vmatprep.subr.mxu0 %v1212
        %2889 = vmatpush1.msra.mxu0 %v1211
        %2890 = vmatprep.subr.mxu0 %v1208
        %2891 = vmatpush1.msra.mxu0 %v1207
        %2892 = vmatprep.subr.mxu0 %v1204
        %2893 = vmatpush1.msra.mxu0 %v1203
        %2894 = vmatprep.subr.mxu0 %v1200
        %2895 = vmatpush1.msra.mxu0 %v1199
        %2896 = vmatprep.subr.mxu0 %v1196
        %2897 = vmatpush1.msra.mxu0 %v1195
        %2898 = vmatprep.subr.mxu0 %v1192
        %2899 = vmatpush1.msra.mxu0 %v1191
        %2900 = vmatprep.subr.mxu0 0.0
        %2901 = vmatpush2.msra.mxu0 0.0
        %2902 = vmatprep.subr.mxu0 0.0
        %2903 = vmatpush2.msra.mxu0 0.0
        %2904 = vmatprep.subr.mxu0 0.0
        %2905 = vmatpush2.msra.mxu0 0.0
        %2906 = vmatprep.subr.mxu0 0.0
        %2907 = vmatpush2.msra.mxu0 0.0
        %2908 = vmatprep.subr.mxu0 0.0
        %2909 = vmatpush2.msra.mxu0 0.0
        %2910 = vmatprep.subr.mxu0 0.0
        %2911 = vmatpush2.msra.mxu0 0.0
        %2912 = vmatprep.subr.mxu0 0.0
        %2913 = vmatpush2.msra.mxu0 0.0
        %2914 = vmatprep.subr.mxu0 0.0
        %2915 = vmatpush2.msra.mxu0 0.0
        %2916 = vmatprep.subr.mxu0 0.0
        %2917 = vmatpush2.msra.mxu0 0.0
        %2918 = vmatprep.subr.mxu0 0.0
        %2919 = vmatpush2.msra.mxu0 0.0
        %2920 = vmatprep.subr.mxu0 0.0
        %2921 = vmatpush2.msra.mxu0 0.0
        %2922 = vmatprep.subr.mxu0 0.0
        %2923 = vmatpush2.msra.mxu0 0.0
        %2924 = vmatprep.subr.mxu0 0.0
        %2925 = vmatpush2.msra.mxu0 0.0
        %2926 = vmatprep.subr.mxu0 0.0
        %2927 = vmatpush2.msra.mxu0 0.0
        %2928 = vmatprep.subr.mxu0 0.0
        %2929 = vmatpush2.msra.mxu0 0.0
        %2930 = vmatprep.subr.mxu0 0.0
        %2931 = vmatpush2.msra.mxu0 0.0
        %2932 = vmatprep.mubr.f32.mxu0 0.0
        %2933 = vmatmul.mubr.f32.gmra.mxu0 %v2789
        %v2934 = vpop.f32.mrf.mxu0
        %v2935 = vadd.f32 0.0, %v2934
        %v2936 = vpop.f32.mrf.mxu0
        %v2937 = vadd.f32 0.0, %v2936
        %2938 = vdwg.mxu0
        %v2939 = vadd.f32 %v2793, %v2864
        %v2940 = vadd.f32 %v2794, %v2866
        %v2941 = vadd.f32 %v2795, %v2935
        %v2942 = vadd.f32 %v2796, %v2937
        %v2943 = vmul.f32 %v2939, 0.5
        %v2944 = vtanh.pop %v2943
        %v2945 = vadd.f32 %v2944, 1.0
        %v2946 = vmul.f32 %v2945, 0.5
        %v2947 = vmul.f32 %v2940, 0.5
        %v2948 = vtanh.pop %v2947
        %v2949 = vadd.f32 %v2948, 1.0
        %v2950 = vmul.f32 %v2949, 0.5
        %v2951 = vtanh.pop %v2941
        %v2952 = vmul.f32 %v2942, 0.5
        %v2953 = vtanh.pop %v2952
        %v2954 = vadd.f32 %v2953, 1.0
        %v2955 = vmul.f32 %v2954, 0.5
        %v2956 = vmul.f32 %v2950, %v2787
        %v2957 = vmul.f32 %v2946, %v2951
        %v2958 = vadd.f32 %v2956, %v2957
        %v2959 = vtanh.pop %v2958
        %v2960 = vmul.f32 %v2955, %v2959
        %s2961 = sadd.s32 %s438, 72
        %s2962 = scalar_lea.vmem [#allocation14], %s2961
        %2963 = vst [vmem:[%s2962] sm:$0xff] %v2960
        %v2964 = vld [vmem:[#allocation4 + $0x140] sm:$0xff]
        %v2965 = vld [vmem:[#allocation4 + $0x148] sm:$0xff]
        %v2966 = vld [vmem:[#allocation4 + $0x150] sm:$0xff]
        %v2967 = vld [vmem:[#allocation4 + $0x158] sm:$0xff]
        %2968 = vmatprep.subr.mxu0 %v1250
        %2969 = vmatpush1.msra.mxu0 %v1249
        %2970 = vmatprep.subr.mxu0 %v1246
        %2971 = vmatpush1.msra.mxu0 %v1245
        %2972 = vmatprep.subr.mxu0 %v1242
        %2973 = vmatpush1.msra.mxu0 %v1241
        %2974 = vmatprep.subr.mxu0 %v1238
        %2975 = vmatpush1.msra.mxu0 %v1237
        %2976 = vmatprep.subr.mxu0 %v1234
        %2977 = vmatpush1.msra.mxu0 %v1233
        %2978 = vmatprep.subr.mxu0 %v1230
        %2979 = vmatpush1.msra.mxu0 %v1229
        %2980 = vmatprep.subr.mxu0 %v1226
        %2981 = vmatpush1.msra.mxu0 %v1225
        %2982 = vmatprep.subr.mxu0 %v1222
        %2983 = vmatpush1.msra.mxu0 %v1221
        %2984 = vmatprep.subr.mxu0 %v1218
        %2985 = vmatpush1.msra.mxu0 %v1217
        %2986 = vmatprep.subr.mxu0 %v1214
        %2987 = vmatpush1.msra.mxu0 %v1213
        %2988 = vmatprep.subr.mxu0 %v1210
        %2989 = vmatpush1.msra.mxu0 %v1209
        %2990 = vmatprep.subr.mxu0 %v1206
        %2991 = vmatpush1.msra.mxu0 %v1205
        %2992 = vmatprep.subr.mxu0 %v1202
        %2993 = vmatpush1.msra.mxu0 %v1201
        %2994 = vmatprep.subr.mxu0 %v1198
        %2995 = vmatpush1.msra.mxu0 %v1197
        %2996 = vmatprep.subr.mxu0 %v1194
        %2997 = vmatpush1.msra.mxu0 %v1193
        %2998 = vmatprep.subr.mxu0 %v1190
        %2999 = vmatpush1.msra.mxu0 %v1189
        %3000 = vmatprep.subr.mxu0 0.0
        %3001 = vmatpush2.msra.mxu0 0.0
        %3002 = vmatprep.subr.mxu0 0.0
        %3003 = vmatpush2.msra.mxu0 0.0
        %3004 = vmatprep.subr.mxu0 0.0
        %3005 = vmatpush2.msra.mxu0 0.0
        %3006 = vmatprep.subr.mxu0 0.0
        %3007 = vmatpush2.msra.mxu0 0.0
        %3008 = vmatprep.subr.mxu0 0.0
        %3009 = vmatpush2.msra.mxu0 0.0
        %3010 = vmatprep.subr.mxu0 0.0
        %3011 = vmatpush2.msra.mxu0 0.0
        %3012 = vmatprep.subr.mxu0 0.0
        %3013 = vmatpush2.msra.mxu0 0.0
        %3014 = vmatprep.subr.mxu0 0.0
        %3015 = vmatpush2.msra.mxu0 0.0
        %3016 = vmatprep.subr.mxu0 0.0
        %3017 = vmatpush2.msra.mxu0 0.0
        %3018 = vmatprep.subr.mxu0 0.0
        %3019 = vmatpush2.msra.mxu0 0.0
        %3020 = vmatprep.subr.mxu0 0.0
        %3021 = vmatpush2.msra.mxu0 0.0
        %3022 = vmatprep.subr.mxu0 0.0
        %3023 = vmatpush2.msra.mxu0 0.0
        %3024 = vmatprep.subr.mxu0 0.0
        %3025 = vmatpush2.msra.mxu0 0.0
        %3026 = vmatprep.subr.mxu0 0.0
        %3027 = vmatpush2.msra.mxu0 0.0
        %3028 = vmatprep.subr.mxu0 0.0
        %3029 = vmatpush2.msra.mxu0 0.0
        %3030 = vmatprep.subr.mxu0 0.0
        %3031 = vmatpush2.msra.mxu0 0.0
        %3032 = vmatprep.mubr.f32.mxu0 0.0
        %3033 = vmatmul.mubr.f32.gmra.mxu0 %v2960
        %v3034 = vpop.f32.mrf.mxu0
        %v3035 = vadd.f32 0.0, %v3034
        %v3036 = vpop.f32.mrf.mxu0
        %v3037 = vadd.f32 0.0, %v3036
        %3038 = vdwg.mxu0
        %3039 = vmatprep.subr.mxu0 %v1252
        %3040 = vmatpush1.msra.mxu0 %v1251
        %3041 = vmatprep.subr.mxu0 %v1248
        %3042 = vmatpush1.msra.mxu0 %v1247
        %3043 = vmatprep.subr.mxu0 %v1244
        %3044 = vmatpush1.msra.mxu0 %v1243
        %3045 = vmatprep.subr.mxu0 %v1240
        %3046 = vmatpush1.msra.mxu0 %v1239
        %3047 = vmatprep.subr.mxu0 %v1236
        %3048 = vmatpush1.msra.mxu0 %v1235
        %3049 = vmatprep.subr.mxu0 %v1232
        %3050 = vmatpush1.msra.mxu0 %v1231
        %3051 = vmatprep.subr.mxu0 %v1228
        %3052 = vmatpush1.msra.mxu0 %v1227
        %3053 = vmatprep.subr.mxu0 %v1224
        %3054 = vmatpush1.msra.mxu0 %v1223
        %3055 = vmatprep.subr.mxu0 %v1220
        %3056 = vmatpush1.msra.mxu0 %v1219
        %3057 = vmatprep.subr.mxu0 %v1216
        %3058 = vmatpush1.msra.mxu0 %v1215
        %3059 = vmatprep.subr.mxu0 %v1212
        %3060 = vmatpush1.msra.mxu0 %v1211
        %3061 = vmatprep.subr.mxu0 %v1208
        %3062 = vmatpush1.msra.mxu0 %v1207
        %3063 = vmatprep.subr.mxu0 %v1204
        %3064 = vmatpush1.msra.mxu0 %v1203
        %3065 = vmatprep.subr.mxu0 %v1200
        %3066 = vmatpush1.msra.mxu0 %v1199
        %3067 = vmatprep.subr.mxu0 %v1196
        %3068 = vmatpush1.msra.mxu0 %v1195
        %3069 = vmatprep.subr.mxu0 %v1192
        %3070 = vmatpush1.msra.mxu0 %v1191
        %3071 = vmatprep.subr.mxu0 0.0
        %3072 = vmatpush2.msra.mxu0 0.0
        %3073 = vmatprep.subr.mxu0 0.0
        %3074 = vmatpush2.msra.mxu0 0.0
        %3075 = vmatprep.subr.mxu0 0.0
        %3076 = vmatpush2.msra.mxu0 0.0
        %3077 = vmatprep.subr.mxu0 0.0
        %3078 = vmatpush2.msra.mxu0 0.0
        %3079 = vmatprep.subr.mxu0 0.0
        %3080 = vmatpush2.msra.mxu0 0.0
        %3081 = vmatprep.subr.mxu0 0.0
        %3082 = vmatpush2.msra.mxu0 0.0
        %3083 = vmatprep.subr.mxu0 0.0
        %3084 = vmatpush2.msra.mxu0 0.0
        %3085 = vmatprep.subr.mxu0 0.0
        %3086 = vmatpush2.msra.mxu0 0.0
        %3087 = vmatprep.subr.mxu0 0.0
        %3088 = vmatpush2.msra.mxu0 0.0
        %3089 = vmatprep.subr.mxu0 0.0
        %3090 = vmatpush2.msra.mxu0 0.0
        %3091 = vmatprep.subr.mxu0 0.0
        %3092 = vmatpush2.msra.mxu0 0.0
        %3093 = vmatprep.subr.mxu0 0.0
        %3094 = vmatpush2.msra.mxu0 0.0
        %3095 = vmatprep.subr.mxu0 0.0
        %3096 = vmatpush2.msra.mxu0 0.0
        %3097 = vmatprep.subr.mxu0 0.0
        %3098 = vmatpush2.msra.mxu0 0.0
        %3099 = vmatprep.subr.mxu0 0.0
        %3100 = vmatpush2.msra.mxu0 0.0
        %3101 = vmatprep.subr.mxu0 0.0
        %3102 = vmatpush2.msra.mxu0 0.0
        %3103 = vmatprep.mubr.f32.mxu0 0.0
        %3104 = vmatmul.mubr.f32.gmra.mxu0 %v2960
        %v3105 = vpop.f32.mrf.mxu0
        %v3106 = vadd.f32 0.0, %v3105
        %v3107 = vpop.f32.mrf.mxu0
        %v3108 = vadd.f32 0.0, %v3107
        %3109 = vdwg.mxu0
        %v3110 = vadd.f32 %v2964, %v3035
        %v3111 = vadd.f32 %v2965, %v3037
        %v3112 = vadd.f32 %v2966, %v3106
        %v3113 = vadd.f32 %v2967, %v3108
        %v3114 = vmul.f32 %v3110, 0.5
        %v3115 = vtanh.pop %v3114
        %v3116 = vadd.f32 %v3115, 1.0
        %v3117 = vmul.f32 %v3116, 0.5
        %v3118 = vmul.f32 %v3111, 0.5
        %v3119 = vtanh.pop %v3118
        %v3120 = vadd.f32 %v3119, 1.0
        %v3121 = vmul.f32 %v3120, 0.5
        %v3122 = vtanh.pop %v3112
        %v3123 = vmul.f32 %v3113, 0.5
        %v3124 = vtanh.pop %v3123
        %v3125 = vadd.f32 %v3124, 1.0
        %v3126 = vmul.f32 %v3125, 0.5
        %v3127 = vmul.f32 %v3121, %v2958
        %v3128 = vmul.f32 %v3117, %v3122
        %v3129 = vadd.f32 %v3127, %v3128
        %v3130 = vtanh.pop %v3129
        %v3131 = vmul.f32 %v3126, %v3130
        %s3132 = sadd.s32 %s438, 80
        %s3133 = scalar_lea.vmem [#allocation14], %s3132
        %3134 = vst [vmem:[%s3133] sm:$0xff] %v3131
        %v3135 = vld [vmem:[#allocation4 + $0x160] sm:$0xff]
        %v3136 = vld [vmem:[#allocation4 + $0x168] sm:$0xff]
        %v3137 = vld [vmem:[#allocation4 + $0x170] sm:$0xff]
        %v3138 = vld [vmem:[#allocation4 + $0x178] sm:$0xff]
        %3139 = vmatprep.subr.mxu0 %v1250
        %3140 = vmatpush1.msra.mxu0 %v1249
        %3141 = vmatprep.subr.mxu0 %v1246
        %3142 = vmatpush1.msra.mxu0 %v1245
        %3143 = vmatprep.subr.mxu0 %v1242
        %3144 = vmatpush1.msra.mxu0 %v1241
        %3145 = vmatprep.subr.mxu0 %v1238
        %3146 = vmatpush1.msra.mxu0 %v1237
        %3147 = vmatprep.subr.mxu0 %v1234
        %3148 = vmatpush1.msra.mxu0 %v1233
        %3149 = vmatprep.subr.mxu0 %v1230
        %3150 = vmatpush1.msra.mxu0 %v1229
        %3151 = vmatprep.subr.mxu0 %v1226
        %3152 = vmatpush1.msra.mxu0 %v1225
        %3153 = vmatprep.subr.mxu0 %v1222
        %3154 = vmatpush1.msra.mxu0 %v1221
        %3155 = vmatprep.subr.mxu0 %v1218
        %3156 = vmatpush1.msra.mxu0 %v1217
        %3157 = vmatprep.subr.mxu0 %v1214
        %3158 = vmatpush1.msra.mxu0 %v1213
        %3159 = vmatprep.subr.mxu0 %v1210
        %3160 = vmatpush1.msra.mxu0 %v1209
        %3161 = vmatprep.subr.mxu0 %v1206
        %3162 = vmatpush1.msra.mxu0 %v1205
        %3163 = vmatprep.subr.mxu0 %v1202
        %3164 = vmatpush1.msra.mxu0 %v1201
        %3165 = vmatprep.subr.mxu0 %v1198
        %3166 = vmatpush1.msra.mxu0 %v1197
        %3167 = vmatprep.subr.mxu0 %v1194
        %3168 = vmatpush1.msra.mxu0 %v1193
        %3169 = vmatprep.subr.mxu0 %v1190
        %3170 = vmatpush1.msra.mxu0 %v1189
        %3171 = vmatprep.subr.mxu0 0.0
        %3172 = vmatpush2.msra.mxu0 0.0
        %3173 = vmatprep.subr.mxu0 0.0
        %3174 = vmatpush2.msra.mxu0 0.0
        %3175 = vmatprep.subr.mxu0 0.0
        %3176 = vmatpush2.msra.mxu0 0.0
        %3177 = vmatprep.subr.mxu0 0.0
        %3178 = vmatpush2.msra.mxu0 0.0
        %3179 = vmatprep.subr.mxu0 0.0
        %3180 = vmatpush2.msra.mxu0 0.0
        %3181 = vmatprep.subr.mxu0 0.0
        %3182 = vmatpush2.msra.mxu0 0.0
        %3183 = vmatprep.subr.mxu0 0.0
        %3184 = vmatpush2.msra.mxu0 0.0
        %3185 = vmatprep.subr.mxu0 0.0
        %3186 = vmatpush2.msra.mxu0 0.0
        %3187 = vmatprep.subr.mxu0 0.0
        %3188 = vmatpush2.msra.mxu0 0.0
        %3189 = vmatprep.subr.mxu0 0.0
        %3190 = vmatpush2.msra.mxu0 0.0
        %3191 = vmatprep.subr.mxu0 0.0
        %3192 = vmatpush2.msra.mxu0 0.0
        %3193 = vmatprep.subr.mxu0 0.0
        %3194 = vmatpush2.msra.mxu0 0.0
        %3195 = vmatprep.subr.mxu0 0.0
        %3196 = vmatpush2.msra.mxu0 0.0
        %3197 = vmatprep.subr.mxu0 0.0
        %3198 = vmatpush2.msra.mxu0 0.0
        %3199 = vmatprep.subr.mxu0 0.0
        %3200 = vmatpush2.msra.mxu0 0.0
        %3201 = vmatprep.subr.mxu0 0.0
        %3202 = vmatpush2.msra.mxu0 0.0
        %3203 = vmatprep.mubr.f32.mxu0 0.0
        %3204 = vmatmul.mubr.f32.gmra.mxu0 %v3131
        %v3205 = vpop.f32.mrf.mxu0
        %v3206 = vadd.f32 0.0, %v3205
        %v3207 = vpop.f32.mrf.mxu0
        %v3208 = vadd.f32 0.0, %v3207
        %3209 = vdwg.mxu0
        %3210 = vmatprep.subr.mxu0 %v1252
        %3211 = vmatpush1.msra.mxu0 %v1251
        %3212 = vmatprep.subr.mxu0 %v1248
        %3213 = vmatpush1.msra.mxu0 %v1247
        %3214 = vmatprep.subr.mxu0 %v1244
        %3215 = vmatpush1.msra.mxu0 %v1243
        %3216 = vmatprep.subr.mxu0 %v1240
        %3217 = vmatpush1.msra.mxu0 %v1239
        %3218 = vmatprep.subr.mxu0 %v1236
        %3219 = vmatpush1.msra.mxu0 %v1235
        %3220 = vmatprep.subr.mxu0 %v1232
        %3221 = vmatpush1.msra.mxu0 %v1231
        %3222 = vmatprep.subr.mxu0 %v1228
        %3223 = vmatpush1.msra.mxu0 %v1227
        %3224 = vmatprep.subr.mxu0 %v1224
        %3225 = vmatpush1.msra.mxu0 %v1223
        %3226 = vmatprep.subr.mxu0 %v1220
        %3227 = vmatpush1.msra.mxu0 %v1219
        %3228 = vmatprep.subr.mxu0 %v1216
        %3229 = vmatpush1.msra.mxu0 %v1215
        %3230 = vmatprep.subr.mxu0 %v1212
        %3231 = vmatpush1.msra.mxu0 %v1211
        %3232 = vmatprep.subr.mxu0 %v1208
        %3233 = vmatpush1.msra.mxu0 %v1207
        %3234 = vmatprep.subr.mxu0 %v1204
        %3235 = vmatpush1.msra.mxu0 %v1203
        %3236 = vmatprep.subr.mxu0 %v1200
        %3237 = vmatpush1.msra.mxu0 %v1199
        %3238 = vmatprep.subr.mxu0 %v1196
        %3239 = vmatpush1.msra.mxu0 %v1195
        %3240 = vmatprep.subr.mxu0 %v1192
        %3241 = vmatpush1.msra.mxu0 %v1191
        %3242 = vmatprep.subr.mxu0 0.0
        %3243 = vmatpush2.msra.mxu0 0.0
        %3244 = vmatprep.subr.mxu0 0.0
        %3245 = vmatpush2.msra.mxu0 0.0
        %3246 = vmatprep.subr.mxu0 0.0
        %3247 = vmatpush2.msra.mxu0 0.0
        %3248 = vmatprep.subr.mxu0 0.0
        %3249 = vmatpush2.msra.mxu0 0.0
        %3250 = vmatprep.subr.mxu0 0.0
        %3251 = vmatpush2.msra.mxu0 0.0
        %3252 = vmatprep.subr.mxu0 0.0
        %3253 = vmatpush2.msra.mxu0 0.0
        %3254 = vmatprep.subr.mxu0 0.0
        %3255 = vmatpush2.msra.mxu0 0.0
        %3256 = vmatprep.subr.mxu0 0.0
        %3257 = vmatpush2.msra.mxu0 0.0
        %3258 = vmatprep.subr.mxu0 0.0
        %3259 = vmatpush2.msra.mxu0 0.0
        %3260 = vmatprep.subr.mxu0 0.0
        %3261 = vmatpush2.msra.mxu0 0.0
        %3262 = vmatprep.subr.mxu0 0.0
        %3263 = vmatpush2.msra.mxu0 0.0
        %3264 = vmatprep.subr.mxu0 0.0
        %3265 = vmatpush2.msra.mxu0 0.0
        %3266 = vmatprep.subr.mxu0 0.0
        %3267 = vmatpush2.msra.mxu0 0.0
        %3268 = vmatprep.subr.mxu0 0.0
        %3269 = vmatpush2.msra.mxu0 0.0
        %3270 = vmatprep.subr.mxu0 0.0
        %3271 = vmatpush2.msra.mxu0 0.0
        %3272 = vmatprep.subr.mxu0 0.0
        %3273 = vmatpush2.msra.mxu0 0.0
        %3274 = vmatprep.mubr.f32.mxu0 0.0
        %3275 = vmatmul.mubr.f32.gmra.mxu0 %v3131
        %v3276 = vpop.f32.mrf.mxu0
        %v3277 = vadd.f32 0.0, %v3276
        %v3278 = vpop.f32.mrf.mxu0
        %v3279 = vadd.f32 0.0, %v3278
        %3280 = vdwg.mxu0
        %v3281 = vadd.f32 %v3135, %v3206
        %v3282 = vadd.f32 %v3136, %v3208
        %v3283 = vadd.f32 %v3137, %v3277
        %v3284 = vadd.f32 %v3138, %v3279
        %v3285 = vmul.f32 %v3281, 0.5
        %v3286 = vtanh.pop %v3285
        %v3287 = vadd.f32 %v3286, 1.0
        %v3288 = vmul.f32 %v3287, 0.5
        %v3289 = vmul.f32 %v3282, 0.5
        %v3290 = vtanh.pop %v3289
        %v3291 = vadd.f32 %v3290, 1.0
        %v3292 = vmul.f32 %v3291, 0.5
        %v3293 = vtanh.pop %v3283
        %v3294 = vmul.f32 %v3284, 0.5
        %v3295 = vtanh.pop %v3294
        %v3296 = vadd.f32 %v3295, 1.0
        %v3297 = vmul.f32 %v3296, 0.5
        %v3298 = vmul.f32 %v3292, %v3129
        %v3299 = vmul.f32 %v3288, %v3293
        %v3300 = vadd.f32 %v3298, %v3299
        %v3301 = vtanh.pop %v3300
        %v3302 = vmul.f32 %v3297, %v3301
        %s3303 = sadd.s32 %s438, 88
        %s3304 = scalar_lea.vmem [#allocation14], %s3303
        %3305 = vst [vmem:[%s3304] sm:$0xff] %v3302
        %3306 = vst [vmem:[#allocation2] sm:$0xff] %v3302
        %3307 = vst [vmem:[#allocation3] sm:$0xff] %v3300
        // Predicated region
        $region73: #{tpu_custom_call.1} parent=39 // pred_check
          %p3308 = pneg %p1181
        $region74: #{tpu_custom_call.1} parent=39 // pred_check_branch
          %3310 = sbr.rel (%p3308) target = $region76
        $region75: #{tpu_custom_call.1} parent=39 // pred_region
          %3311 = vst [vmem:[%s430] sm:$0xff] %v3302
          %3312 = vst [vmem:[%s437] sm:$0xff] %v3300
        $region76: #{tpu_custom_call.1} parent=39 // pred_fallthru
          _
        %s3313 = sand.u32 %s30, 1
        %s3314 = scalar_lea.sflag [#allocation16], %s3313
        %s3315 = sand.u32 %s196, 1
        %s3316 = smul.addr %s3315, 8
        %s3317 = scalar_lea.vmem [#allocation15], %s3316
        %s3318 = sand.u32 %s30, 1
        %s3319 = scalar_lea.sflag [#allocation16], %s3318
        %s3320 = sand.u32 %s222, 1
        %s3321 = smul.addr %s3320, 8
        %s3322 = scalar_lea.vmem [#allocation17], %s3321
        // Predicated region
        $region77: #{tpu_custom_call.1} parent=39 // pred_check
          %p3323 = pneg %p180
        $region78: #{tpu_custom_call.1} parent=39 // pred_check_branch
          %3325 = sbr.rel (%p3323) target = $region80
        $region79: #{tpu_custom_call.1} parent=39 // pred_region
          %s3327 = ssub.s32 1536, 1536
          %3328 = vsyncadd [#allocation7], %s3327
          %s3329 = sshll.u32 [#allocation14], 4
          %s3330 = int_to_ptr.vmem [resolvable:$true] %s3329
          %3335 = dma.vmem_to_hbm [thread:$0]  %s3330, 1536, %s5, [#allocation7], 128, 128, 8
        $region80: #{tpu_custom_call.1} parent=39 // pred_fallthru
          _
        // Predicated region
        $region81: #{tpu_custom_call.1} parent=39 // pred_check
          %p3336 = pneg %p206
        $region82: #{tpu_custom_call.1} parent=39 // pred_check_branch
          %3338 = sbr.rel (%p3336) target = $region84
        $region83: #{tpu_custom_call.1} parent=39 // pred_region
          %s3340 = ssub.s32 128, 128
          %3341 = vsyncadd %s3314, %s3340
          %s3342 = smul.addr %s34, 128
          %s3343 = scalar_lea.hbm %s6, %s3342
          %s3345 = sshll.u32 %s3317, 4
          %s3346 = int_to_ptr.vmem [resolvable:$true] %s3345
          %3348 = dma.vmem_to_hbm [thread:$0]  %s3346, 128, %s3343, %s3314
        $region84: #{tpu_custom_call.1} parent=39 // pred_fallthru
          _
        // Predicated region
        $region85: #{tpu_custom_call.1} parent=39 // pred_check
          %p3349 = pneg %p232
        $region86: #{tpu_custom_call.1} parent=39 // pred_check_branch
          %3351 = sbr.rel (%p3349) target = $region88
        $region87: #{tpu_custom_call.1} parent=39 // pred_region
          %s3353 = ssub.s32 128, 128
          %3354 = vsyncadd %s3319, %s3353
          %s3355 = smul.addr %s34, 128
          %s3356 = scalar_lea.hbm %s7, %s3355
          %s3358 = sshll.u32 %s3322, 4
          %s3359 = int_to_ptr.vmem [resolvable:$true] %s3358
          %3361 = dma.vmem_to_hbm [thread:$0]  %s3359, 128, %s3356, %s3319
        $region88: #{tpu_custom_call.1} parent=39 // pred_fallthru
          _
        // Predicated region
        $region89: #{tpu_custom_call.1} parent=39 // pred_check
          %p3362 = pneg %p180
        $region90: #{tpu_custom_call.1} parent=39 // pred_check_branch
          %3364 = sbr.rel (%p3362) target = $region92
        $region91: #{tpu_custom_call.1} parent=39 // pred_region
          %3365 = dma.done [#allocation7], 1536
        $region92: #{tpu_custom_call.1} parent=39 // pred_fallthru
          _
      $region40: #{tpu_custom_call.1} parent=5 // pred_fallthru
        _
      %p3366 = scmp.le.s32.totalorder 2, %s25
      // Predicated region
      $region93: #{tpu_custom_call.1} parent=5 // pred_check
        %p3367 = pneg %p3366
      $region94: #{tpu_custom_call.1} parent=5 // pred_check_branch
        %3369 = sbr.rel (%p3367) target = $region96
      $region95: #{tpu_custom_call.1} parent=5 // pred_region
        %s3370 = ssub.s32 %s25, 2
        // Predicated region
        $region97: #{tpu_custom_call.1} parent=95 // pred_check
          %p3371 = pneg %p212
        $region98: #{tpu_custom_call.1} parent=95 // pred_check_branch
          %3373 = sbr.rel (%p3371) target = $region100
        $region99: #{tpu_custom_call.1} parent=95 // pred_region
          %s3374 = sand.u32 %s31, 1
          %s3375 = scalar_lea.sflag [#allocation16], %s3374
          %s3376 = sand.u32 %s197, 1
          %s3377 = smul.addr %s3376, 8
          %s3378 = scalar_lea.vmem [#allocation15], %s3377
          %3379 = dma.done %s3375, 128
        $region100: #{tpu_custom_call.1} parent=95 // pred_fallthru
          _
        // Predicated region
        $region101: #{tpu_custom_call.1} parent=95 // pred_check
          %p3380 = pneg %p238
        $region102: #{tpu_custom_call.1} parent=95 // pred_check_branch
          %3382 = sbr.rel (%p3380) target = $region104
        $region103: #{tpu_custom_call.1} parent=95 // pred_region
          %s3383 = sand.u32 %s31, 1
          %s3384 = scalar_lea.sflag [#allocation16], %s3383
          %s3385 = sand.u32 %s223, 1
          %s3386 = smul.addr %s3385, 8
          %s3387 = scalar_lea.vmem [#allocation17], %s3386
          %3388 = dma.done %s3384, 128
        $region104: #{tpu_custom_call.1} parent=95 // pred_fallthru
          _
      $region96: #{tpu_custom_call.1} parent=5 // pred_fallthru
        _
    $region6: #{tpu_custom_call.1} parent=1 // loop_footer
      %s29 = sadd.s32 1, %s25
    $region7: #{tpu_custom_call.1} parent=1 // loop_footer_branch
      %24 = sbr.rel target = $region3
    $region8: #{tpu_custom_call.1} parent=1 // loop_exit
      _
    %3389 = vsyncpa [#allocation6], 1
    %s3390 = scalar_lea.sflag [#allocation6], 1
    %3391 = vsyncpa %s3390, 1
    %3392 = vsyncpa [#allocation9], 1
    %s3393 = scalar_lea.sflag [#allocation9], 1
    %3394 = vsyncpa %s3393, 1
    %3395 = vsyncpa [#allocation12], 1
    %s3396 = scalar_lea.sflag [#allocation12], 1
    %3397 = vsyncpa %s3396, 1
    %3398 = vsyncpa [#allocation7], 1
    %s3399 = scalar_lea.sflag [#allocation7], 1
    %3400 = vsyncpa %s3399, 1
    %3401 = vsyncpa [#allocation16], 1
    %s3402 = scalar_lea.sflag [#allocation16], 1
    %3403 = vsyncpa %s3402, 1

</llo_original>
